<compile_context>
chip_gen: v7x
topology: tpu7x:2x2x1
jax: 0.10.0
libtpu: 0.0.40
codegen_flags: <defaults>
</compile_context>

<pallas_src>
import jax
import jax.numpy as jnp
from jax.experimental import pallas as pl
from jax.experimental.pallas import tpu as pltpu


NEG_SLOPE = 0.01  # F.leaky_relu default

# Original / lane-padded layer widths.
H1, H2, H3, H4 = 1000, 600, 400, 100          # PyTorch hidden widths
D1, D2, D3, D4 = 1024, 640, 512, 128          # padded to lane multiples


def _leaky(h):
    return jnp.where(h > 0, h, NEG_SLOPE * h)


def _round_up(x, m):
    return (x + m - 1) // m * m


def mlp_kernel(x_ref, w1_ref, w2_ref, w3_ref, w4_ref, sp_ref, o_ref, acc_ref):
    """Grid = (m_tiles, k_tiles). k tiles the fc1 input features.

    x_ref  : (TM, TK)   bf16   batch tile x feature tile
    w1_ref : (TK, D1)   bf16   fc1 weight K-slab
    w2..w4 : full padded bf16 weights, VMEM-resident (constant index maps)
    sp_ref : (8, D1)    f32    packed small params:
             row 0: b1, row 1: b2, row 2: b3, row 3: b4,
             row 4: fc5 weight column (as a row), row 5 col 0: fc5 bias
    o_ref  : (TM, 1)    f32
    acc_ref: (TM, D1)   f32    fc1 K-reduction accumulator (VMEM scratch)
    """
    k = pl.program_id(1)
    nk = pl.num_programs(1)

    @pl.when(k == 0)
    def _():
        acc_ref[...] = jnp.zeros_like(acc_ref)

    # fc1 partial product on the MXU, f32 accumulation.
    acc_ref[...] += jnp.dot(x_ref[...], w1_ref[...],
                            preferred_element_type=jnp.float32)

    @pl.when(k == nk - 1)
    def _():
        sp = sp_ref[...]                 # (8, D1) f32
        b1 = sp[0:1, :D1]
        b2 = sp[1:2, :D2]
        b3 = sp[2:3, :D3]
        b4 = sp[3:4, :D4]
        w5 = sp[4:5, :D4]                # fc5 column laid out as a (1, D4) row
        b5 = sp[5:6, 0:1]                # (1, 1)

        h = _leaky(acc_ref[...] + b1).astype(jnp.bfloat16)               # (TM, D1)
        h = _leaky(jnp.dot(h, w2_ref[...],
                           preferred_element_type=jnp.float32) + b2)
        h = h.astype(jnp.bfloat16)                                       # (TM, D2)
        h = _leaky(jnp.dot(h, w3_ref[...],
                           preferred_element_type=jnp.float32) + b3)
        h = h.astype(jnp.bfloat16)                                       # (TM, D3)
        h = _leaky(jnp.dot(h, w4_ref[...],
                           preferred_element_type=jnp.float32) + b4)     # (TM, D4) f32
        # fc5: width-1 output -> VPU multiply + cross-lane reduce instead of
        # burning a full MXU pass for a single result lane.
        o_ref[...] = jnp.sum(h * w5, axis=-1, keepdims=True) + b5


def prepare_params(params, d_in_pad):
    """Pad weights to lane multiples, cast to bf16, pack small f32 params."""
    (w1, b1), (w2, b2), (w3, b3), (w4, b4), (w5, b5) = params

    def pad_w(w, rows, cols):
        out = jnp.zeros((rows, cols), jnp.float32)
        out = out.at[:w.shape[0], :w.shape[1]].set(w)
        return out.astype(jnp.bfloat16)

    w1p = pad_w(w1, d_in_pad, D1)
    w2p = pad_w(w2, D1, D2)
    w3p = pad_w(w3, D2, D3)
    w4p = pad_w(w4, D3, D4)

    sp = jnp.zeros((8, D1), jnp.float32)
    sp = sp.at[0, :H1].set(b1.reshape(-1))
    sp = sp.at[1, :H2].set(b2.reshape(-1))
    sp = sp.at[2, :H3].set(b3.reshape(-1))
    sp = sp.at[3, :H4].set(b4.reshape(-1))
    sp = sp.at[4, :H4].set(w5.reshape(-1))      # fc5 weight column
    sp = sp.at[5, 0].set(b5.reshape(-1)[0])     # fc5 bias
    return w1p, w2p, w3p, w4p, sp


def net_forward(x, params):
    """x: (B, inputSize) f32; params: [(W, b)] with W (in, out), b (1, out)."""
    B, d_in = x.shape

    # fc1 K tiling (handles vocab-scale inputSize without blowing VMEM).
    if d_in <= 512:
        tk = _round_up(d_in, 128)
        d_in_pad = tk
    else:
        tk = 512
        d_in_pad = _round_up(d_in, tk)
    nk = d_in_pad // tk

    # Batch (M) tiling: fill MXU rows, cap tile at 256.
    tm = min(256, _round_up(B, 8))
    b_pad = _round_up(B, tm)
    nm = b_pad // tm

    w1p, w2p, w3p, w4p, sp = prepare_params(params, d_in_pad)

    xp = jnp.zeros((b_pad, d_in_pad), jnp.bfloat16)
    xp = xp.at[:B, :d_in].set(x.astype(jnp.bfloat16))

    grid_spec = pltpu.PrefetchScalarGridSpec(
        num_scalar_prefetch=0,
        grid=(nm, nk),                                   # reduction axis last
        in_specs=[
            pl.BlockSpec((tm, tk), lambda i, k: (i, k)),     # x tile
            pl.BlockSpec((tk, D1), lambda i, k: (k, 0)),     # fc1 K-slab
            pl.BlockSpec((D1, D2), lambda i, k: (0, 0)),     # fc2 (resident)
            pl.BlockSpec((D2, D3), lambda i, k: (0, 0)),     # fc3 (resident)
            pl.BlockSpec((D3, D4), lambda i, k: (0, 0)),     # fc4 (resident)
            pl.BlockSpec((8, D1), lambda i, k: (0, 0)),      # packed small params
        ],
        out_specs=pl.BlockSpec((tm, 1), lambda i, k: (i, 0)),
        scratch_shapes=[pltpu.VMEM((tm, D1), jnp.float32)],  # fc1 accumulator
    )

    out = pl.pallas_call(
        mlp_kernel,
        out_shape=jax.ShapeDtypeStruct((b_pad, 1), jnp.float32),
        grid_spec=grid_spec,
        compiler_params=pltpu.CompilerParams(
            dimension_semantics=("parallel", "arbitrary")),
    )(xp, w1p, w2p, w3p, w4p, sp)
    return out[:B]


def init_params(key, input_size):
    """Deterministic init mimicking PyTorch Linear: U(-1/sqrt(fan_in), ...)."""
    dims = [input_size, H1, H2, H3, H4, 1]
    params = []
    for i in range(len(dims) - 1):
        fan_in, fan_out = dims[i], dims[i + 1]
        key, kw, kb = jax.random.split(key, 3)
        bound = 1.0 / (fan_in ** 0.5)
        w = jax.random.uniform(kw, (fan_in, fan_out), jnp.float32, -bound, bound)
        b = jax.random.uniform(kb, (1, fan_out), jnp.float32, -bound, bound)
        params.append((w, b))
    return params


def reference_forward(x, params):
    """Pure-JAX reference mirroring the kernel numerics (bf16 ops, f32 acc)."""
    (w1, b1), (w2, b2), (w3, b3), (w4, b4), (w5, b5) = params

    def mm(h, w):
        return jnp.dot(h.astype(jnp.bfloat16), w.astype(jnp.bfloat16),
                       preferred_element_type=jnp.float32)

    h = _leaky(mm(x, w1) + b1)
    h = _leaky(mm(h, w2) + b2)
    h = _leaky(mm(h, w3) + b3)
    h = _leaky(mm(h, w4) + b4)           # fc4 output kept in f32
    return h @ w5 + b5                   # fc5 in f32 (matches VPU reduction)


if __name__ == "__main__":
    key = jax.random.PRNGKey(0)
    key, kx = jax.random.split(key)

    B = 8
    INPUT_SIZE = 64
    x = jax.random.normal(kx, (B, INPUT_SIZE), jnp.float32)

    params = init_params(key, INPUT_SIZE)

    out = jax.block_until_ready(net_forward(x, params))
    ref = reference_forward(x, params)

    assert out.shape == (B, 1), out.shape
    assert jnp.allclose(out, ref, atol=5e-3, rtol=5e-3), (out, ref)

    print("KERNEL_OK")
</pallas_src>

<mosaic_0001>
module attributes {stable_mosaic.version = 11 : i64} {
  func.func @mlp_kernel(%arg0: i32, %arg1: i32, %arg2: memref<8x128xbf16, #tpu.memory_space<vmem>>, %arg3: memref<128x1024xbf16, #tpu.memory_space<vmem>>, %arg4: memref<1024x640xbf16, #tpu.memory_space<vmem>>, %arg5: memref<640x512xbf16, #tpu.memory_space<vmem>>, %arg6: memref<512x128xbf16, #tpu.memory_space<vmem>>, %arg7: memref<8x1024xf32, #tpu.memory_space<vmem>>, %arg8: memref<8x1xf32, #tpu.memory_space<vmem>>, %arg9: memref<8x1024xf32, #tpu.memory_space<vmem>>) attributes {dimension_semantics = [#tpu.dimension_semantics<parallel>, #tpu.dimension_semantics<arbitrary>], iteration_bounds = array<i64: 1, 1>, scalar_prefetch = 0 : i64, scratch_operands = 1 : i64, tpu.core_type = #tpu.core_type<tc>, window_params = [{transform_indices = @transform_0, window_bounds = array<i64: 8, 128>}, {transform_indices = @transform_1, window_bounds = array<i64: 128, 1024>}, {pipeline_mode = #tpu.pipeline_mode<synchronous>, transform_indices = @transform_2, window_bounds = array<i64: 1024, 640>}, {pipeline_mode = #tpu.pipeline_mode<synchronous>, transform_indices = @transform_3, window_bounds = array<i64: 640, 512>}, {pipeline_mode = #tpu.pipeline_mode<synchronous>, transform_indices = @transform_4, window_bounds = array<i64: 512, 128>}, {pipeline_mode = #tpu.pipeline_mode<synchronous>, transform_indices = @transform_5, window_bounds = array<i64: 8, 1024>}, {transform_indices = @transform_6, window_bounds = array<i64: 8, 1>}]} {
    %c0_i32 = arith.constant 0 : i32
    %0 = arith.cmpi eq, %arg1, %c0_i32 : i32
    %1 = arith.extui %0 : i1 to i32
    %c0_i32_0 = arith.constant 0 : i32
    %2 = arith.cmpi ne, %1, %c0_i32_0 : i32
    scf.if %2 {
      %cst_10 = arith.constant 0.000000e+00 : f32
      %12 = vector.broadcast %cst_10 : f32 to vector<8x1024xf32>
      %c0_11 = arith.constant 0 : index
      %c0_12 = arith.constant 0 : index
      %13 = vector.load %arg9[%c0_11, %c0_12] : memref<8x1024xf32, #tpu.memory_space<vmem>>, vector<8x1024xf32>
      tpu.vector_store %arg9[%c0_11, %c0_12], %12 {strides = array<i32>} : memref<8x1024xf32, #tpu.memory_space<vmem>>, vector<8x1024xf32>,
    } else {
    }
    %c0 = arith.constant 0 : index
    %c0_1 = arith.constant 0 : index
    %3 = vector.load %arg9[%c0, %c0_1] : memref<8x1024xf32, #tpu.memory_space<vmem>>, vector<8x1024xf32>
    %c0_2 = arith.constant 0 : index
    %c0_3 = arith.constant 0 : index
    %4 = vector.load %arg2[%c0_2, %c0_3] : memref<8x128xbf16, #tpu.memory_space<vmem>>, vector<8x128xbf16>
    %c0_4 = arith.constant 0 : index
    %c0_5 = arith.constant 0 : index
    %5 = vector.load %arg3[%c0_4, %c0_5] : memref<128x1024xbf16, #tpu.memory_space<vmem>>, vector<128x1024xbf16>
    %cst = arith.constant dense<0.000000e+00> : vector<8x1024xf32>
    %6 = tpu.matmul %4, %5, %cst {dimension_numbers = #tpu.dot_dimension_numbers<[1], [0], [0], [1], [0, 0, 1, 1], [], []>} : vector<8x128xbf16>, vector<128x1024xbf16>, vector<8x1024xf32> -> vector<8x1024xf32>
    %7 = arith.addf %3, %6 : vector<8x1024xf32>
    %c0_6 = arith.constant 0 : index
    %c0_7 = arith.constant 0 : index
    %8 = vector.load %arg9[%c0_6, %c0_7] : memref<8x1024xf32, #tpu.memory_space<vmem>>, vector<8x1024xf32>
    tpu.vector_store %arg9[%c0_6, %c0_7], %7 {strides = array<i32>} : memref<8x1024xf32, #tpu.memory_space<vmem>>, vector<8x1024xf32>,
    %c0_i32_8 = arith.constant 0 : i32
    %9 = arith.cmpi eq, %arg1, %c0_i32_8 : i32
    %10 = arith.extui %9 : i1 to i32
    %c0_i32_9 = arith.constant 0 : i32
    %11 = arith.cmpi ne, %10, %c0_i32_9 : i32
    scf.if %11 {
      %c0_10 = arith.constant 0 : index
      %c0_11 = arith.constant 0 : index
      %12 = vector.load %arg7[%c0_10, %c0_11] : memref<8x1024xf32, #tpu.memory_space<vmem>>, vector<8x1024xf32>
      %13 = vector.extract_strided_slice %12 {offsets = [0, 0], sizes = [1, 1024], strides = [1, 1]} : vector<8x1024xf32> to vector<1x1024xf32>
      %14 = vector.extract_strided_slice %12 {offsets = [1, 0], sizes = [1, 640], strides = [1, 1]} : vector<8x1024xf32> to vector<1x640xf32>
      %15 = vector.extract_strided_slice %12 {offsets = [2, 0], sizes = [1, 512], strides = [1, 1]} : vector<8x1024xf32> to vector<1x512xf32>
      %16 = vector.extract_strided_slice %12 {offsets = [3, 0], sizes = [1, 128], strides = [1, 1]} : vector<8x1024xf32> to vector<1x128xf32>
      %17 = vector.extract_strided_slice %12 {offsets = [4, 0], sizes = [1, 128], strides = [1, 1]} : vector<8x1024xf32> to vector<1x128xf32>
      %18 = vector.extract_strided_slice %12 {offsets = [5, 0], sizes = [1, 1], strides = [1, 1]} : vector<8x1024xf32> to vector<1x1xf32>
      %c0_12 = arith.constant 0 : index
      %c0_13 = arith.constant 0 : index
      %19 = vector.load %arg9[%c0_12, %c0_13] : memref<8x1024xf32, #tpu.memory_space<vmem>>, vector<8x1024xf32>
      %20 = vector.broadcast %13 : vector<1x1024xf32> to vector<8x1024xf32>
      %21 = arith.addf %19, %20 : vector<8x1024xf32>
      %cst_14 = arith.constant 0.000000e+00 : f32
      %22 = vector.broadcast %cst_14 : f32 to vector<8x1024xf32>
      %23 = arith.cmpf ogt, %21, %22 : vector<8x1024xf32>
      %cst_15 = arith.constant 0.00999999977 : f32
      %24 = vector.broadcast %cst_15 : f32 to vector<8x1024xf32>
      %25 = arith.mulf %24, %21 : vector<8x1024xf32>
      %26 = arith.select %23, %21, %25 : vector<8x1024xi1>, vector<8x1024xf32>
      %27 = arith.truncf %26 : vector<8x1024xf32> to vector<8x1024xbf16>
      %c0_16 = arith.constant 0 : index
      %c0_17 = arith.constant 0 : index
      %28 = vector.load %arg4[%c0_16, %c0_17] : memref<1024x640xbf16, #tpu.memory_space<vmem>>, vector<1024x640xbf16>
      %cst_18 = arith.constant dense<0.000000e+00> : vector<8x640xf32>
      %29 = tpu.matmul %27, %28, %cst_18 {dimension_numbers = #tpu.dot_dimension_numbers<[1], [0], [0], [1], [0, 0, 1, 1], [], []>} : vector<8x1024xbf16>, vector<1024x640xbf16>, vector<8x640xf32> -> vector<8x640xf32>
      %30 = vector.broadcast %14 : vector<1x640xf32> to vector<8x640xf32>
      %31 = arith.addf %29, %30 : vector<8x640xf32>
      %cst_19 = arith.constant 0.000000e+00 : f32
      %32 = vector.broadcast %cst_19 : f32 to vector<8x640xf32>
      %33 = arith.cmpf ogt, %31, %32 : vector<8x640xf32>
      %cst_20 = arith.constant 0.00999999977 : f32
      %34 = vector.broadcast %cst_20 : f32 to vector<8x640xf32>
      %35 = arith.mulf %34, %31 : vector<8x640xf32>
      %36 = arith.select %33, %31, %35 : vector<8x640xi1>, vector<8x640xf32>
      %37 = arith.truncf %36 : vector<8x640xf32> to vector<8x640xbf16>
      %c0_21 = arith.constant 0 : index
      %c0_22 = arith.constant 0 : index
      %38 = vector.load %arg5[%c0_21, %c0_22] : memref<640x512xbf16, #tpu.memory_space<vmem>>, vector<640x512xbf16>
      %cst_23 = arith.constant dense<0.000000e+00> : vector<8x512xf32>
      %39 = tpu.matmul %37, %38, %cst_23 {dimension_numbers = #tpu.dot_dimension_numbers<[1], [0], [0], [1], [0, 0, 1, 1], [], []>} : vector<8x640xbf16>, vector<640x512xbf16>, vector<8x512xf32> -> vector<8x512xf32>
      %40 = vector.broadcast %15 : vector<1x512xf32> to vector<8x512xf32>
      %41 = arith.addf %39, %40 : vector<8x512xf32>
      %cst_24 = arith.constant 0.000000e+00 : f32
      %42 = vector.broadcast %cst_24 : f32 to vector<8x512xf32>
      %43 = arith.cmpf ogt, %41, %42 : vector<8x512xf32>
      %cst_25 = arith.constant 0.00999999977 : f32
      %44 = vector.broadcast %cst_25 : f32 to vector<8x512xf32>
      %45 = arith.mulf %44, %41 : vector<8x512xf32>
      %46 = arith.select %43, %41, %45 : vector<8x512xi1>, vector<8x512xf32>
      %47 = arith.truncf %46 : vector<8x512xf32> to vector<8x512xbf16>
      %c0_26 = arith.constant 0 : index
      %c0_27 = arith.constant 0 : index
      %48 = vector.load %arg6[%c0_26, %c0_27] : memref<512x128xbf16, #tpu.memory_space<vmem>>, vector<512x128xbf16>
      %cst_28 = arith.constant dense<0.000000e+00> : vector<8x128xf32>
      %49 = tpu.matmul %47, %48, %cst_28 {dimension_numbers = #tpu.dot_dimension_numbers<[1], [0], [0], [1], [0, 0, 1, 1], [], []>} : vector<8x512xbf16>, vector<512x128xbf16>, vector<8x128xf32> -> vector<8x128xf32>
      %50 = vector.broadcast %16 : vector<1x128xf32> to vector<8x128xf32>
      %51 = arith.addf %49, %50 : vector<8x128xf32>
      %cst_29 = arith.constant 0.000000e+00 : f32
      %52 = vector.broadcast %cst_29 : f32 to vector<8x128xf32>
      %53 = arith.cmpf ogt, %51, %52 : vector<8x128xf32>
      %cst_30 = arith.constant 0.00999999977 : f32
      %54 = vector.broadcast %cst_30 : f32 to vector<8x128xf32>
      %55 = arith.mulf %54, %51 : vector<8x128xf32>
      %56 = arith.select %53, %51, %55 : vector<8x128xi1>, vector<8x128xf32>
      %57 = vector.broadcast %17 : vector<1x128xf32> to vector<8x128xf32>
      %58 = arith.mulf %56, %57 : vector<8x128xf32>
      %cst_31 = arith.constant dense<0.000000e+00> : vector<8xf32>
      %59 = vector.multi_reduction <add>, %58, %cst_31 [1] : vector<8x128xf32> to vector<8xf32>
      %60 = vector.shape_cast %59 : vector<8xf32> to vector<8x1xf32>
      %61 = vector.broadcast %18 : vector<1x1xf32> to vector<8x1xf32>
      %62 = arith.addf %60, %61 : vector<8x1xf32>
      %c0_32 = arith.constant 0 : index
      %c0_33 = arith.constant 0 : index
      %63 = vector.load %arg8[%c0_32, %c0_33] : memref<8x1xf32, #tpu.memory_space<vmem>>, vector<8x1xf32>
      tpu.vector_store %arg8[%c0_32, %c0_33], %62 {strides = array<i32>} : memref<8x1xf32, #tpu.memory_space<vmem>>, vector<8x1xf32>,
    } else {
    }
    return
  }
  func.func @transform_0(%arg0: i32, %arg1: i32) -> (i32, i32) {
    %c0_i32 = arith.constant 0 : i32
    return %arg0, %arg1 : i32, i32
  }
  func.func @transform_1(%arg0: i32, %arg1: i32) -> (i32, i32) {
    %c0_i32 = arith.constant 0 : i32
    %c0_i32_0 = arith.constant 0 : i32
    return %arg1, %c0_i32 : i32, i32
  }
  func.func @transform_2(%arg0: i32, %arg1: i32) -> (i32, i32) {
    %c0_i32 = arith.constant 0 : i32
    %c0_i32_0 = arith.constant 0 : i32
    %c0_i32_1 = arith.constant 0 : i32
    return %c0_i32, %c0_i32_0 : i32, i32
  }
  func.func @transform_3(%arg0: i32, %arg1: i32) -> (i32, i32) {
    %c0_i32 = arith.constant 0 : i32
    %c0_i32_0 = arith.constant 0 : i32
    %c0_i32_1 = arith.constant 0 : i32
    return %c0_i32, %c0_i32_0 : i32, i32
  }
  func.func @transform_4(%arg0: i32, %arg1: i32) -> (i32, i32) {
    %c0_i32 = arith.constant 0 : i32
    %c0_i32_0 = arith.constant 0 : i32
    %c0_i32_1 = arith.constant 0 : i32
    return %c0_i32, %c0_i32_0 : i32, i32
  }
  func.func @transform_5(%arg0: i32, %arg1: i32) -> (i32, i32) {
    %c0_i32 = arith.constant 0 : i32
    %c0_i32_0 = arith.constant 0 : i32
    %c0_i32_1 = arith.constant 0 : i32
    return %c0_i32, %c0_i32_0 : i32, i32
  }
  func.func @transform_6(%arg0: i32, %arg1: i32) -> (i32, i32) {
    %c0_i32 = arith.constant 0 : i32
    %c0_i32_0 = arith.constant 0 : i32
    return %arg0, %c0_i32 : i32, i32
  }
}

</mosaic_0001>

<llo_original>
// kernel: tpu_custom_call.1
$region0: #{tpu_custom_call.1}
  #allocation0 [shape = 'u32[]', space=smem, size = 0x4, offset = 0x4, fixed_abs, tag = 'smem constant byte address 0x4 - core index']
  #allocation1 [shape = 'u32[144,128]{1,0:T(1,128)}', space=vmem, size = 0x12000, scoped, tag = 'internal scratch']
  #allocation2 [shape = 'f32[8,1024]{1,0:T(8,128)}', space=vmem, size = 0x8000, scoped, tag = 'scratch operand']
  %s0 = inlined_call_operand.hbm [shape: bf16[8,128], index: 0, kind: input, shape index: {}]
  %s1 = inlined_call_operand.hbm [shape: bf16[128,1024], index: 1, kind: input, shape index: {}]
  %s2 = inlined_call_operand.hbm [shape: bf16[1024,640], index: 2, kind: input, shape index: {}]
  %s3 = inlined_call_operand.hbm [shape: bf16[640,512], index: 3, kind: input, shape index: {}]
  %s4 = inlined_call_operand.hbm [shape: bf16[512,128], index: 4, kind: input, shape index: {}]
  %s5 = inlined_call_operand.hbm [shape: f32[8,1024], index: 5, kind: input, shape index: {}]
  %s6 = inlined_call_operand.vmem [shape: f32[8,1], index: 6, kind: output, shape index: {}]
  %s7 = sld [smem:[#allocation0]]
  $region66: #{tpu_custom_call.1} parent=0
    _
  %s9 = ssub.s32 1, %s7
  %s10 = scalar_select 0, %s9, %s7
  $region1: #{tpu_custom_call.1} parent=0
    #allocation3 [shape = 'u8[2048]{0}', space=vmem, size = 0x800, scoped, tag = 'input window, operand 0, single buffered']
    #allocation4 [shape = 's32[1]{0}', space=sflag, size = 0x4, scoped, tag = 'scoped memory for tpu_custom_call.1']
    #allocation5 [shape = 'u8[262144]{0}', space=vmem, size = 0x40000, scoped, tag = 'input window, operand 1, single buffered']
    #allocation6 [shape = 's32[1]{0}', space=sflag, size = 0x4, scoped, tag = 'scoped memory for tpu_custom_call.1']
    #allocation7 [shape = 'u8[1310720]{0}', space=vmem, size = 0x140000, scoped, tag = 'input window, operand 2, single buffered']
    #allocation8 [shape = 'u8[655360]{0}', space=vmem, size = 0xa0000, scoped, tag = 'input window, operand 3, single buffered']
    #allocation9 [shape = 's32[1]{0}', space=sflag, size = 0x4, scoped, tag = 'scoped memory for tpu_custom_call.1']
    #allocation10 [shape = 'u8[131072]{0}', space=vmem, size = 0x20000, scoped, tag = 'input window, operand 4, single buffered']
    #allocation11 [shape = 'u8[32768]{0}', space=vmem, size = 0x8000, scoped, tag = 'input window, operand 5, single buffered']
    #allocation12 [shape = 's32[1]{0}', space=sflag, size = 0x4, scoped, tag = 'scoped memory for tpu_custom_call.1']
    %11 = vsyncpa [#allocation4], 0
    %12 = vsyncpa [#allocation6], 0
    %13 = vsyncpa [#allocation9], 0
    %14 = vsyncpa [#allocation12], 0
    // Predicated region
    $region2: #{tpu_custom_call.1} parent=1 // pred_check
      _
    $region3: #{tpu_custom_call.1} parent=1 // pred_check_branch
      %16 = sbr.rel (0) target = $region5
    $region4: #{tpu_custom_call.1} parent=1 // pred_region
      %s18 = ssub.s32 64, 64
      %19 = vsyncadd [#allocation4], %s18
      %s21 = sshll.u32 [#allocation3], 4
      %s22 = int_to_ptr.vmem [resolvable:$true] %s21
      %24 = dma.hbm_to_vmem [thread:$0]  %s0, 64, %s22, [#allocation4]
    $region5: #{tpu_custom_call.1} parent=1 // pred_fallthru
      _
    // Predicated region
    $region6: #{tpu_custom_call.1} parent=1 // pred_check
      _
    $region7: #{tpu_custom_call.1} parent=1 // pred_check_branch
      %26 = sbr.rel (0) target = $region9
    $region8: #{tpu_custom_call.1} parent=1 // pred_region
      %s28 = ssub.s32 8192, 8192
      %29 = vsyncadd [#allocation6], %s28
      %s30 = sshll.u32 [#allocation5], 4
      %s31 = int_to_ptr.vmem [resolvable:$true] %s30
      %36 = dma.hbm_to_vmem [thread:$0]  %s1, 8192, %s31, [#allocation6], 512, 512, 32
    $region9: #{tpu_custom_call.1} parent=1 // pred_fallthru
      _
    // Predicated region
    $region10: #{tpu_custom_call.1} parent=1 // pred_check
      _
    $region11: #{tpu_custom_call.1} parent=1 // pred_check_branch
      %38 = sbr.rel (0) target = $region13
    $region12: #{tpu_custom_call.1} parent=1 // pred_region
      %s40 = ssub.s32 40960, 40960
      %41 = vsyncadd [#allocation6], %s40
      %s42 = sshll.u32 [#allocation7], 4
      %s43 = int_to_ptr.vmem [resolvable:$true] %s42
      %48 = dma.hbm_to_vmem [thread:$0]  %s2, 40960, %s43, [#allocation6], 320, 320, 20
    $region13: #{tpu_custom_call.1} parent=1 // pred_fallthru
      _
    // Predicated region
    $region14: #{tpu_custom_call.1} parent=1 // pred_check
      _
    $region15: #{tpu_custom_call.1} parent=1 // pred_check_branch
      %50 = sbr.rel (0) target = $region17
    $region16: #{tpu_custom_call.1} parent=1 // pred_region
      %s52 = ssub.s32 20480, 20480
      %53 = vsyncadd [#allocation9], %s52
      %s54 = sshll.u32 [#allocation8], 4
      %s55 = int_to_ptr.vmem [resolvable:$true] %s54
      %60 = dma.hbm_to_vmem [thread:$0]  %s3, 20480, %s55, [#allocation9], 256, 256, 16
    $region17: #{tpu_custom_call.1} parent=1 // pred_fallthru
      _
    // Predicated region
    $region18: #{tpu_custom_call.1} parent=1 // pred_check
      _
    $region19: #{tpu_custom_call.1} parent=1 // pred_check_branch
      %62 = sbr.rel (0) target = $region21
    $region20: #{tpu_custom_call.1} parent=1 // pred_region
      %s64 = ssub.s32 4096, 4096
      %65 = vsyncadd [#allocation9], %s64
      %s66 = sshll.u32 [#allocation10], 4
      %s67 = int_to_ptr.vmem [resolvable:$true] %s66
      %72 = dma.hbm_to_vmem [thread:$0]  %s4, 4096, %s67, [#allocation9], 64, 64, 4
    $region21: #{tpu_custom_call.1} parent=1 // pred_fallthru
      _
    // Predicated region
    $region22: #{tpu_custom_call.1} parent=1 // pred_check
      _
    $region23: #{tpu_custom_call.1} parent=1 // pred_check_branch
      %74 = sbr.rel (0) target = $region25
    $region24: #{tpu_custom_call.1} parent=1 // pred_region
      %s76 = ssub.s32 1024, 1024
      %77 = vsyncadd [#allocation12], %s76
      %s79 = sshll.u32 [#allocation11], 4
      %s80 = int_to_ptr.vmem [resolvable:$true] %s79
      %82 = dma.hbm_to_vmem [thread:$0]  %s5, 1024, %s80, [#allocation12]
    $region25: #{tpu_custom_call.1} parent=1 // pred_fallthru
      _
    // Predicated region
    $region26: #{tpu_custom_call.1} parent=1 // pred_check
      _
    $region27: #{tpu_custom_call.1} parent=1 // pred_check_branch
      %84 = sbr.rel (0) target = $region29
    $region28: #{tpu_custom_call.1} parent=1 // pred_region
      %85 = dma.done [#allocation4], 64
    $region29: #{tpu_custom_call.1} parent=1 // pred_fallthru
      _
    // Predicated region
    $region30: #{tpu_custom_call.1} parent=1 // pred_check
      _
    $region31: #{tpu_custom_call.1} parent=1 // pred_check_branch
      %87 = sbr.rel (0) target = $region33
    $region32: #{tpu_custom_call.1} parent=1 // pred_region
      %88 = dma.done [#allocation6], 8192
    $region33: #{tpu_custom_call.1} parent=1 // pred_fallthru
      _
    // Predicated region
    $region34: #{tpu_custom_call.1} parent=1 // pred_check
      _
    $region35: #{tpu_custom_call.1} parent=1 // pred_check_branch
      %90 = sbr.rel (0) target = $region37
    $region36: #{tpu_custom_call.1} parent=1 // pred_region
      %91 = dma.done [#allocation6], 40960
    $region37: #{tpu_custom_call.1} parent=1 // pred_fallthru
      _
    // Predicated region
    $region38: #{tpu_custom_call.1} parent=1 // pred_check
      _
    $region39: #{tpu_custom_call.1} parent=1 // pred_check_branch
      %93 = sbr.rel (0) target = $region41
    $region40: #{tpu_custom_call.1} parent=1 // pred_region
      %94 = dma.done [#allocation9], 20480
    $region41: #{tpu_custom_call.1} parent=1 // pred_fallthru
      _
    // Predicated region
    $region42: #{tpu_custom_call.1} parent=1 // pred_check
      _
    $region43: #{tpu_custom_call.1} parent=1 // pred_check_branch
      %96 = sbr.rel (0) target = $region45
    $region44: #{tpu_custom_call.1} parent=1 // pred_region
      %97 = dma.done [#allocation9], 4096
    $region45: #{tpu_custom_call.1} parent=1 // pred_fallthru
      _
    // Predicated region
    $region46: #{tpu_custom_call.1} parent=1 // pred_check
      _
    $region47: #{tpu_custom_call.1} parent=1 // pred_check_branch
      %99 = sbr.rel (0) target = $region49
    $region48: #{tpu_custom_call.1} parent=1 // pred_region
      %100 = dma.done [#allocation12], 1024
    $region49: #{tpu_custom_call.1} parent=1 // pred_fallthru
      _
    %p102 = scmp.eq.s32.totalorder 0, 0
    // Predicated region
    $region50: #{tpu_custom_call.1} parent=1 // pred_check
      %p103 = pneg %p102
    $region51: #{tpu_custom_call.1} parent=1 // pred_check_branch
      %105 = sbr.rel (%p103) target = $region53
    $region52: #{tpu_custom_call.1} parent=1 // pred_region
      %106 = vst [vmem:[#allocation2] sm:$0xff] 0.0
      %107 = vst [vmem:[#allocation2 + $0x8] sm:$0xff] 0.0
      %108 = vst [vmem:[#allocation2 + $0x10] sm:$0xff] 0.0
      %109 = vst [vmem:[#allocation2 + $0x18] sm:$0xff] 0.0
      %110 = vst [vmem:[#allocation2 + $0x20] sm:$0xff] 0.0
      %111 = vst [vmem:[#allocation2 + $0x28] sm:$0xff] 0.0
      %112 = vst [vmem:[#allocation2 + $0x30] sm:$0xff] 0.0
      %113 = vst [vmem:[#allocation2 + $0x38] sm:$0xff] 0.0
    $region53: #{tpu_custom_call.1} parent=1 // pred_fallthru
      _
    %v114 = vld [vmem:[#allocation2] sm:$0xff]
    %v115 = vld [vmem:[#allocation2 + $0x8] sm:$0xff]
    %v116 = vld [vmem:[#allocation2 + $0x10] sm:$0xff]
    %v117 = vld [vmem:[#allocation2 + $0x18] sm:$0xff]
    %v118 = vld [vmem:[#allocation2 + $0x20] sm:$0xff]
    %v119 = vld [vmem:[#allocation2 + $0x28] sm:$0xff]
    %v120 = vld [vmem:[#allocation2 + $0x30] sm:$0xff]
    %v121 = vld [vmem:[#allocation2 + $0x38] sm:$0xff]
    %v122 = vld [vmem:[#allocation3] sm:$0xf]
    %v123 = vld [vmem:[#allocation5] sm:$0xff]
    %v124 = vld [vmem:[#allocation5 + $0x8] sm:$0xff]
    %v125 = vld [vmem:[#allocation5 + $0x10] sm:$0xff]
    %v126 = vld [vmem:[#allocation5 + $0x18] sm:$0xff]
    %v127 = vld [vmem:[#allocation5 + $0x20] sm:$0xff]
    %v128 = vld [vmem:[#allocation5 + $0x28] sm:$0xff]
    %v129 = vld [vmem:[#allocation5 + $0x30] sm:$0xff]
    %v130 = vld [vmem:[#allocation5 + $0x38] sm:$0xff]
    %v131 = vld [vmem:[#allocation5 + $0x40] sm:$0xff]
    %v132 = vld [vmem:[#allocation5 + $0x48] sm:$0xff]
    %v133 = vld [vmem:[#allocation5 + $0x50] sm:$0xff]
    %v134 = vld [vmem:[#allocation5 + $0x58] sm:$0xff]
    %v135 = vld [vmem:[#allocation5 + $0x60] sm:$0xff]
    %v136 = vld [vmem:[#allocation5 + $0x68] sm:$0xff]
    %v137 = vld [vmem:[#allocation5 + $0x70] sm:$0xff]
    %v138 = vld [vmem:[#allocation5 + $0x78] sm:$0xff]
    %v139 = vld [vmem:[#allocation5 + $0x80] sm:$0xff]
    %v140 = vld [vmem:[#allocation5 + $0x88] sm:$0xff]
    %v141 = vld [vmem:[#allocation5 + $0x90] sm:$0xff]
    %v142 = vld [vmem:[#allocation5 + $0x98] sm:$0xff]
    %v143 = vld [vmem:[#allocation5 + $0xa0] sm:$0xff]
    %v144 = vld [vmem:[#allocation5 + $0xa8] sm:$0xff]
    %v145 = vld [vmem:[#allocation5 + $0xb0] sm:$0xff]
    %v146 = vld [vmem:[#allocation5 + $0xb8] sm:$0xff]
    %v147 = vld [vmem:[#allocation5 + $0xc0] sm:$0xff]
    %v148 = vld [vmem:[#allocation5 + $0xc8] sm:$0xff]
    %v149 = vld [vmem:[#allocation5 + $0xd0] sm:$0xff]
    %v150 = vld [vmem:[#allocation5 + $0xd8] sm:$0xff]
    %v151 = vld [vmem:[#allocation5 + $0xe0] sm:$0xff]
    %v152 = vld [vmem:[#allocation5 + $0xe8] sm:$0xff]
    %v153 = vld [vmem:[#allocation5 + $0xf0] sm:$0xff]
    %v154 = vld [vmem:[#allocation5 + $0xf8] sm:$0xff]
    %v155 = vld [vmem:[#allocation5 + $0x100] sm:$0xff]
    %v156 = vld [vmem:[#allocation5 + $0x108] sm:$0xff]
    %v157 = vld [vmem:[#allocation5 + $0x110] sm:$0xff]
    %v158 = vld [vmem:[#allocation5 + $0x118] sm:$0xff]
    %v159 = vld [vmem:[#allocation5 + $0x120] sm:$0xff]
    %v160 = vld [vmem:[#allocation5 + $0x128] sm:$0xff]
    %v161 = vld [vmem:[#allocation5 + $0x130] sm:$0xff]
    %v162 = vld [vmem:[#allocation5 + $0x138] sm:$0xff]
    %v163 = vld [vmem:[#allocation5 + $0x140] sm:$0xff]
    %v164 = vld [vmem:[#allocation5 + $0x148] sm:$0xff]
    %v165 = vld [vmem:[#allocation5 + $0x150] sm:$0xff]
    %v166 = vld [vmem:[#allocation5 + $0x158] sm:$0xff]
    %v167 = vld [vmem:[#allocation5 + $0x160] sm:$0xff]
    %v168 = vld [vmem:[#allocation5 + $0x168] sm:$0xff]
    %v169 = vld [vmem:[#allocation5 + $0x170] sm:$0xff]
    %v170 = vld [vmem:[#allocation5 + $0x178] sm:$0xff]
    %v171 = vld [vmem:[#allocation5 + $0x180] sm:$0xff]
    %v172 = vld [vmem:[#allocation5 + $0x188] sm:$0xff]
    %v173 = vld [vmem:[#allocation5 + $0x190] sm:$0xff]
    %v174 = vld [vmem:[#allocation5 + $0x198] sm:$0xff]
    %v175 = vld [vmem:[#allocation5 + $0x1a0] sm:$0xff]
    %v176 = vld [vmem:[#allocation5 + $0x1a8] sm:$0xff]
    %v177 = vld [vmem:[#allocation5 + $0x1b0] sm:$0xff]
    %v178 = vld [vmem:[#allocation5 + $0x1b8] sm:$0xff]
    %v179 = vld [vmem:[#allocation5 + $0x1c0] sm:$0xff]
    %v180 = vld [vmem:[#allocation5 + $0x1c8] sm:$0xff]
    %v181 = vld [vmem:[#allocation5 + $0x1d0] sm:$0xff]
    %v182 = vld [vmem:[#allocation5 + $0x1d8] sm:$0xff]
    %v183 = vld [vmem:[#allocation5 + $0x1e0] sm:$0xff]
    %v184 = vld [vmem:[#allocation5 + $0x1e8] sm:$0xff]
    %v185 = vld [vmem:[#allocation5 + $0x1f0] sm:$0xff]
    %v186 = vld [vmem:[#allocation5 + $0x1f8] sm:$0xff]
    %v251 = vunpack.c.l.b16 %v123
    %v252 = vunpack.c.h.b16 %v123
    %v253 = vunpack.c.l.b16 %v124
    %v254 = vunpack.c.h.b16 %v124
    %v255 = vunpack.c.l.b16 %v125
    %v256 = vunpack.c.h.b16 %v125
    %v257 = vunpack.c.l.b16 %v126
    %v258 = vunpack.c.h.b16 %v126
    %v259 = vunpack.c.l.b16 %v127
    %v260 = vunpack.c.h.b16 %v127
    %v261 = vunpack.c.l.b16 %v128
    %v262 = vunpack.c.h.b16 %v128
    %v263 = vunpack.c.l.b16 %v129
    %v264 = vunpack.c.h.b16 %v129
    %v265 = vunpack.c.l.b16 %v130
    %v266 = vunpack.c.h.b16 %v130
    %v267 = vunpack.c.l.b16 %v131
    %v268 = vunpack.c.h.b16 %v131
    %v269 = vunpack.c.l.b16 %v132
    %v270 = vunpack.c.h.b16 %v132
    %v271 = vunpack.c.l.b16 %v133
    %v272 = vunpack.c.h.b16 %v133
    %v273 = vunpack.c.l.b16 %v134
    %v274 = vunpack.c.h.b16 %v134
    %v275 = vunpack.c.l.b16 %v135
    %v276 = vunpack.c.h.b16 %v135
    %v277 = vunpack.c.l.b16 %v136
    %v278 = vunpack.c.h.b16 %v136
    %v279 = vunpack.c.l.b16 %v137
    %v280 = vunpack.c.h.b16 %v137
    %v281 = vunpack.c.l.b16 %v138
    %v282 = vunpack.c.h.b16 %v138
    %v283 = vunpack.c.l.b16 %v139
    %v284 = vunpack.c.h.b16 %v139
    %v285 = vunpack.c.l.b16 %v140
    %v286 = vunpack.c.h.b16 %v140
    %v287 = vunpack.c.l.b16 %v141
    %v288 = vunpack.c.h.b16 %v141
    %v289 = vunpack.c.l.b16 %v142
    %v290 = vunpack.c.h.b16 %v142
    %v291 = vunpack.c.l.b16 %v143
    %v292 = vunpack.c.h.b16 %v143
    %v293 = vunpack.c.l.b16 %v144
    %v294 = vunpack.c.h.b16 %v144
    %v295 = vunpack.c.l.b16 %v145
    %v296 = vunpack.c.h.b16 %v145
    %v297 = vunpack.c.l.b16 %v146
    %v298 = vunpack.c.h.b16 %v146
    %v299 = vunpack.c.l.b16 %v147
    %v300 = vunpack.c.h.b16 %v147
    %v301 = vunpack.c.l.b16 %v148
    %v302 = vunpack.c.h.b16 %v148
    %v303 = vunpack.c.l.b16 %v149
    %v304 = vunpack.c.h.b16 %v149
    %v305 = vunpack.c.l.b16 %v150
    %v306 = vunpack.c.h.b16 %v150
    %v307 = vunpack.c.l.b16 %v151
    %v308 = vunpack.c.h.b16 %v151
    %v309 = vunpack.c.l.b16 %v152
    %v310 = vunpack.c.h.b16 %v152
    %v311 = vunpack.c.l.b16 %v153
    %v312 = vunpack.c.h.b16 %v153
    %v313 = vunpack.c.l.b16 %v154
    %v314 = vunpack.c.h.b16 %v154
    %v315 = vunpack.c.l.b16 %v155
    %v316 = vunpack.c.h.b16 %v155
    %v317 = vunpack.c.l.b16 %v156
    %v318 = vunpack.c.h.b16 %v156
    %v319 = vunpack.c.l.b16 %v157
    %v320 = vunpack.c.h.b16 %v157
    %v321 = vunpack.c.l.b16 %v158
    %v322 = vunpack.c.h.b16 %v158
    %v323 = vunpack.c.l.b16 %v159
    %v324 = vunpack.c.h.b16 %v159
    %v325 = vunpack.c.l.b16 %v160
    %v326 = vunpack.c.h.b16 %v160
    %v327 = vunpack.c.l.b16 %v161
    %v328 = vunpack.c.h.b16 %v161
    %v329 = vunpack.c.l.b16 %v162
    %v330 = vunpack.c.h.b16 %v162
    %v331 = vunpack.c.l.b16 %v163
    %v332 = vunpack.c.h.b16 %v163
    %v333 = vunpack.c.l.b16 %v164
    %v334 = vunpack.c.h.b16 %v164
    %v335 = vunpack.c.l.b16 %v165
    %v336 = vunpack.c.h.b16 %v165
    %v337 = vunpack.c.l.b16 %v166
    %v338 = vunpack.c.h.b16 %v166
    %v339 = vunpack.c.l.b16 %v167
    %v340 = vunpack.c.h.b16 %v167
    %v341 = vunpack.c.l.b16 %v168
    %v342 = vunpack.c.h.b16 %v168
    %v343 = vunpack.c.l.b16 %v169
    %v344 = vunpack.c.h.b16 %v169
    %v345 = vunpack.c.l.b16 %v170
    %v346 = vunpack.c.h.b16 %v170
    %v347 = vunpack.c.l.b16 %v171
    %v348 = vunpack.c.h.b16 %v171
    %v349 = vunpack.c.l.b16 %v172
    %v350 = vunpack.c.h.b16 %v172
    %v351 = vunpack.c.l.b16 %v173
    %v352 = vunpack.c.h.b16 %v173
    %v353 = vunpack.c.l.b16 %v174
    %v354 = vunpack.c.h.b16 %v174
    %v355 = vunpack.c.l.b16 %v175
    %v356 = vunpack.c.h.b16 %v175
    %v357 = vunpack.c.l.b16 %v176
    %v358 = vunpack.c.h.b16 %v176
    %v359 = vunpack.c.l.b16 %v177
    %v360 = vunpack.c.h.b16 %v177
    %v361 = vunpack.c.l.b16 %v178
    %v362 = vunpack.c.h.b16 %v178
    %v363 = vunpack.c.l.b16 %v179
    %v364 = vunpack.c.h.b16 %v179
    %v365 = vunpack.c.l.b16 %v180
    %v366 = vunpack.c.h.b16 %v180
    %v367 = vunpack.c.l.b16 %v181
    %v368 = vunpack.c.h.b16 %v181
    %v369 = vunpack.c.l.b16 %v182
    %v370 = vunpack.c.h.b16 %v182
    %v371 = vunpack.c.l.b16 %v183
    %v372 = vunpack.c.h.b16 %v183
    %v373 = vunpack.c.l.b16 %v184
    %v374 = vunpack.c.h.b16 %v184
    %v375 = vunpack.c.l.b16 %v185
    %v376 = vunpack.c.h.b16 %v185
    %v377 = vunpack.c.l.b16 %v186
    %v378 = vunpack.c.h.b16 %v186
    %v379 = vpack.c.b16 %v259, %v251
    %v380 = vpack.c.b16 %v260, %v252
    %v381 = vpack.c.b16 %v261, %v253
    %v382 = vpack.c.b16 %v262, %v254
    %v383 = vpack.c.b16 %v263, %v255
    %v384 = vpack.c.b16 %v264, %v256
    %v385 = vpack.c.b16 %v265, %v257
    %v386 = vpack.c.b16 %v266, %v258
    %v387 = vpack.c.b16 %v275, %v267
    %v388 = vpack.c.b16 %v276, %v268
    %v389 = vpack.c.b16 %v277, %v269
    %v390 = vpack.c.b16 %v278, %v270
    %v391 = vpack.c.b16 %v279, %v271
    %v392 = vpack.c.b16 %v280, %v272
    %v393 = vpack.c.b16 %v281, %v273
    %v394 = vpack.c.b16 %v282, %v274
    %v395 = vpack.c.b16 %v291, %v283
    %v396 = vpack.c.b16 %v292, %v284
    %v397 = vpack.c.b16 %v293, %v285
    %v398 = vpack.c.b16 %v294, %v286
    %v399 = vpack.c.b16 %v295, %v287
    %v400 = vpack.c.b16 %v296, %v288
    %v401 = vpack.c.b16 %v297, %v289
    %v402 = vpack.c.b16 %v298, %v290
    %v403 = vpack.c.b16 %v307, %v299
    %v404 = vpack.c.b16 %v308, %v300
    %v405 = vpack.c.b16 %v309, %v301
    %v406 = vpack.c.b16 %v310, %v302
    %v407 = vpack.c.b16 %v311, %v303
    %v408 = vpack.c.b16 %v312, %v304
    %v409 = vpack.c.b16 %v313, %v305
    %v410 = vpack.c.b16 %v314, %v306
    %v411 = vpack.c.b16 %v323, %v315
    %v412 = vpack.c.b16 %v324, %v316
    %v413 = vpack.c.b16 %v325, %v317
    %v414 = vpack.c.b16 %v326, %v318
    %v415 = vpack.c.b16 %v327, %v319
    %v416 = vpack.c.b16 %v328, %v320
    %v417 = vpack.c.b16 %v329, %v321
    %v418 = vpack.c.b16 %v330, %v322
    %v419 = vpack.c.b16 %v339, %v331
    %v420 = vpack.c.b16 %v340, %v332
    %v421 = vpack.c.b16 %v341, %v333
    %v422 = vpack.c.b16 %v342, %v334
    %v423 = vpack.c.b16 %v343, %v335
    %v424 = vpack.c.b16 %v344, %v336
    %v425 = vpack.c.b16 %v345, %v337
    %v426 = vpack.c.b16 %v346, %v338
    %v427 = vpack.c.b16 %v355, %v347
    %v428 = vpack.c.b16 %v356, %v348
    %v429 = vpack.c.b16 %v357, %v349
    %v430 = vpack.c.b16 %v358, %v350
    %v431 = vpack.c.b16 %v359, %v351
    %v432 = vpack.c.b16 %v360, %v352
    %v433 = vpack.c.b16 %v361, %v353
    %v434 = vpack.c.b16 %v362, %v354
    %v435 = vpack.c.b16 %v371, %v363
    %v436 = vpack.c.b16 %v372, %v364
    %v437 = vpack.c.b16 %v373, %v365
    %v438 = vpack.c.b16 %v374, %v366
    %v439 = vpack.c.b16 %v375, %v367
    %v440 = vpack.c.b16 %v376, %v368
    %v441 = vpack.c.b16 %v377, %v369
    %v442 = vpack.c.b16 %v378, %v370
    %507 = vmatprep.subr.bf16.mxu0 %v380
    %508 = vmatpush1.bf16.msra.mxu0 %v379
    %509 = vmatprep.subr.bf16.mxu0 %v388
    %510 = vmatpush1.bf16.msra.mxu0 %v387
    %511 = vmatprep.subr.bf16.mxu0 %v396
    %512 = vmatpush1.bf16.msra.mxu0 %v395
    %513 = vmatprep.subr.bf16.mxu0 %v404
    %514 = vmatpush1.bf16.msra.mxu0 %v403
    %515 = vmatprep.subr.bf16.mxu0 %v412
    %516 = vmatpush1.bf16.msra.mxu0 %v411
    %517 = vmatprep.subr.bf16.mxu0 %v420
    %518 = vmatpush1.bf16.msra.mxu0 %v419
    %519 = vmatprep.subr.bf16.mxu0 %v428
    %520 = vmatpush1.bf16.msra.mxu0 %v427
    %521 = vmatprep.subr.bf16.mxu0 %v436
    %522 = vmatpush1.bf16.msra.mxu0 %v435
    %523 = vmatprep.subr.bf16.mxu0 0
    %524 = vmatpush1.bf16.msra.mxu0 0
    %525 = vmatprep.subr.bf16.mxu0 0
    %526 = vmatpush1.bf16.msra.mxu0 0
    %527 = vmatprep.subr.bf16.mxu0 0
    %528 = vmatpush1.bf16.msra.mxu0 0
    %529 = vmatprep.subr.bf16.mxu0 0
    %530 = vmatpush1.bf16.msra.mxu0 0
    %531 = vmatprep.subr.bf16.mxu0 0
    %532 = vmatpush1.bf16.msra.mxu0 0
    %533 = vmatprep.subr.bf16.mxu0 0
    %534 = vmatpush1.bf16.msra.mxu0 0
    %535 = vmatprep.subr.bf16.mxu0 0
    %536 = vmatpush1.bf16.msra.mxu0 0
    %537 = vmatprep.subr.bf16.mxu0 0
    %538 = vmatpush1.bf16.msra.mxu0 0
    %539 = vmatprep.mubr.bf16.mxu0 0
    %540 = vmatmul.mubr.bf16.gmra.mrb[0].mxu0 %v122
    %v541 = vpop.f32.mrb[0].mxu0
    %v542 = vadd.f32 0.0, %v541
    %v543 = vpop.f32.mrb[0].mxu0
    %v544 = vadd.f32 0.0, %v543
    %v545 = vpop.f32.mrb[0].mxu0
    %v546 = vpop.f32.mrb[0].mxu0
    %547 = vdwg.mxu0
    %548 = vmatprep.subr.bf16.mxu0 %v382
    %549 = vmatpush1.bf16.msra.mxu0 %v381
    %550 = vmatprep.subr.bf16.mxu0 %v390
    %551 = vmatpush1.bf16.msra.mxu0 %v389
    %552 = vmatprep.subr.bf16.mxu0 %v398
    %553 = vmatpush1.bf16.msra.mxu0 %v397
    %554 = vmatprep.subr.bf16.mxu0 %v406
    %555 = vmatpush1.bf16.msra.mxu0 %v405
    %556 = vmatprep.subr.bf16.mxu0 %v414
    %557 = vmatpush1.bf16.msra.mxu0 %v413
    %558 = vmatprep.subr.bf16.mxu0 %v422
    %559 = vmatpush1.bf16.msra.mxu0 %v421
    %560 = vmatprep.subr.bf16.mxu0 %v430
    %561 = vmatpush1.bf16.msra.mxu0 %v429
    %562 = vmatprep.subr.bf16.mxu0 %v438
    %563 = vmatpush1.bf16.msra.mxu0 %v437
    %564 = vmatprep.subr.bf16.mxu0 0
    %565 = vmatpush1.bf16.msra.mxu0 0
    %566 = vmatprep.subr.bf16.mxu0 0
    %567 = vmatpush1.bf16.msra.mxu0 0
    %568 = vmatprep.subr.bf16.mxu0 0
    %569 = vmatpush1.bf16.msra.mxu0 0
    %570 = vmatprep.subr.bf16.mxu0 0
    %571 = vmatpush1.bf16.msra.mxu0 0
    %572 = vmatprep.subr.bf16.mxu0 0
    %573 = vmatpush1.bf16.msra.mxu0 0
    %574 = vmatprep.subr.bf16.mxu0 0
    %575 = vmatpush1.bf16.msra.mxu0 0
    %576 = vmatprep.subr.bf16.mxu0 0
    %577 = vmatpush1.bf16.msra.mxu0 0
    %578 = vmatprep.subr.bf16.mxu0 0
    %579 = vmatpush1.bf16.msra.mxu0 0
    %580 = vmatprep.mubr.bf16.mxu0 0
    %581 = vmatmul.mubr.bf16.gmra.mrb[0].mxu0 %v122
    %v582 = vpop.f32.mrb[0].mxu0
    %v583 = vadd.f32 0.0, %v582
    %v584 = vpop.f32.mrb[0].mxu0
    %v585 = vadd.f32 0.0, %v584
    %v586 = vpop.f32.mrb[0].mxu0
    %v587 = vpop.f32.mrb[0].mxu0
    %588 = vdwg.mxu0
    %589 = vmatprep.subr.bf16.mxu0 %v384
    %590 = vmatpush1.bf16.msra.mxu0 %v383
    %591 = vmatprep.subr.bf16.mxu0 %v392
    %592 = vmatpush1.bf16.msra.mxu0 %v391
    %593 = vmatprep.subr.bf16.mxu0 %v400
    %594 = vmatpush1.bf16.msra.mxu0 %v399
    %595 = vmatprep.subr.bf16.mxu0 %v408
    %596 = vmatpush1.bf16.msra.mxu0 %v407
    %597 = vmatprep.subr.bf16.mxu0 %v416
    %598 = vmatpush1.bf16.msra.mxu0 %v415
    %599 = vmatprep.subr.bf16.mxu0 %v424
    %600 = vmatpush1.bf16.msra.mxu0 %v423
    %601 = vmatprep.subr.bf16.mxu0 %v432
    %602 = vmatpush1.bf16.msra.mxu0 %v431
    %603 = vmatprep.subr.bf16.mxu0 %v440
    %604 = vmatpush1.bf16.msra.mxu0 %v439
    %605 = vmatprep.subr.bf16.mxu0 0
    %606 = vmatpush1.bf16.msra.mxu0 0
    %607 = vmatprep.subr.bf16.mxu0 0
    %608 = vmatpush1.bf16.msra.mxu0 0
    %609 = vmatprep.subr.bf16.mxu0 0
    %610 = vmatpush1.bf16.msra.mxu0 0
    %611 = vmatprep.subr.bf16.mxu0 0
    %612 = vmatpush1.bf16.msra.mxu0 0
    %613 = vmatprep.subr.bf16.mxu0 0
    %614 = vmatpush1.bf16.msra.mxu0 0
    %615 = vmatprep.subr.bf16.mxu0 0
    %616 = vmatpush1.bf16.msra.mxu0 0
    %617 = vmatprep.subr.bf16.mxu0 0
    %618 = vmatpush1.bf16.msra.mxu0 0
    %619 = vmatprep.subr.bf16.mxu0 0
    %620 = vmatpush1.bf16.msra.mxu0 0
    %621 = vmatprep.mubr.bf16.mxu0 0
    %622 = vmatmul.mubr.bf16.gmra.mrb[0].mxu0 %v122
    %v623 = vpop.f32.mrb[0].mxu0
    %v624 = vadd.f32 0.0, %v623
    %v625 = vpop.f32.mrb[0].mxu0
    %v626 = vadd.f32 0.0, %v625
    %v627 = vpop.f32.mrb[0].mxu0
    %v628 = vpop.f32.mrb[0].mxu0
    %629 = vdwg.mxu0
    %630 = vmatprep.subr.bf16.mxu0 %v386
    %631 = vmatpush1.bf16.msra.mxu0 %v385
    %632 = vmatprep.subr.bf16.mxu0 %v394
    %633 = vmatpush1.bf16.msra.mxu0 %v393
    %634 = vmatprep.subr.bf16.mxu0 %v402
    %635 = vmatpush1.bf16.msra.mxu0 %v401
    %636 = vmatprep.subr.bf16.mxu0 %v410
    %637 = vmatpush1.bf16.msra.mxu0 %v409
    %638 = vmatprep.subr.bf16.mxu0 %v418
    %639 = vmatpush1.bf16.msra.mxu0 %v417
    %640 = vmatprep.subr.bf16.mxu0 %v426
    %641 = vmatpush1.bf16.msra.mxu0 %v425
    %642 = vmatprep.subr.bf16.mxu0 %v434
    %643 = vmatpush1.bf16.msra.mxu0 %v433
    %644 = vmatprep.subr.bf16.mxu0 %v442
    %645 = vmatpush1.bf16.msra.mxu0 %v441
    %646 = vmatprep.subr.bf16.mxu0 0
    %647 = vmatpush1.bf16.msra.mxu0 0
    %648 = vmatprep.subr.bf16.mxu0 0
    %649 = vmatpush1.bf16.msra.mxu0 0
    %650 = vmatprep.subr.bf16.mxu0 0
    %651 = vmatpush1.bf16.msra.mxu0 0
    %652 = vmatprep.subr.bf16.mxu0 0
    %653 = vmatpush1.bf16.msra.mxu0 0
    %654 = vmatprep.subr.bf16.mxu0 0
    %655 = vmatpush1.bf16.msra.mxu0 0
    %656 = vmatprep.subr.bf16.mxu0 0
    %657 = vmatpush1.bf16.msra.mxu0 0
    %658 = vmatprep.subr.bf16.mxu0 0
    %659 = vmatpush1.bf16.msra.mxu0 0
    %660 = vmatprep.subr.bf16.mxu0 0
    %661 = vmatpush1.bf16.msra.mxu0 0
    %662 = vmatprep.mubr.bf16.mxu0 0
    %663 = vmatmul.mubr.bf16.gmra.mrb[0].mxu0 %v122
    %v664 = vpop.f32.mrb[0].mxu0
    %v665 = vadd.f32 0.0, %v664
    %v666 = vpop.f32.mrb[0].mxu0
    %v667 = vadd.f32 0.0, %v666
    %v668 = vpop.f32.mrb[0].mxu0
    %v669 = vpop.f32.mrb[0].mxu0
    %670 = vdwg.mxu0
    %v671 = vadd.f32 %v114, %v542
    %v672 = vadd.f32 %v115, %v544
    %v673 = vadd.f32 %v116, %v583
    %v674 = vadd.f32 %v117, %v585
    %v675 = vadd.f32 %v118, %v624
    %v676 = vadd.f32 %v119, %v626
    %v677 = vadd.f32 %v120, %v665
    %v678 = vadd.f32 %v121, %v667
    %679 = vst [vmem:[#allocation2] sm:$0xff] %v671
    %680 = vst [vmem:[#allocation2 + $0x8] sm:$0xff] %v672
    %681 = vst [vmem:[#allocation2 + $0x10] sm:$0xff] %v673
    %682 = vst [vmem:[#allocation2 + $0x18] sm:$0xff] %v674
    %683 = vst [vmem:[#allocation2 + $0x20] sm:$0xff] %v675
    %684 = vst [vmem:[#allocation2 + $0x28] sm:$0xff] %v676
    %685 = vst [vmem:[#allocation2 + $0x30] sm:$0xff] %v677
    %686 = vst [vmem:[#allocation2 + $0x38] sm:$0xff] %v678
    // Predicated region
    $region54: #{tpu_custom_call.1} parent=1 // pred_check
      %p687 = pneg %p102
    $region55: #{tpu_custom_call.1} parent=1 // pred_check_branch
      %689 = sbr.rel (%p687) target = $region57
    $region56: #{tpu_custom_call.1} parent=1 // pred_region
      %v690 = vld [vmem:[#allocation11] sm:$0xff]
      %v691 = vld [vmem:[#allocation11 + $0x8] sm:$0xff]
      %v692 = vld [vmem:[#allocation11 + $0x10] sm:$0xff]
      %v693 = vld [vmem:[#allocation11 + $0x18] sm:$0xff]
      %v694 = vld [vmem:[#allocation11 + $0x20] sm:$0xff]
      %v695 = vld [vmem:[#allocation11 + $0x28] sm:$0xff]
      %v696 = vld [vmem:[#allocation11 + $0x30] sm:$0xff]
      %v697 = vld [vmem:[#allocation11 + $0x38] sm:$0xff]
      %v698 = vld [vmem:[#allocation2] sm:$0xff]
      %v699 = vld [vmem:[#allocation2 + $0x8] sm:$0xff]
      %v700 = vld [vmem:[#allocation2 + $0x10] sm:$0xff]
      %v701 = vld [vmem:[#allocation2 + $0x18] sm:$0xff]
      %v702 = vld [vmem:[#allocation2 + $0x20] sm:$0xff]
      %v703 = vld [vmem:[#allocation2 + $0x28] sm:$0xff]
      %v704 = vld [vmem:[#allocation2 + $0x30] sm:$0xff]
      %v705 = vld [vmem:[#allocation2 + $0x38] sm:$0xff]
      %v706 = vlaneseq
      %v707 = vshrl.u32 %v706, 7
      %v708 = vsub.s32 0, %v707
      %v709 = vrot.slane %v690, %v708
      %v710 = vlaneseq
      %v711 = vshrl.u32 %v710, 7
      %v712 = vsub.s32 0, %v711
      %v713 = vrot.slane %v691, %v712
      %v714 = vlaneseq
      %v715 = vshrl.u32 %v714, 7
      %v716 = vsub.s32 0, %v715
      %v717 = vrot.slane %v692, %v716
      %v718 = vlaneseq
      %v719 = vshrl.u32 %v718, 7
      %v720 = vsub.s32 0, %v719
      %v721 = vrot.slane %v693, %v720
      %v722 = vlaneseq
      %v723 = vshrl.u32 %v722, 7
      %v724 = vsub.s32 0, %v723
      %v725 = vrot.slane %v694, %v724
      %v726 = vlaneseq
      %v727 = vshrl.u32 %v726, 7
      %v728 = vsub.s32 0, %v727
      %v729 = vrot.slane %v695, %v728
      %v730 = vlaneseq
      %v731 = vshrl.u32 %v730, 7
      %v732 = vsub.s32 0, %v731
      %v733 = vrot.slane %v696, %v732
      %v734 = vlaneseq
      %v735 = vshrl.u32 %v734, 7
      %v736 = vsub.s32 0, %v735
      %v737 = vrot.slane %v697, %v736
      %v738 = vadd.f32 %v698, %v709
      %v739 = vadd.f32 %v699, %v713
      %v740 = vadd.f32 %v700, %v717
      %v741 = vadd.f32 %v701, %v721
      %v742 = vadd.f32 %v702, %v725
      %v743 = vadd.f32 %v703, %v729
      %v744 = vadd.f32 %v704, %v733
      %v745 = vadd.f32 %v705, %v737
      %vm746 = vcmp.gt.f32.partialorder %v738, 0.0
      %vm747 = vcmp.gt.f32.partialorder %v739, 0.0
      %vm748 = vcmp.gt.f32.partialorder %v740, 0.0
      %vm749 = vcmp.gt.f32.partialorder %v741, 0.0
      %vm750 = vcmp.gt.f32.partialorder %v742, 0.0
      %vm751 = vcmp.gt.f32.partialorder %v743, 0.0
      %vm752 = vcmp.gt.f32.partialorder %v744, 0.0
      %vm753 = vcmp.gt.f32.partialorder %v745, 0.0
      %v754 = vmul.f32 %v738, 0.01
      %v755 = vmul.f32 %v739, 0.01
      %v756 = vmul.f32 %v740, 0.01
      %v757 = vmul.f32 %v741, 0.01
      %v758 = vmul.f32 %v742, 0.01
      %v759 = vmul.f32 %v743, 0.01
      %v760 = vmul.f32 %v744, 0.01
      %v761 = vmul.f32 %v745, 0.01
      %v762 = vsel %vm746, %v738, %v754
      %v763 = vsel %vm747, %v739, %v755
      %v764 = vsel %vm748, %v740, %v756
      %v765 = vsel %vm749, %v741, %v757
      %v766 = vsel %vm750, %v742, %v758
      %v767 = vsel %vm751, %v743, %v759
      %v768 = vsel %vm752, %v744, %v760
      %v769 = vsel %vm753, %v745, %v761
      %v770 = vpack.c.bf16 %v762, %v762
      %v771 = vpack.c.bf16 %v763, %v763
      %v772 = vpack.c.bf16 %v764, %v764
      %v773 = vpack.c.bf16 %v765, %v765
      %v774 = vpack.c.bf16 %v766, %v766
      %v775 = vpack.c.bf16 %v767, %v767
      %v776 = vpack.c.bf16 %v768, %v768
      %v777 = vpack.c.bf16 %v769, %v769
      %v778 = vld [vmem:[#allocation7] sm:$0xff]
      %v779 = vld [vmem:[#allocation7 + $0x8] sm:$0xff]
      %v780 = vld [vmem:[#allocation7 + $0x10] sm:$0xf]
      %v781 = vld [vmem:[#allocation7 + $0x14] sm:$0xff]
      %v782 = vld [vmem:[#allocation7 + $0x1c] sm:$0xff]
      %v783 = vld [vmem:[#allocation7 + $0x24] sm:$0xf]
      %v784 = vld [vmem:[#allocation7 + $0x28] sm:$0xff]
      %v785 = vld [vmem:[#allocation7 + $0x30] sm:$0xff]
      %v786 = vld [vmem:[#allocation7 + $0x38] sm:$0xf]
      %v787 = vld [vmem:[#allocation7 + $0x3c] sm:$0xff]
      %v788 = vld [vmem:[#allocation7 + $0x44] sm:$0xff]
      %v789 = vld [vmem:[#allocation7 + $0x4c] sm:$0xf]
      %v790 = vld [vmem:[#allocation7 + $0x50] sm:$0xff]
      %v791 = vld [vmem:[#allocation7 + $0x58] sm:$0xff]
      %v792 = vld [vmem:[#allocation7 + $0x60] sm:$0xf]
      %v793 = vld [vmem:[#allocation7 + $0x64] sm:$0xff]
      %v794 = vld [vmem:[#allocation7 + $0x6c] sm:$0xff]
      %v795 = vld [vmem:[#allocation7 + $0x74] sm:$0xf]
      %v796 = vld [vmem:[#allocation7 + $0x78] sm:$0xff]
      %v797 = vld [vmem:[#allocation7 + $0x80] sm:$0xff]
      %v798 = vld [vmem:[#allocation7 + $0x88] sm:$0xf]
      %v799 = vld [vmem:[#allocation7 + $0x8c] sm:$0xff]
      %v800 = vld [vmem:[#allocation7 + $0x94] sm:$0xff]
      %v801 = vld [vmem:[#allocation7 + $0x9c] sm:$0xf]
      %v802 = vld [vmem:[#allocation7 + $0xa0] sm:$0xff]
      %v803 = vld [vmem:[#allocation7 + $0xa8] sm:$0xff]
      %v804 = vld [vmem:[#allocation7 + $0xb0] sm:$0xf]
      %v805 = vld [vmem:[#allocation7 + $0xb4] sm:$0xff]
      %v806 = vld [vmem:[#allocation7 + $0xbc] sm:$0xff]
      %v807 = vld [vmem:[#allocation7 + $0xc4] sm:$0xf]
      %v808 = vld [vmem:[#allocation7 + $0xc8] sm:$0xff]
      %v809 = vld [vmem:[#allocation7 + $0xd0] sm:$0xff]
      %v810 = vld [vmem:[#allocation7 + $0xd8] sm:$0xf]
      %v811 = vld [vmem:[#allocation7 + $0xdc] sm:$0xff]
      %v812 = vld [vmem:[#allocation7 + $0xe4] sm:$0xff]
      %v813 = vld [vmem:[#allocation7 + $0xec] sm:$0xf]
      %v814 = vld [vmem:[#allocation7 + $0xf0] sm:$0xff]
      %v815 = vld [vmem:[#allocation7 + $0xf8] sm:$0xff]
      %v816 = vld [vmem:[#allocation7 + $0x100] sm:$0xf]
      %v817 = vld [vmem:[#allocation7 + $0x104] sm:$0xff]
      %v818 = vld [vmem:[#allocation7 + $0x10c] sm:$0xff]
      %v819 = vld [vmem:[#allocation7 + $0x114] sm:$0xf]
      %v820 = vld [vmem:[#allocation7 + $0x118] sm:$0xff]
      %v821 = vld [vmem:[#allocation7 + $0x120] sm:$0xff]
      %v822 = vld [vmem:[#allocation7 + $0x128] sm:$0xf]
      %v823 = vld [vmem:[#allocation7 + $0x12c] sm:$0xff]
      %v824 = vld [vmem:[#allocation7 + $0x134] sm:$0xff]
      %v825 = vld [vmem:[#allocation7 + $0x13c] sm:$0xf]
      %v826 = vld [vmem:[#allocation7 + $0x140] sm:$0xff]
      %v827 = vld [vmem:[#allocation7 + $0x148] sm:$0xff]
      %v828 = vld [vmem:[#allocation7 + $0x150] sm:$0xf]
      %v829 = vld [vmem:[#allocation7 + $0x154] sm:$0xff]
      %v830 = vld [vmem:[#allocation7 + $0x15c] sm:$0xff]
      %v831 = vld [vmem:[#allocation7 + $0x164] sm:$0xf]
      %v832 = vld [vmem:[#allocation7 + $0x168] sm:$0xff]
      %v833 = vld [vmem:[#allocation7 + $0x170] sm:$0xff]
      %v834 = vld [vmem:[#allocation7 + $0x178] sm:$0xf]
      %v835 = vld [vmem:[#allocation7 + $0x17c] sm:$0xff]
      %v836 = vld [vmem:[#allocation7 + $0x184] sm:$0xff]
      %v837 = vld [vmem:[#allocation7 + $0x18c] sm:$0xf]
      %v838 = vld [vmem:[#allocation7 + $0x190] sm:$0xff]
      %v839 = vld [vmem:[#allocation7 + $0x198] sm:$0xff]
      %v840 = vld [vmem:[#allocation7 + $0x1a0] sm:$0xf]
      %v841 = vld [vmem:[#allocation7 + $0x1a4] sm:$0xff]
      %v842 = vld [vmem:[#allocation7 + $0x1ac] sm:$0xff]
      %v843 = vld [vmem:[#allocation7 + $0x1b4] sm:$0xf]
      %v844 = vld [vmem:[#allocation7 + $0x1b8] sm:$0xff]
      %v845 = vld [vmem:[#allocation7 + $0x1c0] sm:$0xff]
      %v846 = vld [vmem:[#allocation7 + $0x1c8] sm:$0xf]
      %v847 = vld [vmem:[#allocation7 + $0x1cc] sm:$0xff]
      %v848 = vld [vmem:[#allocation7 + $0x1d4] sm:$0xff]
      %v849 = vld [vmem:[#allocation7 + $0x1dc] sm:$0xf]
      %v850 = vld [vmem:[#allocation7 + $0x1e0] sm:$0xff]
      %v851 = vld [vmem:[#allocation7 + $0x1e8] sm:$0xff]
      %v852 = vld [vmem:[#allocation7 + $0x1f0] sm:$0xf]
      %v853 = vld [vmem:[#allocation7 + $0x1f4] sm:$0xff]
      %v854 = vld [vmem:[#allocation7 + $0x1fc] sm:$0xff]
      %v855 = vld [vmem:[#allocation7 + $0x204] sm:$0xf]
      %v856 = vld [vmem:[#allocation7 + $0x208] sm:$0xff]
      %v857 = vld [vmem:[#allocation7 + $0x210] sm:$0xff]
      %v858 = vld [vmem:[#allocation7 + $0x218] sm:$0xf]
      %v859 = vld [vmem:[#allocation7 + $0x21c] sm:$0xff]
      %v860 = vld [vmem:[#allocation7 + $0x224] sm:$0xff]
      %v861 = vld [vmem:[#allocation7 + $0x22c] sm:$0xf]
      %v862 = vld [vmem:[#allocation7 + $0x230] sm:$0xff]
      %v863 = vld [vmem:[#allocation7 + $0x238] sm:$0xff]
      %v864 = vld [vmem:[#allocation7 + $0x240] sm:$0xf]
      %v865 = vld [vmem:[#allocation7 + $0x244] sm:$0xff]
      %v866 = vld [vmem:[#allocation7 + $0x24c] sm:$0xff]
      %v867 = vld [vmem:[#allocation7 + $0x254] sm:$0xf]
      %v868 = vld [vmem:[#allocation7 + $0x258] sm:$0xff]
      %v869 = vld [vmem:[#allocation7 + $0x260] sm:$0xff]
      %v870 = vld [vmem:[#allocation7 + $0x268] sm:$0xf]
      %v871 = vld [vmem:[#allocation7 + $0x26c] sm:$0xff]
      %v872 = vld [vmem:[#allocation7 + $0x274] sm:$0xff]
      %v873 = vld [vmem:[#allocation7 + $0x27c] sm:$0xf]
      %v874 = vld [vmem:[#allocation7 + $0x280] sm:$0xff]
      %v875 = vld [vmem:[#allocation7 + $0x288] sm:$0xff]
      %v876 = vld [vmem:[#allocation7 + $0x290] sm:$0xf]
      %v877 = vld [vmem:[#allocation7 + $0x294] sm:$0xff]
      %v878 = vld [vmem:[#allocation7 + $0x29c] sm:$0xff]
      %v879 = vld [vmem:[#allocation7 + $0x2a4] sm:$0xf]
      %v880 = vld [vmem:[#allocation7 + $0x2a8] sm:$0xff]
      %v881 = vld [vmem:[#allocation7 + $0x2b0] sm:$0xff]
      %v882 = vld [vmem:[#allocation7 + $0x2b8] sm:$0xf]
      %v883 = vld [vmem:[#allocation7 + $0x2bc] sm:$0xff]
      %v884 = vld [vmem:[#allocation7 + $0x2c4] sm:$0xff]
      %v885 = vld [vmem:[#allocation7 + $0x2cc] sm:$0xf]
      %v886 = vld [vmem:[#allocation7 + $0x2d0] sm:$0xff]
      %v887 = vld [vmem:[#allocation7 + $0x2d8] sm:$0xff]
      %v888 = vld [vmem:[#allocation7 + $0x2e0] sm:$0xf]
      %v889 = vld [vmem:[#allocation7 + $0x2e4] sm:$0xff]
      %v890 = vld [vmem:[#allocation7 + $0x2ec] sm:$0xff]
      %v891 = vld [vmem:[#allocation7 + $0x2f4] sm:$0xf]
      %v892 = vld [vmem:[#allocation7 + $0x2f8] sm:$0xff]
      %v893 = vld [vmem:[#allocation7 + $0x300] sm:$0xff]
      %v894 = vld [vmem:[#allocation7 + $0x308] sm:$0xf]
      %v895 = vld [vmem:[#allocation7 + $0x30c] sm:$0xff]
      %v896 = vld [vmem:[#allocation7 + $0x314] sm:$0xff]
      %v897 = vld [vmem:[#allocation7 + $0x31c] sm:$0xf]
      %v898 = vld [vmem:[#allocation7 + $0x320] sm:$0xff]
      %v899 = vld [vmem:[#allocation7 + $0x328] sm:$0xff]
      %v900 = vld [vmem:[#allocation7 + $0x330] sm:$0xf]
      %v901 = vld [vmem:[#allocation7 + $0x334] sm:$0xff]
      %v902 = vld [vmem:[#allocation7 + $0x33c] sm:$0xff]
      %v903 = vld [vmem:[#allocation7 + $0x344] sm:$0xf]
      %v904 = vld [vmem:[#allocation7 + $0x348] sm:$0xff]
      %v905 = vld [vmem:[#allocation7 + $0x350] sm:$0xff]
      %v906 = vld [vmem:[#allocation7 + $0x358] sm:$0xf]
      %v907 = vld [vmem:[#allocation7 + $0x35c] sm:$0xff]
      %v908 = vld [vmem:[#allocation7 + $0x364] sm:$0xff]
      %v909 = vld [vmem:[#allocation7 + $0x36c] sm:$0xf]
      %v910 = vld [vmem:[#allocation7 + $0x370] sm:$0xff]
      %v911 = vld [vmem:[#allocation7 + $0x378] sm:$0xff]
      %v912 = vld [vmem:[#allocation7 + $0x380] sm:$0xf]
      %v913 = vld [vmem:[#allocation7 + $0x384] sm:$0xff]
      %v914 = vld [vmem:[#allocation7 + $0x38c] sm:$0xff]
      %v915 = vld [vmem:[#allocation7 + $0x394] sm:$0xf]
      %v916 = vld [vmem:[#allocation7 + $0x398] sm:$0xff]
      %v917 = vld [vmem:[#allocation7 + $0x3a0] sm:$0xff]
      %v918 = vld [vmem:[#allocation7 + $0x3a8] sm:$0xf]
      %v919 = vld [vmem:[#allocation7 + $0x3ac] sm:$0xff]
      %v920 = vld [vmem:[#allocation7 + $0x3b4] sm:$0xff]
      %v921 = vld [vmem:[#allocation7 + $0x3bc] sm:$0xf]
      %v922 = vld [vmem:[#allocation7 + $0x3c0] sm:$0xff]
      %v923 = vld [vmem:[#allocation7 + $0x3c8] sm:$0xff]
      %v924 = vld [vmem:[#allocation7 + $0x3d0] sm:$0xf]
      %v925 = vld [vmem:[#allocation7 + $0x3d4] sm:$0xff]
      %v926 = vld [vmem:[#allocation7 + $0x3dc] sm:$0xff]
      %v927 = vld [vmem:[#allocation7 + $0x3e4] sm:$0xf]
      %v928 = vld [vmem:[#allocation7 + $0x3e8] sm:$0xff]
      %v929 = vld [vmem:[#allocation7 + $0x3f0] sm:$0xff]
      %v930 = vld [vmem:[#allocation7 + $0x3f8] sm:$0xf]
      %v931 = vld [vmem:[#allocation7 + $0x3fc] sm:$0xff]
      %v932 = vld [vmem:[#allocation7 + $0x404] sm:$0xff]
      %v933 = vld [vmem:[#allocation7 + $0x40c] sm:$0xf]
      %v934 = vld [vmem:[#allocation7 + $0x410] sm:$0xff]
      %v935 = vld [vmem:[#allocation7 + $0x418] sm:$0xff]
      %v936 = vld [vmem:[#allocation7 + $0x420] sm:$0xf]
      %v937 = vld [vmem:[#allocation7 + $0x424] sm:$0xff]
      %v938 = vld [vmem:[#allocation7 + $0x42c] sm:$0xff]
      %v939 = vld [vmem:[#allocation7 + $0x434] sm:$0xf]
      %v940 = vld [vmem:[#allocation7 + $0x438] sm:$0xff]
      %v941 = vld [vmem:[#allocation7 + $0x440] sm:$0xff]
      %v942 = vld [vmem:[#allocation7 + $0x448] sm:$0xf]
      %v943 = vld [vmem:[#allocation7 + $0x44c] sm:$0xff]
      %v944 = vld [vmem:[#allocation7 + $0x454] sm:$0xff]
      %v945 = vld [vmem:[#allocation7 + $0x45c] sm:$0xf]
      %v946 = vld [vmem:[#allocation7 + $0x460] sm:$0xff]
      %v947 = vld [vmem:[#allocation7 + $0x468] sm:$0xff]
      %v948 = vld [vmem:[#allocation7 + $0x470] sm:$0xf]
      %v949 = vld [vmem:[#allocation7 + $0x474] sm:$0xff]
      %v950 = vld [vmem:[#allocation7 + $0x47c] sm:$0xff]
      %v951 = vld [vmem:[#allocation7 + $0x484] sm:$0xf]
      %v952 = vld [vmem:[#allocation7 + $0x488] sm:$0xff]
      %v953 = vld [vmem:[#allocation7 + $0x490] sm:$0xff]
      %v954 = vld [vmem:[#allocation7 + $0x498] sm:$0xf]
      %v955 = vld [vmem:[#allocation7 + $0x49c] sm:$0xff]
      %v956 = vld [vmem:[#allocation7 + $0x4a4] sm:$0xff]
      %v957 = vld [vmem:[#allocation7 + $0x4ac] sm:$0xf]
      %v958 = vld [vmem:[#allocation7 + $0x4b0] sm:$0xff]
      %v959 = vld [vmem:[#allocation7 + $0x4b8] sm:$0xff]
      %v960 = vld [vmem:[#allocation7 + $0x4c0] sm:$0xf]
      %v961 = vld [vmem:[#allocation7 + $0x4c4] sm:$0xff]
      %v962 = vld [vmem:[#allocation7 + $0x4cc] sm:$0xff]
      %v963 = vld [vmem:[#allocation7 + $0x4d4] sm:$0xf]
      %v964 = vld [vmem:[#allocation7 + $0x4d8] sm:$0xff]
      %v965 = vld [vmem:[#allocation7 + $0x4e0] sm:$0xff]
      %v966 = vld [vmem:[#allocation7 + $0x4e8] sm:$0xf]
      %v967 = vld [vmem:[#allocation7 + $0x4ec] sm:$0xff]
      %v968 = vld [vmem:[#allocation7 + $0x4f4] sm:$0xff]
      %v969 = vld [vmem:[#allocation7 + $0x4fc] sm:$0xf]
      %v970 = vld [vmem:[#allocation7 + $0x500] sm:$0xff]
      %v971 = vld [vmem:[#allocation7 + $0x508] sm:$0xff]
      %v972 = vld [vmem:[#allocation7 + $0x510] sm:$0xf]
      %v973 = vld [vmem:[#allocation7 + $0x514] sm:$0xff]
      %v974 = vld [vmem:[#allocation7 + $0x51c] sm:$0xff]
      %v975 = vld [vmem:[#allocation7 + $0x524] sm:$0xf]
      %v976 = vld [vmem:[#allocation7 + $0x528] sm:$0xff]
      %v977 = vld [vmem:[#allocation7 + $0x530] sm:$0xff]
      %v978 = vld [vmem:[#allocation7 + $0x538] sm:$0xf]
      %v979 = vld [vmem:[#allocation7 + $0x53c] sm:$0xff]
      %v980 = vld [vmem:[#allocation7 + $0x544] sm:$0xff]
      %v981 = vld [vmem:[#allocation7 + $0x54c] sm:$0xf]
      %v982 = vld [vmem:[#allocation7 + $0x550] sm:$0xff]
      %v983 = vld [vmem:[#allocation7 + $0x558] sm:$0xff]
      %v984 = vld [vmem:[#allocation7 + $0x560] sm:$0xf]
      %v985 = vld [vmem:[#allocation7 + $0x564] sm:$0xff]
      %v986 = vld [vmem:[#allocation7 + $0x56c] sm:$0xff]
      %v987 = vld [vmem:[#allocation7 + $0x574] sm:$0xf]
      %v988 = vld [vmem:[#allocation7 + $0x578] sm:$0xff]
      %v989 = vld [vmem:[#allocation7 + $0x580] sm:$0xff]
      %v990 = vld [vmem:[#allocation7 + $0x588] sm:$0xf]
      %v991 = vld [vmem:[#allocation7 + $0x58c] sm:$0xff]
      %v992 = vld [vmem:[#allocation7 + $0x594] sm:$0xff]
      %v993 = vld [vmem:[#allocation7 + $0x59c] sm:$0xf]
      %v994 = vld [vmem:[#allocation7 + $0x5a0] sm:$0xff]
      %v995 = vld [vmem:[#allocation7 + $0x5a8] sm:$0xff]
      %v996 = vld [vmem:[#allocation7 + $0x5b0] sm:$0xf]
      %v997 = vld [vmem:[#allocation7 + $0x5b4] sm:$0xff]
      %v998 = vld [vmem:[#allocation7 + $0x5bc] sm:$0xff]
      %v999 = vld [vmem:[#allocation7 + $0x5c4] sm:$0xf]
      %v1000 = vld [vmem:[#allocation7 + $0x5c8] sm:$0xff]
      %v1001 = vld [vmem:[#allocation7 + $0x5d0] sm:$0xff]
      %v1002 = vld [vmem:[#allocation7 + $0x5d8] sm:$0xf]
      %v1003 = vld [vmem:[#allocation7 + $0x5dc] sm:$0xff]
      %v1004 = vld [vmem:[#allocation7 + $0x5e4] sm:$0xff]
      %v1005 = vld [vmem:[#allocation7 + $0x5ec] sm:$0xf]
      %v1006 = vld [vmem:[#allocation7 + $0x5f0] sm:$0xff]
      %v1007 = vld [vmem:[#allocation7 + $0x5f8] sm:$0xff]
      %v1008 = vld [vmem:[#allocation7 + $0x600] sm:$0xf]
      %v1009 = vld [vmem:[#allocation7 + $0x604] sm:$0xff]
      %v1010 = vld [vmem:[#allocation7 + $0x60c] sm:$0xff]
      %v1011 = vld [vmem:[#allocation7 + $0x614] sm:$0xf]
      %v1012 = vld [vmem:[#allocation7 + $0x618] sm:$0xff]
      %v1013 = vld [vmem:[#allocation7 + $0x620] sm:$0xff]
      %v1014 = vld [vmem:[#allocation7 + $0x628] sm:$0xf]
      %v1015 = vld [vmem:[#allocation7 + $0x62c] sm:$0xff]
      %v1016 = vld [vmem:[#allocation7 + $0x634] sm:$0xff]
      %v1017 = vld [vmem:[#allocation7 + $0x63c] sm:$0xf]
      %v1018 = vld [vmem:[#allocation7 + $0x640] sm:$0xff]
      %v1019 = vld [vmem:[#allocation7 + $0x648] sm:$0xff]
      %v1020 = vld [vmem:[#allocation7 + $0x650] sm:$0xf]
      %v1021 = vld [vmem:[#allocation7 + $0x654] sm:$0xff]
      %v1022 = vld [vmem:[#allocation7 + $0x65c] sm:$0xff]
      %v1023 = vld [vmem:[#allocation7 + $0x664] sm:$0xf]
      %v1024 = vld [vmem:[#allocation7 + $0x668] sm:$0xff]
      %v1025 = vld [vmem:[#allocation7 + $0x670] sm:$0xff]
      %v1026 = vld [vmem:[#allocation7 + $0x678] sm:$0xf]
      %v1027 = vld [vmem:[#allocation7 + $0x67c] sm:$0xff]
      %v1028 = vld [vmem:[#allocation7 + $0x684] sm:$0xff]
      %v1029 = vld [vmem:[#allocation7 + $0x68c] sm:$0xf]
      %v1030 = vld [vmem:[#allocation7 + $0x690] sm:$0xff]
      %v1031 = vld [vmem:[#allocation7 + $0x698] sm:$0xff]
      %v1032 = vld [vmem:[#allocation7 + $0x6a0] sm:$0xf]
      %v1033 = vld [vmem:[#allocation7 + $0x6a4] sm:$0xff]
      %v1034 = vld [vmem:[#allocation7 + $0x6ac] sm:$0xff]
      %v1035 = vld [vmem:[#allocation7 + $0x6b4] sm:$0xf]
      %v1036 = vld [vmem:[#allocation7 + $0x6b8] sm:$0xff]
      %v1037 = vld [vmem:[#allocation7 + $0x6c0] sm:$0xff]
      %v1038 = vld [vmem:[#allocation7 + $0x6c8] sm:$0xf]
      %v1039 = vld [vmem:[#allocation7 + $0x6cc] sm:$0xff]
      %v1040 = vld [vmem:[#allocation7 + $0x6d4] sm:$0xff]
      %v1041 = vld [vmem:[#allocation7 + $0x6dc] sm:$0xf]
      %v1042 = vld [vmem:[#allocation7 + $0x6e0] sm:$0xff]
      %v1043 = vld [vmem:[#allocation7 + $0x6e8] sm:$0xff]
      %v1044 = vld [vmem:[#allocation7 + $0x6f0] sm:$0xf]
      %v1045 = vld [vmem:[#allocation7 + $0x6f4] sm:$0xff]
      %v1046 = vld [vmem:[#allocation7 + $0x6fc] sm:$0xff]
      %v1047 = vld [vmem:[#allocation7 + $0x704] sm:$0xf]
      %v1048 = vld [vmem:[#allocation7 + $0x708] sm:$0xff]
      %v1049 = vld [vmem:[#allocation7 + $0x710] sm:$0xff]
      %v1050 = vld [vmem:[#allocation7 + $0x718] sm:$0xf]
      %v1051 = vld [vmem:[#allocation7 + $0x71c] sm:$0xff]
      %v1052 = vld [vmem:[#allocation7 + $0x724] sm:$0xff]
      %v1053 = vld [vmem:[#allocation7 + $0x72c] sm:$0xf]
      %v1054 = vld [vmem:[#allocation7 + $0x730] sm:$0xff]
      %v1055 = vld [vmem:[#allocation7 + $0x738] sm:$0xff]
      %v1056 = vld [vmem:[#allocation7 + $0x740] sm:$0xf]
      %v1057 = vld [vmem:[#allocation7 + $0x744] sm:$0xff]
      %v1058 = vld [vmem:[#allocation7 + $0x74c] sm:$0xff]
      %v1059 = vld [vmem:[#allocation7 + $0x754] sm:$0xf]
      %v1060 = vld [vmem:[#allocation7 + $0x758] sm:$0xff]
      %v1061 = vld [vmem:[#allocation7 + $0x760] sm:$0xff]
      %v1062 = vld [vmem:[#allocation7 + $0x768] sm:$0xf]
      %v1063 = vld [vmem:[#allocation7 + $0x76c] sm:$0xff]
      %v1064 = vld [vmem:[#allocation7 + $0x774] sm:$0xff]
      %v1065 = vld [vmem:[#allocation7 + $0x77c] sm:$0xf]
      %v1066 = vld [vmem:[#allocation7 + $0x780] sm:$0xff]
      %v1067 = vld [vmem:[#allocation7 + $0x788] sm:$0xff]
      %v1068 = vld [vmem:[#allocation7 + $0x790] sm:$0xf]
      %v1069 = vld [vmem:[#allocation7 + $0x794] sm:$0xff]
      %v1070 = vld [vmem:[#allocation7 + $0x79c] sm:$0xff]
      %v1071 = vld [vmem:[#allocation7 + $0x7a4] sm:$0xf]
      %v1072 = vld [vmem:[#allocation7 + $0x7a8] sm:$0xff]
      %v1073 = vld [vmem:[#allocation7 + $0x7b0] sm:$0xff]
      %v1074 = vld [vmem:[#allocation7 + $0x7b8] sm:$0xf]
      %v1075 = vld [vmem:[#allocation7 + $0x7bc] sm:$0xff]
      %v1076 = vld [vmem:[#allocation7 + $0x7c4] sm:$0xff]
      %v1077 = vld [vmem:[#allocation7 + $0x7cc] sm:$0xf]
      %v1078 = vld [vmem:[#allocation7 + $0x7d0] sm:$0xff]
      %v1079 = vld [vmem:[#allocation7 + $0x7d8] sm:$0xff]
      %v1080 = vld [vmem:[#allocation7 + $0x7e0] sm:$0xf]
      %v1081 = vld [vmem:[#allocation7 + $0x7e4] sm:$0xff]
      %v1082 = vld [vmem:[#allocation7 + $0x7ec] sm:$0xff]
      %v1083 = vld [vmem:[#allocation7 + $0x7f4] sm:$0xf]
      %v1084 = vld [vmem:[#allocation7 + $0x7f8] sm:$0xff]
      %v1085 = vld [vmem:[#allocation7 + $0x800] sm:$0xff]
      %v1086 = vld [vmem:[#allocation7 + $0x808] sm:$0xf]
      %v1087 = vld [vmem:[#allocation7 + $0x80c] sm:$0xff]
      %v1088 = vld [vmem:[#allocation7 + $0x814] sm:$0xff]
      %v1089 = vld [vmem:[#allocation7 + $0x81c] sm:$0xf]
      %v1090 = vld [vmem:[#allocation7 + $0x820] sm:$0xff]
      %v1091 = vld [vmem:[#allocation7 + $0x828] sm:$0xff]
      %v1092 = vld [vmem:[#allocation7 + $0x830] sm:$0xf]
      %v1093 = vld [vmem:[#allocation7 + $0x834] sm:$0xff]
      %v1094 = vld [vmem:[#allocation7 + $0x83c] sm:$0xff]
      %v1095 = vld [vmem:[#allocation7 + $0x844] sm:$0xf]
      %v1096 = vld [vmem:[#allocation7 + $0x848] sm:$0xff]
      %v1097 = vld [vmem:[#allocation7 + $0x850] sm:$0xff]
      %v1098 = vld [vmem:[#allocation7 + $0x858] sm:$0xf]
      %v1099 = vld [vmem:[#allocation7 + $0x85c] sm:$0xff]
      %v1100 = vld [vmem:[#allocation7 + $0x864] sm:$0xff]
      %v1101 = vld [vmem:[#allocation7 + $0x86c] sm:$0xf]
      %v1102 = vld [vmem:[#allocation7 + $0x870] sm:$0xff]
      %v1103 = vld [vmem:[#allocation7 + $0x878] sm:$0xff]
      %v1104 = vld [vmem:[#allocation7 + $0x880] sm:$0xf]
      %v1105 = vld [vmem:[#allocation7 + $0x884] sm:$0xff]
      %v1106 = vld [vmem:[#allocation7 + $0x88c] sm:$0xff]
      %v1107 = vld [vmem:[#allocation7 + $0x894] sm:$0xf]
      %v1108 = vld [vmem:[#allocation7 + $0x898] sm:$0xff]
      %v1109 = vld [vmem:[#allocation7 + $0x8a0] sm:$0xff]
      %v1110 = vld [vmem:[#allocation7 + $0x8a8] sm:$0xf]
      %v1111 = vld [vmem:[#allocation7 + $0x8ac] sm:$0xff]
      %v1112 = vld [vmem:[#allocation7 + $0x8b4] sm:$0xff]
      %v1113 = vld [vmem:[#allocation7 + $0x8bc] sm:$0xf]
      %v1114 = vld [vmem:[#allocation7 + $0x8c0] sm:$0xff]
      %v1115 = vld [vmem:[#allocation7 + $0x8c8] sm:$0xff]
      %v1116 = vld [vmem:[#allocation7 + $0x8d0] sm:$0xf]
      %v1117 = vld [vmem:[#allocation7 + $0x8d4] sm:$0xff]
      %v1118 = vld [vmem:[#allocation7 + $0x8dc] sm:$0xff]
      %v1119 = vld [vmem:[#allocation7 + $0x8e4] sm:$0xf]
      %v1120 = vld [vmem:[#allocation7 + $0x8e8] sm:$0xff]
      %v1121 = vld [vmem:[#allocation7 + $0x8f0] sm:$0xff]
      %v1122 = vld [vmem:[#allocation7 + $0x8f8] sm:$0xf]
      %v1123 = vld [vmem:[#allocation7 + $0x8fc] sm:$0xff]
      %v1124 = vld [vmem:[#allocation7 + $0x904] sm:$0xff]
      %v1125 = vld [vmem:[#allocation7 + $0x90c] sm:$0xf]
      %v1126 = vld [vmem:[#allocation7 + $0x910] sm:$0xff]
      %v1127 = vld [vmem:[#allocation7 + $0x918] sm:$0xff]
      %v1128 = vld [vmem:[#allocation7 + $0x920] sm:$0xf]
      %v1129 = vld [vmem:[#allocation7 + $0x924] sm:$0xff]
      %v1130 = vld [vmem:[#allocation7 + $0x92c] sm:$0xff]
      %v1131 = vld [vmem:[#allocation7 + $0x934] sm:$0xf]
      %v1132 = vld [vmem:[#allocation7 + $0x938] sm:$0xff]
      %v1133 = vld [vmem:[#allocation7 + $0x940] sm:$0xff]
      %v1134 = vld [vmem:[#allocation7 + $0x948] sm:$0xf]
      %v1135 = vld [vmem:[#allocation7 + $0x94c] sm:$0xff]
      %v1136 = vld [vmem:[#allocation7 + $0x954] sm:$0xff]
      %v1137 = vld [vmem:[#allocation7 + $0x95c] sm:$0xf]
      %v1138 = vld [vmem:[#allocation7 + $0x960] sm:$0xff]
      %v1139 = vld [vmem:[#allocation7 + $0x968] sm:$0xff]
      %v1140 = vld [vmem:[#allocation7 + $0x970] sm:$0xf]
      %v1141 = vld [vmem:[#allocation7 + $0x974] sm:$0xff]
      %v1142 = vld [vmem:[#allocation7 + $0x97c] sm:$0xff]
      %v1143 = vld [vmem:[#allocation7 + $0x984] sm:$0xf]
      %v1144 = vld [vmem:[#allocation7 + $0x988] sm:$0xff]
      %v1145 = vld [vmem:[#allocation7 + $0x990] sm:$0xff]
      %v1146 = vld [vmem:[#allocation7 + $0x998] sm:$0xf]
      %v1147 = vld [vmem:[#allocation7 + $0x99c] sm:$0xff]
      %v1148 = vld [vmem:[#allocation7 + $0x9a4] sm:$0xff]
      %v1149 = vld [vmem:[#allocation7 + $0x9ac] sm:$0xf]
      %v1150 = vld [vmem:[#allocation7 + $0x9b0] sm:$0xff]
      %v1151 = vld [vmem:[#allocation7 + $0x9b8] sm:$0xff]
      %v1152 = vld [vmem:[#allocation7 + $0x9c0] sm:$0xf]
      %v1153 = vld [vmem:[#allocation7 + $0x9c4] sm:$0xff]
      %v1154 = vld [vmem:[#allocation7 + $0x9cc] sm:$0xff]
      %v1155 = vld [vmem:[#allocation7 + $0x9d4] sm:$0xf]
      %v1156 = vld [vmem:[#allocation7 + $0x9d8] sm:$0xff]
      %v1157 = vld [vmem:[#allocation7 + $0x9e0] sm:$0xff]
      %v1158 = vld [vmem:[#allocation7 + $0x9e8] sm:$0xf]
      %v1159 = vld [vmem:[#allocation7 + $0x9ec] sm:$0xff]
      %v1160 = vld [vmem:[#allocation7 + $0x9f4] sm:$0xff]
      %v1161 = vld [vmem:[#allocation7 + $0x9fc] sm:$0xf]
      %v1162 = vlaneseq
      %v1163 = vshrl.u32 %v1162, 7
      %v1164 = vsub.s32 1, %v1163
      %v1165 = vrot.slane %v690, %v1164
      %v1166 = vlaneseq
      %v1167 = vshrl.u32 %v1166, 7
      %v1168 = vsub.s32 1, %v1167
      %v1169 = vrot.slane %v691, %v1168
      %v1170 = vlaneseq
      %v1171 = vshrl.u32 %v1170, 7
      %v1172 = vsub.s32 1, %v1171
      %v1173 = vrot.slane %v692, %v1172
      %v1174 = vlaneseq
      %v1175 = vshrl.u32 %v1174, 7
      %v1176 = vsub.s32 1, %v1175
      %v1177 = vrot.slane %v693, %v1176
      %v1178 = vlaneseq
      %v1179 = vshrl.u32 %v1178, 7
      %v1180 = vsub.s32 1, %v1179
      %v1181 = vrot.slane %v694, %v1180
      %v1566 = vunpack.c.l.b16 %v778
      %v1567 = vunpack.c.h.b16 %v778
      %v1568 = vunpack.c.l.b16 %v779
      %v1569 = vunpack.c.h.b16 %v779
      %v1570 = vunpack.c.l.b16 %v780
      %v1571 = vunpack.c.l.b16 %v781
      %v1572 = vunpack.c.h.b16 %v781
      %v1573 = vunpack.c.l.b16 %v782
      %v1574 = vunpack.c.h.b16 %v782
      %v1575 = vunpack.c.l.b16 %v783
      %v1576 = vunpack.c.l.b16 %v784
      %v1577 = vunpack.c.h.b16 %v784
      %v1578 = vunpack.c.l.b16 %v785
      %v1579 = vunpack.c.h.b16 %v785
      %v1580 = vunpack.c.l.b16 %v786
      %v1581 = vunpack.c.l.b16 %v787
      %v1582 = vunpack.c.h.b16 %v787
      %v1583 = vunpack.c.l.b16 %v788
      %v1584 = vunpack.c.h.b16 %v788
      %v1585 = vunpack.c.l.b16 %v789
      %v1586 = vunpack.c.l.b16 %v790
      %v1587 = vunpack.c.h.b16 %v790
      %v1588 = vunpack.c.l.b16 %v791
      %v1589 = vunpack.c.h.b16 %v791
      %v1590 = vunpack.c.l.b16 %v792
      %v1591 = vunpack.c.l.b16 %v793
      %v1592 = vunpack.c.h.b16 %v793
      %v1593 = vunpack.c.l.b16 %v794
      %v1594 = vunpack.c.h.b16 %v794
      %v1595 = vunpack.c.l.b16 %v795
      %v1596 = vunpack.c.l.b16 %v796
      %v1597 = vunpack.c.h.b16 %v796
      %v1598 = vunpack.c.l.b16 %v797
      %v1599 = vunpack.c.h.b16 %v797
      %v1600 = vunpack.c.l.b16 %v798
      %v1601 = vunpack.c.l.b16 %v799
      %v1602 = vunpack.c.h.b16 %v799
      %v1603 = vunpack.c.l.b16 %v800
      %v1604 = vunpack.c.h.b16 %v800
      %v1605 = vunpack.c.l.b16 %v801
      %v1606 = vunpack.c.l.b16 %v802
      %v1607 = vunpack.c.h.b16 %v802
      %v1608 = vunpack.c.l.b16 %v803
      %v1609 = vunpack.c.h.b16 %v803
      %v1610 = vunpack.c.l.b16 %v804
      %v1611 = vunpack.c.l.b16 %v805
      %v1612 = vunpack.c.h.b16 %v805
      %v1613 = vunpack.c.l.b16 %v806
      %v1614 = vunpack.c.h.b16 %v806
      %v1615 = vunpack.c.l.b16 %v807
      %v1616 = vunpack.c.l.b16 %v808
      %v1617 = vunpack.c.h.b16 %v808
      %v1618 = vunpack.c.l.b16 %v809
      %v1619 = vunpack.c.h.b16 %v809
      %v1620 = vunpack.c.l.b16 %v810
      %v1621 = vunpack.c.l.b16 %v811
      %v1622 = vunpack.c.h.b16 %v811
      %v1623 = vunpack.c.l.b16 %v812
      %v1624 = vunpack.c.h.b16 %v812
      %v1625 = vunpack.c.l.b16 %v813
      %v1626 = vunpack.c.l.b16 %v814
      %v1627 = vunpack.c.h.b16 %v814
      %v1628 = vunpack.c.l.b16 %v815
      %v1629 = vunpack.c.h.b16 %v815
      %v1630 = vunpack.c.l.b16 %v816
      %v1631 = vunpack.c.l.b16 %v817
      %v1632 = vunpack.c.h.b16 %v817
      %v1633 = vunpack.c.l.b16 %v818
      %v1634 = vunpack.c.h.b16 %v818
      %v1635 = vunpack.c.l.b16 %v819
      %v1636 = vunpack.c.l.b16 %v820
      %v1637 = vunpack.c.h.b16 %v820
      %v1638 = vunpack.c.l.b16 %v821
      %v1639 = vunpack.c.h.b16 %v821
      %v1640 = vunpack.c.l.b16 %v822
      %v1641 = vunpack.c.l.b16 %v823
      %v1642 = vunpack.c.h.b16 %v823
      %v1643 = vunpack.c.l.b16 %v824
      %v1644 = vunpack.c.h.b16 %v824
      %v1645 = vunpack.c.l.b16 %v825
      %v1646 = vunpack.c.l.b16 %v826
      %v1647 = vunpack.c.h.b16 %v826
      %v1648 = vunpack.c.l.b16 %v827
      %v1649 = vunpack.c.h.b16 %v827
      %v1650 = vunpack.c.l.b16 %v828
      %v1651 = vunpack.c.l.b16 %v829
      %v1652 = vunpack.c.h.b16 %v829
      %v1653 = vunpack.c.l.b16 %v830
      %v1654 = vunpack.c.h.b16 %v830
      %v1655 = vunpack.c.l.b16 %v831
      %v1656 = vunpack.c.l.b16 %v832
      %v1657 = vunpack.c.h.b16 %v832
      %v1658 = vunpack.c.l.b16 %v833
      %v1659 = vunpack.c.h.b16 %v833
      %v1660 = vunpack.c.l.b16 %v834
      %v1661 = vunpack.c.l.b16 %v835
      %v1662 = vunpack.c.h.b16 %v835
      %v1663 = vunpack.c.l.b16 %v836
      %v1664 = vunpack.c.h.b16 %v836
      %v1665 = vunpack.c.l.b16 %v837
      %v1666 = vunpack.c.l.b16 %v838
      %v1667 = vunpack.c.h.b16 %v838
      %v1668 = vunpack.c.l.b16 %v839
      %v1669 = vunpack.c.h.b16 %v839
      %v1670 = vunpack.c.l.b16 %v840
      %v1671 = vunpack.c.l.b16 %v841
      %v1672 = vunpack.c.h.b16 %v841
      %v1673 = vunpack.c.l.b16 %v842
      %v1674 = vunpack.c.h.b16 %v842
      %v1675 = vunpack.c.l.b16 %v843
      %v1676 = vunpack.c.l.b16 %v844
      %v1677 = vunpack.c.h.b16 %v844
      %v1678 = vunpack.c.l.b16 %v845
      %v1679 = vunpack.c.h.b16 %v845
      %v1680 = vunpack.c.l.b16 %v846
      %v1681 = vunpack.c.l.b16 %v847
      %v1682 = vunpack.c.h.b16 %v847
      %v1683 = vunpack.c.l.b16 %v848
      %v1684 = vunpack.c.h.b16 %v848
      %v1685 = vunpack.c.l.b16 %v849
      %v1686 = vunpack.c.l.b16 %v850
      %v1687 = vunpack.c.h.b16 %v850
      %v1688 = vunpack.c.l.b16 %v851
      %v1689 = vunpack.c.h.b16 %v851
      %v1690 = vunpack.c.l.b16 %v852
      %v1691 = vunpack.c.l.b16 %v853
      %v1692 = vunpack.c.h.b16 %v853
      %v1693 = vunpack.c.l.b16 %v854
      %v1694 = vunpack.c.h.b16 %v854
      %v1695 = vunpack.c.l.b16 %v855
      %v1696 = vunpack.c.l.b16 %v856
      %v1697 = vunpack.c.h.b16 %v856
      %v1698 = vunpack.c.l.b16 %v857
      %v1699 = vunpack.c.h.b16 %v857
      %v1700 = vunpack.c.l.b16 %v858
      %v1701 = vunpack.c.l.b16 %v859
      %v1702 = vunpack.c.h.b16 %v859
      %v1703 = vunpack.c.l.b16 %v860
      %v1704 = vunpack.c.h.b16 %v860
      %v1705 = vunpack.c.l.b16 %v861
      %v1706 = vunpack.c.l.b16 %v862
      %v1707 = vunpack.c.h.b16 %v862
      %v1708 = vunpack.c.l.b16 %v863
      %v1709 = vunpack.c.h.b16 %v863
      %v1710 = vunpack.c.l.b16 %v864
      %v1711 = vunpack.c.l.b16 %v865
      %v1712 = vunpack.c.h.b16 %v865
      %v1713 = vunpack.c.l.b16 %v866
      %v1714 = vunpack.c.h.b16 %v866
      %v1715 = vunpack.c.l.b16 %v867
      %v1716 = vunpack.c.l.b16 %v868
      %v1717 = vunpack.c.h.b16 %v868
      %v1718 = vunpack.c.l.b16 %v869
      %v1719 = vunpack.c.h.b16 %v869
      %v1720 = vunpack.c.l.b16 %v870
      %v1721 = vunpack.c.l.b16 %v871
      %v1722 = vunpack.c.h.b16 %v871
      %v1723 = vunpack.c.l.b16 %v872
      %v1724 = vunpack.c.h.b16 %v872
      %v1725 = vunpack.c.l.b16 %v873
      %v1726 = vunpack.c.l.b16 %v874
      %v1727 = vunpack.c.h.b16 %v874
      %v1728 = vunpack.c.l.b16 %v875
      %v1729 = vunpack.c.h.b16 %v875
      %v1730 = vunpack.c.l.b16 %v876
      %v1731 = vunpack.c.l.b16 %v877
      %v1732 = vunpack.c.h.b16 %v877
      %v1733 = vunpack.c.l.b16 %v878
      %v1734 = vunpack.c.h.b16 %v878
      %v1735 = vunpack.c.l.b16 %v879
      %v1736 = vunpack.c.l.b16 %v880
      %v1737 = vunpack.c.h.b16 %v880
      %v1738 = vunpack.c.l.b16 %v881
      %v1739 = vunpack.c.h.b16 %v881
      %v1740 = vunpack.c.l.b16 %v882
      %v1741 = vunpack.c.l.b16 %v883
      %v1742 = vunpack.c.h.b16 %v883
      %v1743 = vunpack.c.l.b16 %v884
      %v1744 = vunpack.c.h.b16 %v884
      %v1745 = vunpack.c.l.b16 %v885
      %v1746 = vunpack.c.l.b16 %v886
      %v1747 = vunpack.c.h.b16 %v886
      %v1748 = vunpack.c.l.b16 %v887
      %v1749 = vunpack.c.h.b16 %v887
      %v1750 = vunpack.c.l.b16 %v888
      %v1751 = vunpack.c.l.b16 %v889
      %v1752 = vunpack.c.h.b16 %v889
      %v1753 = vunpack.c.l.b16 %v890
      %v1754 = vunpack.c.h.b16 %v890
      %v1755 = vunpack.c.l.b16 %v891
      %v1756 = vunpack.c.l.b16 %v892
      %v1757 = vunpack.c.h.b16 %v892
      %v1758 = vunpack.c.l.b16 %v893
      %v1759 = vunpack.c.h.b16 %v893
      %v1760 = vunpack.c.l.b16 %v894
      %v1761 = vunpack.c.l.b16 %v895
      %v1762 = vunpack.c.h.b16 %v895
      %v1763 = vunpack.c.l.b16 %v896
      %v1764 = vunpack.c.h.b16 %v896
      %v1765 = vunpack.c.l.b16 %v897
      %v1766 = vunpack.c.l.b16 %v898
      %v1767 = vunpack.c.h.b16 %v898
      %v1768 = vunpack.c.l.b16 %v899
      %v1769 = vunpack.c.h.b16 %v899
      %v1770 = vunpack.c.l.b16 %v900
      %v1771 = vunpack.c.l.b16 %v901
      %v1772 = vunpack.c.h.b16 %v901
      %v1773 = vunpack.c.l.b16 %v902
      %v1774 = vunpack.c.h.b16 %v902
      %v1775 = vunpack.c.l.b16 %v903
      %v1776 = vunpack.c.l.b16 %v904
      %v1777 = vunpack.c.h.b16 %v904
      %v1778 = vunpack.c.l.b16 %v905
      %v1779 = vunpack.c.h.b16 %v905
      %v1780 = vunpack.c.l.b16 %v906
      %v1781 = vunpack.c.l.b16 %v907
      %v1782 = vunpack.c.h.b16 %v907
      %v1783 = vunpack.c.l.b16 %v908
      %v1784 = vunpack.c.h.b16 %v908
      %v1785 = vunpack.c.l.b16 %v909
      %v1786 = vunpack.c.l.b16 %v910
      %v1787 = vunpack.c.h.b16 %v910
      %v1788 = vunpack.c.l.b16 %v911
      %v1789 = vunpack.c.h.b16 %v911
      %v1790 = vunpack.c.l.b16 %v912
      %v1791 = vunpack.c.l.b16 %v913
      %v1792 = vunpack.c.h.b16 %v913
      %v1793 = vunpack.c.l.b16 %v914
      %v1794 = vunpack.c.h.b16 %v914
      %v1795 = vunpack.c.l.b16 %v915
      %v1796 = vunpack.c.l.b16 %v916
      %v1797 = vunpack.c.h.b16 %v916
      %v1798 = vunpack.c.l.b16 %v917
      %v1799 = vunpack.c.h.b16 %v917
      %v1800 = vunpack.c.l.b16 %v918
      %v1801 = vunpack.c.l.b16 %v919
      %v1802 = vunpack.c.h.b16 %v919
      %v1803 = vunpack.c.l.b16 %v920
      %v1804 = vunpack.c.h.b16 %v920
      %v1805 = vunpack.c.l.b16 %v921
      %v1806 = vunpack.c.l.b16 %v922
      %v1807 = vunpack.c.h.b16 %v922
      %v1808 = vunpack.c.l.b16 %v923
      %v1809 = vunpack.c.h.b16 %v923
      %v1810 = vunpack.c.l.b16 %v924
      %v1811 = vunpack.c.l.b16 %v925
      %v1812 = vunpack.c.h.b16 %v925
      %v1813 = vunpack.c.l.b16 %v926
      %v1814 = vunpack.c.h.b16 %v926
      %v1815 = vunpack.c.l.b16 %v927
      %v1816 = vunpack.c.l.b16 %v928
      %v1817 = vunpack.c.h.b16 %v928
      %v1818 = vunpack.c.l.b16 %v929
      %v1819 = vunpack.c.h.b16 %v929
      %v1820 = vunpack.c.l.b16 %v930
      %v1821 = vunpack.c.l.b16 %v931
      %v1822 = vunpack.c.h.b16 %v931
      %v1823 = vunpack.c.l.b16 %v932
      %v1824 = vunpack.c.h.b16 %v932
      %v1825 = vunpack.c.l.b16 %v933
      %v1826 = vunpack.c.l.b16 %v934
      %v1827 = vunpack.c.h.b16 %v934
      %v1828 = vunpack.c.l.b16 %v935
      %v1829 = vunpack.c.h.b16 %v935
      %v1830 = vunpack.c.l.b16 %v936
      %v1831 = vunpack.c.l.b16 %v937
      %v1832 = vunpack.c.h.b16 %v937
      %v1833 = vunpack.c.l.b16 %v938
      %v1834 = vunpack.c.h.b16 %v938
      %v1835 = vunpack.c.l.b16 %v939
      %v1836 = vunpack.c.l.b16 %v940
      %v1837 = vunpack.c.h.b16 %v940
      %v1838 = vunpack.c.l.b16 %v941
      %v1839 = vunpack.c.h.b16 %v941
      %v1840 = vunpack.c.l.b16 %v942
      %v1841 = vunpack.c.l.b16 %v943
      %v1842 = vunpack.c.h.b16 %v943
      %v1843 = vunpack.c.l.b16 %v944
      %v1844 = vunpack.c.h.b16 %v944
      %v1845 = vunpack.c.l.b16 %v945
      %v1846 = vunpack.c.l.b16 %v946
      %v1847 = vunpack.c.h.b16 %v946
      %v1848 = vunpack.c.l.b16 %v947
      %v1849 = vunpack.c.h.b16 %v947
      %v1850 = vunpack.c.l.b16 %v948
      %v1851 = vunpack.c.l.b16 %v949
      %v1852 = vunpack.c.h.b16 %v949
      %v1853 = vunpack.c.l.b16 %v950
      %v1854 = vunpack.c.h.b16 %v950
      %v1855 = vunpack.c.l.b16 %v951
      %v1856 = vunpack.c.l.b16 %v952
      %v1857 = vunpack.c.h.b16 %v952
      %v1858 = vunpack.c.l.b16 %v953
      %v1859 = vunpack.c.h.b16 %v953
      %v1860 = vunpack.c.l.b16 %v954
      %v1861 = vunpack.c.l.b16 %v955
      %v1862 = vunpack.c.h.b16 %v955
      %v1863 = vunpack.c.l.b16 %v956
      %v1864 = vunpack.c.h.b16 %v956
      %v1865 = vunpack.c.l.b16 %v957
      %v1866 = vunpack.c.l.b16 %v958
      %v1867 = vunpack.c.h.b16 %v958
      %v1868 = vunpack.c.l.b16 %v959
      %v1869 = vunpack.c.h.b16 %v959
      %v1870 = vunpack.c.l.b16 %v960
      %v1871 = vunpack.c.l.b16 %v961
      %v1872 = vunpack.c.h.b16 %v961
      %v1873 = vunpack.c.l.b16 %v962
      %v1874 = vunpack.c.h.b16 %v962
      %v1875 = vunpack.c.l.b16 %v963
      %v1876 = vunpack.c.l.b16 %v964
      %v1877 = vunpack.c.h.b16 %v964
      %v1878 = vunpack.c.l.b16 %v965
      %v1879 = vunpack.c.h.b16 %v965
      %v1880 = vunpack.c.l.b16 %v966
      %v1881 = vunpack.c.l.b16 %v967
      %v1882 = vunpack.c.h.b16 %v967
      %v1883 = vunpack.c.l.b16 %v968
      %v1884 = vunpack.c.h.b16 %v968
      %v1885 = vunpack.c.l.b16 %v969
      %v1886 = vunpack.c.l.b16 %v970
      %v1887 = vunpack.c.h.b16 %v970
      %v1888 = vunpack.c.l.b16 %v971
      %v1889 = vunpack.c.h.b16 %v971
      %v1890 = vunpack.c.l.b16 %v972
      %v1891 = vunpack.c.l.b16 %v973
      %v1892 = vunpack.c.h.b16 %v973
      %v1893 = vunpack.c.l.b16 %v974
      %v1894 = vunpack.c.h.b16 %v974
      %v1895 = vunpack.c.l.b16 %v975
      %v1896 = vunpack.c.l.b16 %v976
      %v1897 = vunpack.c.h.b16 %v976
      %v1898 = vunpack.c.l.b16 %v977
      %v1899 = vunpack.c.h.b16 %v977
      %v1900 = vunpack.c.l.b16 %v978
      %v1901 = vunpack.c.l.b16 %v979
      %v1902 = vunpack.c.h.b16 %v979
      %v1903 = vunpack.c.l.b16 %v980
      %v1904 = vunpack.c.h.b16 %v980
      %v1905 = vunpack.c.l.b16 %v981
      %v1906 = vunpack.c.l.b16 %v982
      %v1907 = vunpack.c.h.b16 %v982
      %v1908 = vunpack.c.l.b16 %v983
      %v1909 = vunpack.c.h.b16 %v983
      %v1910 = vunpack.c.l.b16 %v984
      %v1911 = vunpack.c.l.b16 %v985
      %v1912 = vunpack.c.h.b16 %v985
      %v1913 = vunpack.c.l.b16 %v986
      %v1914 = vunpack.c.h.b16 %v986
      %v1915 = vunpack.c.l.b16 %v987
      %v1916 = vunpack.c.l.b16 %v988
      %v1917 = vunpack.c.h.b16 %v988
      %v1918 = vunpack.c.l.b16 %v989
      %v1919 = vunpack.c.h.b16 %v989
      %v1920 = vunpack.c.l.b16 %v990
      %v1921 = vunpack.c.l.b16 %v991
      %v1922 = vunpack.c.h.b16 %v991
      %v1923 = vunpack.c.l.b16 %v992
      %v1924 = vunpack.c.h.b16 %v992
      %v1925 = vunpack.c.l.b16 %v993
      %v1926 = vunpack.c.l.b16 %v994
      %v1927 = vunpack.c.h.b16 %v994
      %v1928 = vunpack.c.l.b16 %v995
      %v1929 = vunpack.c.h.b16 %v995
      %v1930 = vunpack.c.l.b16 %v996
      %v1931 = vunpack.c.l.b16 %v997
      %v1932 = vunpack.c.h.b16 %v997
      %v1933 = vunpack.c.l.b16 %v998
      %v1934 = vunpack.c.h.b16 %v998
      %v1935 = vunpack.c.l.b16 %v999
      %v1936 = vunpack.c.l.b16 %v1000
      %v1937 = vunpack.c.h.b16 %v1000
      %v1938 = vunpack.c.l.b16 %v1001
      %v1939 = vunpack.c.h.b16 %v1001
      %v1940 = vunpack.c.l.b16 %v1002
      %v1941 = vunpack.c.l.b16 %v1003
      %v1942 = vunpack.c.h.b16 %v1003
      %v1943 = vunpack.c.l.b16 %v1004
      %v1944 = vunpack.c.h.b16 %v1004
      %v1945 = vunpack.c.l.b16 %v1005
      %v1946 = vunpack.c.l.b16 %v1006
      %v1947 = vunpack.c.h.b16 %v1006
      %v1948 = vunpack.c.l.b16 %v1007
      %v1949 = vunpack.c.h.b16 %v1007
      %v1950 = vunpack.c.l.b16 %v1008
      %v1951 = vunpack.c.l.b16 %v1009
      %v1952 = vunpack.c.h.b16 %v1009
      %v1953 = vunpack.c.l.b16 %v1010
      %v1954 = vunpack.c.h.b16 %v1010
      %v1955 = vunpack.c.l.b16 %v1011
      %v1956 = vunpack.c.l.b16 %v1012
      %v1957 = vunpack.c.h.b16 %v1012
      %v1958 = vunpack.c.l.b16 %v1013
      %v1959 = vunpack.c.h.b16 %v1013
      %v1960 = vunpack.c.l.b16 %v1014
      %v1961 = vunpack.c.l.b16 %v1015
      %v1962 = vunpack.c.h.b16 %v1015
      %v1963 = vunpack.c.l.b16 %v1016
      %v1964 = vunpack.c.h.b16 %v1016
      %v1965 = vunpack.c.l.b16 %v1017
      %v1966 = vunpack.c.l.b16 %v1018
      %v1967 = vunpack.c.h.b16 %v1018
      %v1968 = vunpack.c.l.b16 %v1019
      %v1969 = vunpack.c.h.b16 %v1019
      %v1970 = vunpack.c.l.b16 %v1020
      %v1971 = vunpack.c.l.b16 %v1021
      %v1972 = vunpack.c.h.b16 %v1021
      %v1973 = vunpack.c.l.b16 %v1022
      %v1974 = vunpack.c.h.b16 %v1022
      %v1975 = vunpack.c.l.b16 %v1023
      %v1976 = vunpack.c.l.b16 %v1024
      %v1977 = vunpack.c.h.b16 %v1024
      %v1978 = vunpack.c.l.b16 %v1025
      %v1979 = vunpack.c.h.b16 %v1025
      %v1980 = vunpack.c.l.b16 %v1026
      %v1981 = vunpack.c.l.b16 %v1027
      %v1982 = vunpack.c.h.b16 %v1027
      %v1983 = vunpack.c.l.b16 %v1028
      %v1984 = vunpack.c.h.b16 %v1028
      %v1985 = vunpack.c.l.b16 %v1029
      %v1986 = vunpack.c.l.b16 %v1030
      %v1987 = vunpack.c.h.b16 %v1030
      %v1988 = vunpack.c.l.b16 %v1031
      %v1989 = vunpack.c.h.b16 %v1031
      %v1990 = vunpack.c.l.b16 %v1032
      %v1991 = vunpack.c.l.b16 %v1033
      %v1992 = vunpack.c.h.b16 %v1033
      %v1993 = vunpack.c.l.b16 %v1034
      %v1994 = vunpack.c.h.b16 %v1034
      %v1995 = vunpack.c.l.b16 %v1035
      %v1996 = vunpack.c.l.b16 %v1036
      %v1997 = vunpack.c.h.b16 %v1036
      %v1998 = vunpack.c.l.b16 %v1037
      %v1999 = vunpack.c.h.b16 %v1037
      %v2000 = vunpack.c.l.b16 %v1038
      %v2001 = vunpack.c.l.b16 %v1039
      %v2002 = vunpack.c.h.b16 %v1039
      %v2003 = vunpack.c.l.b16 %v1040
      %v2004 = vunpack.c.h.b16 %v1040
      %v2005 = vunpack.c.l.b16 %v1041
      %v2006 = vunpack.c.l.b16 %v1042
      %v2007 = vunpack.c.h.b16 %v1042
      %v2008 = vunpack.c.l.b16 %v1043
      %v2009 = vunpack.c.h.b16 %v1043
      %v2010 = vunpack.c.l.b16 %v1044
      %v2011 = vunpack.c.l.b16 %v1045
      %v2012 = vunpack.c.h.b16 %v1045
      %v2013 = vunpack.c.l.b16 %v1046
      %v2014 = vunpack.c.h.b16 %v1046
      %v2015 = vunpack.c.l.b16 %v1047
      %v2016 = vunpack.c.l.b16 %v1048
      %v2017 = vunpack.c.h.b16 %v1048
      %v2018 = vunpack.c.l.b16 %v1049
      %v2019 = vunpack.c.h.b16 %v1049
      %v2020 = vunpack.c.l.b16 %v1050
      %v2021 = vunpack.c.l.b16 %v1051
      %v2022 = vunpack.c.h.b16 %v1051
      %v2023 = vunpack.c.l.b16 %v1052
      %v2024 = vunpack.c.h.b16 %v1052
      %v2025 = vunpack.c.l.b16 %v1053
      %v2026 = vunpack.c.l.b16 %v1054
      %v2027 = vunpack.c.h.b16 %v1054
      %v2028 = vunpack.c.l.b16 %v1055
      %v2029 = vunpack.c.h.b16 %v1055
      %v2030 = vunpack.c.l.b16 %v1056
      %v2031 = vunpack.c.l.b16 %v1057
      %v2032 = vunpack.c.h.b16 %v1057
      %v2033 = vunpack.c.l.b16 %v1058
      %v2034 = vunpack.c.h.b16 %v1058
      %v2035 = vunpack.c.l.b16 %v1059
      %v2036 = vunpack.c.l.b16 %v1060
      %v2037 = vunpack.c.h.b16 %v1060
      %v2038 = vunpack.c.l.b16 %v1061
      %v2039 = vunpack.c.h.b16 %v1061
      %v2040 = vunpack.c.l.b16 %v1062
      %v2041 = vunpack.c.l.b16 %v1063
      %v2042 = vunpack.c.h.b16 %v1063
      %v2043 = vunpack.c.l.b16 %v1064
      %v2044 = vunpack.c.h.b16 %v1064
      %v2045 = vunpack.c.l.b16 %v1065
      %v2046 = vunpack.c.l.b16 %v1066
      %v2047 = vunpack.c.h.b16 %v1066
      %v2048 = vunpack.c.l.b16 %v1067
      %v2049 = vunpack.c.h.b16 %v1067
      %v2050 = vunpack.c.l.b16 %v1068
      %v2051 = vunpack.c.l.b16 %v1069
      %v2052 = vunpack.c.h.b16 %v1069
      %v2053 = vunpack.c.l.b16 %v1070
      %v2054 = vunpack.c.h.b16 %v1070
      %v2055 = vunpack.c.l.b16 %v1071
      %v2056 = vunpack.c.l.b16 %v1072
      %v2057 = vunpack.c.h.b16 %v1072
      %v2058 = vunpack.c.l.b16 %v1073
      %v2059 = vunpack.c.h.b16 %v1073
      %v2060 = vunpack.c.l.b16 %v1074
      %v2061 = vunpack.c.l.b16 %v1075
      %v2062 = vunpack.c.h.b16 %v1075
      %v2063 = vunpack.c.l.b16 %v1076
      %v2064 = vunpack.c.h.b16 %v1076
      %v2065 = vunpack.c.l.b16 %v1077
      %v2066 = vunpack.c.l.b16 %v1078
      %v2067 = vunpack.c.h.b16 %v1078
      %v2068 = vunpack.c.l.b16 %v1079
      %v2069 = vunpack.c.h.b16 %v1079
      %v2070 = vunpack.c.l.b16 %v1080
      %v2071 = vunpack.c.l.b16 %v1081
      %v2072 = vunpack.c.h.b16 %v1081
      %v2073 = vunpack.c.l.b16 %v1082
      %v2074 = vunpack.c.h.b16 %v1082
      %v2075 = vunpack.c.l.b16 %v1083
      %v2076 = vunpack.c.l.b16 %v1084
      %v2077 = vunpack.c.h.b16 %v1084
      %v2078 = vunpack.c.l.b16 %v1085
      %v2079 = vunpack.c.h.b16 %v1085
      %v2080 = vunpack.c.l.b16 %v1086
      %v2081 = vunpack.c.l.b16 %v1087
      %v2082 = vunpack.c.h.b16 %v1087
      %v2083 = vunpack.c.l.b16 %v1088
      %v2084 = vunpack.c.h.b16 %v1088
      %v2085 = vunpack.c.l.b16 %v1089
      %v2086 = vunpack.c.l.b16 %v1090
      %v2087 = vunpack.c.h.b16 %v1090
      %v2088 = vunpack.c.l.b16 %v1091
      %v2089 = vunpack.c.h.b16 %v1091
      %v2090 = vunpack.c.l.b16 %v1092
      %v2091 = vunpack.c.l.b16 %v1093
      %v2092 = vunpack.c.h.b16 %v1093
      %v2093 = vunpack.c.l.b16 %v1094
      %v2094 = vunpack.c.h.b16 %v1094
      %v2095 = vunpack.c.l.b16 %v1095
      %v2096 = vunpack.c.l.b16 %v1096
      %v2097 = vunpack.c.h.b16 %v1096
      %v2098 = vunpack.c.l.b16 %v1097
      %v2099 = vunpack.c.h.b16 %v1097
      %v2100 = vunpack.c.l.b16 %v1098
      %v2101 = vunpack.c.l.b16 %v1099
      %v2102 = vunpack.c.h.b16 %v1099
      %v2103 = vunpack.c.l.b16 %v1100
      %v2104 = vunpack.c.h.b16 %v1100
      %v2105 = vunpack.c.l.b16 %v1101
      %v2106 = vunpack.c.l.b16 %v1102
      %v2107 = vunpack.c.h.b16 %v1102
      %v2108 = vunpack.c.l.b16 %v1103
      %v2109 = vunpack.c.h.b16 %v1103
      %v2110 = vunpack.c.l.b16 %v1104
      %v2111 = vunpack.c.l.b16 %v1105
      %v2112 = vunpack.c.h.b16 %v1105
      %v2113 = vunpack.c.l.b16 %v1106
      %v2114 = vunpack.c.h.b16 %v1106
      %v2115 = vunpack.c.l.b16 %v1107
      %v2116 = vunpack.c.l.b16 %v1108
      %v2117 = vunpack.c.h.b16 %v1108
      %v2118 = vunpack.c.l.b16 %v1109
      %v2119 = vunpack.c.h.b16 %v1109
      %v2120 = vunpack.c.l.b16 %v1110
      %v2121 = vunpack.c.l.b16 %v1111
      %v2122 = vunpack.c.h.b16 %v1111
      %v2123 = vunpack.c.l.b16 %v1112
      %v2124 = vunpack.c.h.b16 %v1112
      %v2125 = vunpack.c.l.b16 %v1113
      %v2126 = vunpack.c.l.b16 %v1114
      %v2127 = vunpack.c.h.b16 %v1114
      %v2128 = vunpack.c.l.b16 %v1115
      %v2129 = vunpack.c.h.b16 %v1115
      %v2130 = vunpack.c.l.b16 %v1116
      %v2131 = vunpack.c.l.b16 %v1117
      %v2132 = vunpack.c.h.b16 %v1117
      %v2133 = vunpack.c.l.b16 %v1118
      %v2134 = vunpack.c.h.b16 %v1118
      %v2135 = vunpack.c.l.b16 %v1119
      %v2136 = vunpack.c.l.b16 %v1120
      %v2137 = vunpack.c.h.b16 %v1120
      %v2138 = vunpack.c.l.b16 %v1121
      %v2139 = vunpack.c.h.b16 %v1121
      %v2140 = vunpack.c.l.b16 %v1122
      %v2141 = vunpack.c.l.b16 %v1123
      %v2142 = vunpack.c.h.b16 %v1123
      %v2143 = vunpack.c.l.b16 %v1124
      %v2144 = vunpack.c.h.b16 %v1124
      %v2145 = vunpack.c.l.b16 %v1125
      %v2146 = vunpack.c.l.b16 %v1126
      %v2147 = vunpack.c.h.b16 %v1126
      %v2148 = vunpack.c.l.b16 %v1127
      %v2149 = vunpack.c.h.b16 %v1127
      %v2150 = vunpack.c.l.b16 %v1128
      %v2151 = vunpack.c.l.b16 %v1129
      %v2152 = vunpack.c.h.b16 %v1129
      %v2153 = vunpack.c.l.b16 %v1130
      %v2154 = vunpack.c.h.b16 %v1130
      %v2155 = vunpack.c.l.b16 %v1131
      %v2156 = vunpack.c.l.b16 %v1132
      %v2157 = vunpack.c.h.b16 %v1132
      %v2158 = vunpack.c.l.b16 %v1133
      %v2159 = vunpack.c.h.b16 %v1133
      %v2160 = vunpack.c.l.b16 %v1134
      %v2161 = vunpack.c.l.b16 %v1135
      %v2162 = vunpack.c.h.b16 %v1135
      %v2163 = vunpack.c.l.b16 %v1136
      %v2164 = vunpack.c.h.b16 %v1136
      %v2165 = vunpack.c.l.b16 %v1137
      %v2166 = vunpack.c.l.b16 %v1138
      %v2167 = vunpack.c.h.b16 %v1138
      %v2168 = vunpack.c.l.b16 %v1139
      %v2169 = vunpack.c.h.b16 %v1139
      %v2170 = vunpack.c.l.b16 %v1140
      %v2171 = vunpack.c.l.b16 %v1141
      %v2172 = vunpack.c.h.b16 %v1141
      %v2173 = vunpack.c.l.b16 %v1142
      %v2174 = vunpack.c.h.b16 %v1142
      %v2175 = vunpack.c.l.b16 %v1143
      %v2176 = vunpack.c.l.b16 %v1144
      %v2177 = vunpack.c.h.b16 %v1144
      %v2178 = vunpack.c.l.b16 %v1145
      %v2179 = vunpack.c.h.b16 %v1145
      %v2180 = vunpack.c.l.b16 %v1146
      %v2181 = vunpack.c.l.b16 %v1147
      %v2182 = vunpack.c.h.b16 %v1147
      %v2183 = vunpack.c.l.b16 %v1148
      %v2184 = vunpack.c.h.b16 %v1148
      %v2185 = vunpack.c.l.b16 %v1149
      %v2186 = vunpack.c.l.b16 %v1150
      %v2187 = vunpack.c.h.b16 %v1150
      %v2188 = vunpack.c.l.b16 %v1151
      %v2189 = vunpack.c.h.b16 %v1151
      %v2190 = vunpack.c.l.b16 %v1152
      %v2191 = vunpack.c.l.b16 %v1153
      %v2192 = vunpack.c.h.b16 %v1153
      %v2193 = vunpack.c.l.b16 %v1154
      %v2194 = vunpack.c.h.b16 %v1154
      %v2195 = vunpack.c.l.b16 %v1155
      %v2196 = vunpack.c.l.b16 %v1156
      %v2197 = vunpack.c.h.b16 %v1156
      %v2198 = vunpack.c.l.b16 %v1157
      %v2199 = vunpack.c.h.b16 %v1157
      %v2200 = vunpack.c.l.b16 %v1158
      %v2201 = vunpack.c.l.b16 %v1159
      %v2202 = vunpack.c.h.b16 %v1159
      %v2203 = vunpack.c.l.b16 %v1160
      %v2204 = vunpack.c.h.b16 %v1160
      %v2205 = vunpack.c.l.b16 %v1161
      %v2206 = vpack.c.b16 %v1571, %v1566
      %v2207 = vpack.c.b16 %v1572, %v1567
      %v2208 = vpack.c.b16 %v1573, %v1568
      %v2209 = vpack.c.b16 %v1574, %v1569
      %v2210 = vpack.c.b16 %v1575, %v1570
      %v2211 = vpack.c.b16 %v1581, %v1576
      %v2212 = vpack.c.b16 %v1582, %v1577
      %v2213 = vpack.c.b16 %v1583, %v1578
      %v2214 = vpack.c.b16 %v1584, %v1579
      %v2215 = vpack.c.b16 %v1585, %v1580
      %v2216 = vpack.c.b16 %v1591, %v1586
      %v2217 = vpack.c.b16 %v1592, %v1587
      %v2218 = vpack.c.b16 %v1593, %v1588
      %v2219 = vpack.c.b16 %v1594, %v1589
      %v2220 = vpack.c.b16 %v1595, %v1590
      %v2221 = vpack.c.b16 %v1601, %v1596
      %v2222 = vpack.c.b16 %v1602, %v1597
      %v2223 = vpack.c.b16 %v1603, %v1598
      %v2224 = vpack.c.b16 %v1604, %v1599
      %v2225 = vpack.c.b16 %v1605, %v1600
      %v2226 = vpack.c.b16 %v1611, %v1606
      %v2227 = vpack.c.b16 %v1612, %v1607
      %v2228 = vpack.c.b16 %v1613, %v1608
      %v2229 = vpack.c.b16 %v1614, %v1609
      %v2230 = vpack.c.b16 %v1615, %v1610
      %v2231 = vpack.c.b16 %v1621, %v1616
      %v2232 = vpack.c.b16 %v1622, %v1617
      %v2233 = vpack.c.b16 %v1623, %v1618
      %v2234 = vpack.c.b16 %v1624, %v1619
      %v2235 = vpack.c.b16 %v1625, %v1620
      %v2236 = vpack.c.b16 %v1631, %v1626
      %v2237 = vpack.c.b16 %v1632, %v1627
      %v2238 = vpack.c.b16 %v1633, %v1628
      %v2239 = vpack.c.b16 %v1634, %v1629
      %v2240 = vpack.c.b16 %v1635, %v1630
      %v2241 = vpack.c.b16 %v1641, %v1636
      %v2242 = vpack.c.b16 %v1642, %v1637
      %v2243 = vpack.c.b16 %v1643, %v1638
      %v2244 = vpack.c.b16 %v1644, %v1639
      %v2245 = vpack.c.b16 %v1645, %v1640
      %v2246 = vpack.c.b16 %v1651, %v1646
      %v2247 = vpack.c.b16 %v1652, %v1647
      %v2248 = vpack.c.b16 %v1653, %v1648
      %v2249 = vpack.c.b16 %v1654, %v1649
      %v2250 = vpack.c.b16 %v1655, %v1650
      %v2251 = vpack.c.b16 %v1661, %v1656
      %v2252 = vpack.c.b16 %v1662, %v1657
      %v2253 = vpack.c.b16 %v1663, %v1658
      %v2254 = vpack.c.b16 %v1664, %v1659
      %v2255 = vpack.c.b16 %v1665, %v1660
      %v2256 = vpack.c.b16 %v1671, %v1666
      %v2257 = vpack.c.b16 %v1672, %v1667
      %v2258 = vpack.c.b16 %v1673, %v1668
      %v2259 = vpack.c.b16 %v1674, %v1669
      %v2260 = vpack.c.b16 %v1675, %v1670
      %v2261 = vpack.c.b16 %v1681, %v1676
      %v2262 = vpack.c.b16 %v1682, %v1677
      %v2263 = vpack.c.b16 %v1683, %v1678
      %v2264 = vpack.c.b16 %v1684, %v1679
      %v2265 = vpack.c.b16 %v1685, %v1680
      %v2266 = vpack.c.b16 %v1691, %v1686
      %v2267 = vpack.c.b16 %v1692, %v1687
      %v2268 = vpack.c.b16 %v1693, %v1688
      %v2269 = vpack.c.b16 %v1694, %v1689
      %v2270 = vpack.c.b16 %v1695, %v1690
      %v2271 = vpack.c.b16 %v1701, %v1696
      %v2272 = vpack.c.b16 %v1702, %v1697
      %v2273 = vpack.c.b16 %v1703, %v1698
      %v2274 = vpack.c.b16 %v1704, %v1699
      %v2275 = vpack.c.b16 %v1705, %v1700
      %v2276 = vpack.c.b16 %v1711, %v1706
      %v2277 = vpack.c.b16 %v1712, %v1707
      %v2278 = vpack.c.b16 %v1713, %v1708
      %v2279 = vpack.c.b16 %v1714, %v1709
      %v2280 = vpack.c.b16 %v1715, %v1710
      %v2281 = vpack.c.b16 %v1721, %v1716
      %v2282 = vpack.c.b16 %v1722, %v1717
      %v2283 = vpack.c.b16 %v1723, %v1718
      %v2284 = vpack.c.b16 %v1724, %v1719
      %v2285 = vpack.c.b16 %v1725, %v1720
      %v2286 = vpack.c.b16 %v1731, %v1726
      %v2287 = vpack.c.b16 %v1732, %v1727
      %v2288 = vpack.c.b16 %v1733, %v1728
      %v2289 = vpack.c.b16 %v1734, %v1729
      %v2290 = vpack.c.b16 %v1735, %v1730
      %v2291 = vpack.c.b16 %v1741, %v1736
      %v2292 = vpack.c.b16 %v1742, %v1737
      %v2293 = vpack.c.b16 %v1743, %v1738
      %v2294 = vpack.c.b16 %v1744, %v1739
      %v2295 = vpack.c.b16 %v1745, %v1740
      %v2296 = vpack.c.b16 %v1751, %v1746
      %v2297 = vpack.c.b16 %v1752, %v1747
      %v2298 = vpack.c.b16 %v1753, %v1748
      %v2299 = vpack.c.b16 %v1754, %v1749
      %v2300 = vpack.c.b16 %v1755, %v1750
      %v2301 = vpack.c.b16 %v1761, %v1756
      %v2302 = vpack.c.b16 %v1762, %v1757
      %v2303 = vpack.c.b16 %v1763, %v1758
      %v2304 = vpack.c.b16 %v1764, %v1759
      %v2305 = vpack.c.b16 %v1765, %v1760
      %v2306 = vpack.c.b16 %v1771, %v1766
      %v2307 = vpack.c.b16 %v1772, %v1767
      %v2308 = vpack.c.b16 %v1773, %v1768
      %v2309 = vpack.c.b16 %v1774, %v1769
      %v2310 = vpack.c.b16 %v1775, %v1770
      %v2311 = vpack.c.b16 %v1781, %v1776
      %v2312 = vpack.c.b16 %v1782, %v1777
      %v2313 = vpack.c.b16 %v1783, %v1778
      %v2314 = vpack.c.b16 %v1784, %v1779
      %v2315 = vpack.c.b16 %v1785, %v1780
      %v2316 = vpack.c.b16 %v1791, %v1786
      %v2317 = vpack.c.b16 %v1792, %v1787
      %v2318 = vpack.c.b16 %v1793, %v1788
      %v2319 = vpack.c.b16 %v1794, %v1789
      %v2320 = vpack.c.b16 %v1795, %v1790
      %v2321 = vpack.c.b16 %v1801, %v1796
      %v2322 = vpack.c.b16 %v1802, %v1797
      %v2323 = vpack.c.b16 %v1803, %v1798
      %v2324 = vpack.c.b16 %v1804, %v1799
      %v2325 = vpack.c.b16 %v1805, %v1800
      %v2326 = vpack.c.b16 %v1811, %v1806
      %v2327 = vpack.c.b16 %v1812, %v1807
      %v2328 = vpack.c.b16 %v1813, %v1808
      %v2329 = vpack.c.b16 %v1814, %v1809
      %v2330 = vpack.c.b16 %v1815, %v1810
      %v2331 = vpack.c.b16 %v1821, %v1816
      %v2332 = vpack.c.b16 %v1822, %v1817
      %v2333 = vpack.c.b16 %v1823, %v1818
      %v2334 = vpack.c.b16 %v1824, %v1819
      %v2335 = vpack.c.b16 %v1825, %v1820
      %v2336 = vpack.c.b16 %v1831, %v1826
      %v2337 = vpack.c.b16 %v1832, %v1827
      %v2338 = vpack.c.b16 %v1833, %v1828
      %v2339 = vpack.c.b16 %v1834, %v1829
      %v2340 = vpack.c.b16 %v1835, %v1830
      %v2341 = vpack.c.b16 %v1841, %v1836
      %v2342 = vpack.c.b16 %v1842, %v1837
      %v2343 = vpack.c.b16 %v1843, %v1838
      %v2344 = vpack.c.b16 %v1844, %v1839
      %v2345 = vpack.c.b16 %v1845, %v1840
      %v2346 = vpack.c.b16 %v1851, %v1846
      %v2347 = vpack.c.b16 %v1852, %v1847
      %v2348 = vpack.c.b16 %v1853, %v1848
      %v2349 = vpack.c.b16 %v1854, %v1849
      %v2350 = vpack.c.b16 %v1855, %v1850
      %v2351 = vpack.c.b16 %v1861, %v1856
      %v2352 = vpack.c.b16 %v1862, %v1857
      %v2353 = vpack.c.b16 %v1863, %v1858
      %v2354 = vpack.c.b16 %v1864, %v1859
      %v2355 = vpack.c.b16 %v1865, %v1860
      %v2356 = vpack.c.b16 %v1871, %v1866
      %v2357 = vpack.c.b16 %v1872, %v1867
      %v2358 = vpack.c.b16 %v1873, %v1868
      %v2359 = vpack.c.b16 %v1874, %v1869
      %v2360 = vpack.c.b16 %v1875, %v1870
      %v2361 = vpack.c.b16 %v1881, %v1876
      %v2362 = vpack.c.b16 %v1882, %v1877
      %v2363 = vpack.c.b16 %v1883, %v1878
      %v2364 = vpack.c.b16 %v1884, %v1879
      %v2365 = vpack.c.b16 %v1885, %v1880
      %v2366 = vpack.c.b16 %v1891, %v1886
      %v2367 = vpack.c.b16 %v1892, %v1887
      %v2368 = vpack.c.b16 %v1893, %v1888
      %v2369 = vpack.c.b16 %v1894, %v1889
      %v2370 = vpack.c.b16 %v1895, %v1890
      %v2371 = vpack.c.b16 %v1901, %v1896
      %v2372 = vpack.c.b16 %v1902, %v1897
      %v2373 = vpack.c.b16 %v1903, %v1898
      %v2374 = vpack.c.b16 %v1904, %v1899
      %v2375 = vpack.c.b16 %v1905, %v1900
      %v2376 = vpack.c.b16 %v1911, %v1906
      %v2377 = vpack.c.b16 %v1912, %v1907
      %v2378 = vpack.c.b16 %v1913, %v1908
      %v2379 = vpack.c.b16 %v1914, %v1909
      %v2380 = vpack.c.b16 %v1915, %v1910
      %v2381 = vpack.c.b16 %v1921, %v1916
      %v2382 = vpack.c.b16 %v1922, %v1917
      %v2383 = vpack.c.b16 %v1923, %v1918
      %v2384 = vpack.c.b16 %v1924, %v1919
      %v2385 = vpack.c.b16 %v1925, %v1920
      %v2386 = vpack.c.b16 %v1931, %v1926
      %v2387 = vpack.c.b16 %v1932, %v1927
      %v2388 = vpack.c.b16 %v1933, %v1928
      %v2389 = vpack.c.b16 %v1934, %v1929
      %v2390 = vpack.c.b16 %v1935, %v1930
      %v2391 = vpack.c.b16 %v1941, %v1936
      %v2392 = vpack.c.b16 %v1942, %v1937
      %v2393 = vpack.c.b16 %v1943, %v1938
      %v2394 = vpack.c.b16 %v1944, %v1939
      %v2395 = vpack.c.b16 %v1945, %v1940
      %v2396 = vpack.c.b16 %v1951, %v1946
      %v2397 = vpack.c.b16 %v1952, %v1947
      %v2398 = vpack.c.b16 %v1953, %v1948
      %v2399 = vpack.c.b16 %v1954, %v1949
      %v2400 = vpack.c.b16 %v1955, %v1950
      %v2401 = vpack.c.b16 %v1961, %v1956
      %v2402 = vpack.c.b16 %v1962, %v1957
      %v2403 = vpack.c.b16 %v1963, %v1958
      %v2404 = vpack.c.b16 %v1964, %v1959
      %v2405 = vpack.c.b16 %v1965, %v1960
      %v2406 = vpack.c.b16 %v1971, %v1966
      %v2407 = vpack.c.b16 %v1972, %v1967
      %v2408 = vpack.c.b16 %v1973, %v1968
      %v2409 = vpack.c.b16 %v1974, %v1969
      %v2410 = vpack.c.b16 %v1975, %v1970
      %v2411 = vpack.c.b16 %v1981, %v1976
      %v2412 = vpack.c.b16 %v1982, %v1977
      %v2413 = vpack.c.b16 %v1983, %v1978
      %v2414 = vpack.c.b16 %v1984, %v1979
      %v2415 = vpack.c.b16 %v1985, %v1980
      %v2416 = vpack.c.b16 %v1991, %v1986
      %v2417 = vpack.c.b16 %v1992, %v1987
      %v2418 = vpack.c.b16 %v1993, %v1988
      %v2419 = vpack.c.b16 %v1994, %v1989
      %v2420 = vpack.c.b16 %v1995, %v1990
      %v2421 = vpack.c.b16 %v2001, %v1996
      %v2422 = vpack.c.b16 %v2002, %v1997
      %v2423 = vpack.c.b16 %v2003, %v1998
      %v2424 = vpack.c.b16 %v2004, %v1999
      %v2425 = vpack.c.b16 %v2005, %v2000
      %v2426 = vpack.c.b16 %v2011, %v2006
      %v2427 = vpack.c.b16 %v2012, %v2007
      %v2428 = vpack.c.b16 %v2013, %v2008
      %v2429 = vpack.c.b16 %v2014, %v2009
      %v2430 = vpack.c.b16 %v2015, %v2010
      %v2431 = vpack.c.b16 %v2021, %v2016
      %v2432 = vpack.c.b16 %v2022, %v2017
      %v2433 = vpack.c.b16 %v2023, %v2018
      %v2434 = vpack.c.b16 %v2024, %v2019
      %v2435 = vpack.c.b16 %v2025, %v2020
      %v2436 = vpack.c.b16 %v2031, %v2026
      %v2437 = vpack.c.b16 %v2032, %v2027
      %v2438 = vpack.c.b16 %v2033, %v2028
      %v2439 = vpack.c.b16 %v2034, %v2029
      %v2440 = vpack.c.b16 %v2035, %v2030
      %v2441 = vpack.c.b16 %v2041, %v2036
      %v2442 = vpack.c.b16 %v2042, %v2037
      %v2443 = vpack.c.b16 %v2043, %v2038
      %v2444 = vpack.c.b16 %v2044, %v2039
      %v2445 = vpack.c.b16 %v2045, %v2040
      %v2446 = vpack.c.b16 %v2051, %v2046
      %v2447 = vpack.c.b16 %v2052, %v2047
      %v2448 = vpack.c.b16 %v2053, %v2048
      %v2449 = vpack.c.b16 %v2054, %v2049
      %v2450 = vpack.c.b16 %v2055, %v2050
      %v2451 = vpack.c.b16 %v2061, %v2056
      %v2452 = vpack.c.b16 %v2062, %v2057
      %v2453 = vpack.c.b16 %v2063, %v2058
      %v2454 = vpack.c.b16 %v2064, %v2059
      %v2455 = vpack.c.b16 %v2065, %v2060
      %v2456 = vpack.c.b16 %v2071, %v2066
      %v2457 = vpack.c.b16 %v2072, %v2067
      %v2458 = vpack.c.b16 %v2073, %v2068
      %v2459 = vpack.c.b16 %v2074, %v2069
      %v2460 = vpack.c.b16 %v2075, %v2070
      %v2461 = vpack.c.b16 %v2081, %v2076
      %v2462 = vpack.c.b16 %v2082, %v2077
      %v2463 = vpack.c.b16 %v2083, %v2078
      %v2464 = vpack.c.b16 %v2084, %v2079
      %v2465 = vpack.c.b16 %v2085, %v2080
      %v2466 = vpack.c.b16 %v2091, %v2086
      %v2467 = vpack.c.b16 %v2092, %v2087
      %v2468 = vpack.c.b16 %v2093, %v2088
      %v2469 = vpack.c.b16 %v2094, %v2089
      %v2470 = vpack.c.b16 %v2095, %v2090
      %v2471 = vpack.c.b16 %v2101, %v2096
      %v2472 = vpack.c.b16 %v2102, %v2097
      %v2473 = vpack.c.b16 %v2103, %v2098
      %v2474 = vpack.c.b16 %v2104, %v2099
      %v2475 = vpack.c.b16 %v2105, %v2100
      %v2476 = vpack.c.b16 %v2111, %v2106
      %v2477 = vpack.c.b16 %v2112, %v2107
      %v2478 = vpack.c.b16 %v2113, %v2108
      %v2479 = vpack.c.b16 %v2114, %v2109
      %v2480 = vpack.c.b16 %v2115, %v2110
      %v2481 = vpack.c.b16 %v2121, %v2116
      %v2482 = vpack.c.b16 %v2122, %v2117
      %v2483 = vpack.c.b16 %v2123, %v2118
      %v2484 = vpack.c.b16 %v2124, %v2119
      %v2485 = vpack.c.b16 %v2125, %v2120
      %v2486 = vpack.c.b16 %v2131, %v2126
      %v2487 = vpack.c.b16 %v2132, %v2127
      %v2488 = vpack.c.b16 %v2133, %v2128
      %v2489 = vpack.c.b16 %v2134, %v2129
      %v2490 = vpack.c.b16 %v2135, %v2130
      %v2491 = vpack.c.b16 %v2141, %v2136
      %v2492 = vpack.c.b16 %v2142, %v2137
      %v2493 = vpack.c.b16 %v2143, %v2138
      %v2494 = vpack.c.b16 %v2144, %v2139
      %v2495 = vpack.c.b16 %v2145, %v2140
      %v2496 = vpack.c.b16 %v2151, %v2146
      %v2497 = vpack.c.b16 %v2152, %v2147
      %v2498 = vpack.c.b16 %v2153, %v2148
      %v2499 = vpack.c.b16 %v2154, %v2149
      %v2500 = vpack.c.b16 %v2155, %v2150
      %v2501 = vpack.c.b16 %v2161, %v2156
      %v2502 = vpack.c.b16 %v2162, %v2157
      %v2503 = vpack.c.b16 %v2163, %v2158
      %v2504 = vpack.c.b16 %v2164, %v2159
      %v2505 = vpack.c.b16 %v2165, %v2160
      %v2506 = vpack.c.b16 %v2171, %v2166
      %v2507 = vpack.c.b16 %v2172, %v2167
      %v2508 = vpack.c.b16 %v2173, %v2168
      %v2509 = vpack.c.b16 %v2174, %v2169
      %v2510 = vpack.c.b16 %v2175, %v2170
      %v2511 = vpack.c.b16 %v2181, %v2176
      %v2512 = vpack.c.b16 %v2182, %v2177
      %v2513 = vpack.c.b16 %v2183, %v2178
      %v2514 = vpack.c.b16 %v2184, %v2179
      %v2515 = vpack.c.b16 %v2185, %v2180
      %v2516 = vpack.c.b16 %v2191, %v2186
      %v2517 = vpack.c.b16 %v2192, %v2187
      %v2518 = vpack.c.b16 %v2193, %v2188
      %v2519 = vpack.c.b16 %v2194, %v2189
      %v2520 = vpack.c.b16 %v2195, %v2190
      %v2521 = vpack.c.b16 %v2201, %v2196
      %v2522 = vpack.c.b16 %v2202, %v2197
      %v2523 = vpack.c.b16 %v2203, %v2198
      %v2524 = vpack.c.b16 %v2204, %v2199
      %v2525 = vpack.c.b16 %v2205, %v2200
      %2846 = vmatprep.subr.bf16.mxu0 %v2207
      %2847 = vmatpush1.bf16.msra.mxu0 %v2206
      %2848 = vmatprep.subr.bf16.mxu0 %v2212
      %2849 = vmatpush1.bf16.msra.mxu0 %v2211
      %2850 = vmatprep.subr.bf16.mxu0 %v2217
      %2851 = vmatpush1.bf16.msra.mxu0 %v2216
      %2852 = vmatprep.subr.bf16.mxu0 %v2222
      %2853 = vmatpush1.bf16.msra.mxu0 %v2221
      %2854 = vmatprep.subr.bf16.mxu0 %v2227
      %2855 = vmatpush1.bf16.msra.mxu0 %v2226
      %2856 = vmatprep.subr.bf16.mxu0 %v2232
      %2857 = vmatpush1.bf16.msra.mxu0 %v2231
      %2858 = vmatprep.subr.bf16.mxu0 %v2237
      %2859 = vmatpush1.bf16.msra.mxu0 %v2236
      %2860 = vmatprep.subr.bf16.mxu0 %v2242
      %2861 = vmatpush1.bf16.msra.mxu0 %v2241
      %2862 = vmatprep.subr.bf16.mxu0 %v2247
      %2863 = vmatpush1.bf16.msra.mxu0 %v2246
      %2864 = vmatprep.subr.bf16.mxu0 %v2252
      %2865 = vmatpush1.bf16.msra.mxu0 %v2251
      %2866 = vmatprep.subr.bf16.mxu0 %v2257
      %2867 = vmatpush1.bf16.msra.mxu0 %v2256
      %2868 = vmatprep.subr.bf16.mxu0 %v2262
      %2869 = vmatpush1.bf16.msra.mxu0 %v2261
      %2870 = vmatprep.subr.bf16.mxu0 %v2267
      %2871 = vmatpush1.bf16.msra.mxu0 %v2266
      %2872 = vmatprep.subr.bf16.mxu0 %v2272
      %2873 = vmatpush1.bf16.msra.mxu0 %v2271
      %2874 = vmatprep.subr.bf16.mxu0 %v2277
      %2875 = vmatpush1.bf16.msra.mxu0 %v2276
      %2876 = vmatprep.subr.bf16.mxu0 %v2282
      %2877 = vmatpush1.bf16.msra.mxu0 %v2281
      %2878 = vmatprep.mubr.bf16.mxu0 %v771
      %2879 = vmatmul.mubr.bf16.gmra.mrb[0].mxu0 %v770
      %v2880 = vpop.f32.mrb[0].mxu0
      %v2881 = vadd.f32 %v1165, %v2880
      %v2882 = vpop.f32.mrb[0].mxu0
      %v2883 = vadd.f32 %v1169, %v2882
      %v2884 = vpop.f32.mrb[0].mxu0
      %v2885 = vpop.f32.mrb[0].mxu0
      %2886 = vdwg.mxu0
      %2887 = vmatprep.subr.bf16.mxu0 %v2287
      %2888 = vmatpush1.bf16.msra.mxu0 %v2286
      %2889 = vmatprep.subr.bf16.mxu0 %v2292
      %2890 = vmatpush1.bf16.msra.mxu0 %v2291
      %2891 = vmatprep.subr.bf16.mxu0 %v2297
      %2892 = vmatpush1.bf16.msra.mxu0 %v2296
      %2893 = vmatprep.subr.bf16.mxu0 %v2302
      %2894 = vmatpush1.bf16.msra.mxu0 %v2301
      %2895 = vmatprep.subr.bf16.mxu0 %v2307
      %2896 = vmatpush1.bf16.msra.mxu0 %v2306
      %2897 = vmatprep.subr.bf16.mxu0 %v2312
      %2898 = vmatpush1.bf16.msra.mxu0 %v2311
      %2899 = vmatprep.subr.bf16.mxu0 %v2317
      %2900 = vmatpush1.bf16.msra.mxu0 %v2316
      %2901 = vmatprep.subr.bf16.mxu0 %v2322
      %2902 = vmatpush1.bf16.msra.mxu0 %v2321
      %2903 = vmatprep.subr.bf16.mxu0 %v2327
      %2904 = vmatpush1.bf16.msra.mxu0 %v2326
      %2905 = vmatprep.subr.bf16.mxu0 %v2332
      %2906 = vmatpush1.bf16.msra.mxu0 %v2331
      %2907 = vmatprep.subr.bf16.mxu0 %v2337
      %2908 = vmatpush1.bf16.msra.mxu0 %v2336
      %2909 = vmatprep.subr.bf16.mxu0 %v2342
      %2910 = vmatpush1.bf16.msra.mxu0 %v2341
      %2911 = vmatprep.subr.bf16.mxu0 %v2347
      %2912 = vmatpush1.bf16.msra.mxu0 %v2346
      %2913 = vmatprep.subr.bf16.mxu0 %v2352
      %2914 = vmatpush1.bf16.msra.mxu0 %v2351
      %2915 = vmatprep.subr.bf16.mxu0 %v2357
      %2916 = vmatpush1.bf16.msra.mxu0 %v2356
      %2917 = vmatprep.subr.bf16.mxu0 %v2362
      %2918 = vmatpush1.bf16.msra.mxu0 %v2361
      %2919 = vmatprep.mubr.bf16.mxu0 %v773
      %2920 = vmatmul.mubr.bf16.gmra.mrb[0].mxu0 %v772
      %v2921 = vpop.f32.mrb[0].mxu0
      %v2922 = vadd.f32 %v2881, %v2921
      %v2923 = vpop.f32.mrb[0].mxu0
      %v2924 = vadd.f32 %v2883, %v2923
      %v2925 = vpop.f32.mrb[0].mxu0
      %v2926 = vpop.f32.mrb[0].mxu0
      %2927 = vdwg.mxu0
      %2928 = vmatprep.subr.bf16.mxu0 %v2367
      %2929 = vmatpush1.bf16.msra.mxu0 %v2366
      %2930 = vmatprep.subr.bf16.mxu0 %v2372
      %2931 = vmatpush1.bf16.msra.mxu0 %v2371
      %2932 = vmatprep.subr.bf16.mxu0 %v2377
      %2933 = vmatpush1.bf16.msra.mxu0 %v2376
      %2934 = vmatprep.subr.bf16.mxu0 %v2382
      %2935 = vmatpush1.bf16.msra.mxu0 %v2381
      %2936 = vmatprep.subr.bf16.mxu0 %v2387
      %2937 = vmatpush1.bf16.msra.mxu0 %v2386
      %2938 = vmatprep.subr.bf16.mxu0 %v2392
      %2939 = vmatpush1.bf16.msra.mxu0 %v2391
      %2940 = vmatprep.subr.bf16.mxu0 %v2397
      %2941 = vmatpush1.bf16.msra.mxu0 %v2396
      %2942 = vmatprep.subr.bf16.mxu0 %v2402
      %2943 = vmatpush1.bf16.msra.mxu0 %v2401
      %2944 = vmatprep.subr.bf16.mxu0 %v2407
      %2945 = vmatpush1.bf16.msra.mxu0 %v2406
      %2946 = vmatprep.subr.bf16.mxu0 %v2412
      %2947 = vmatpush1.bf16.msra.mxu0 %v2411
      %2948 = vmatprep.subr.bf16.mxu0 %v2417
      %2949 = vmatpush1.bf16.msra.mxu0 %v2416
      %2950 = vmatprep.subr.bf16.mxu0 %v2422
      %2951 = vmatpush1.bf16.msra.mxu0 %v2421
      %2952 = vmatprep.subr.bf16.mxu0 %v2427
      %2953 = vmatpush1.bf16.msra.mxu0 %v2426
      %2954 = vmatprep.subr.bf16.mxu0 %v2432
      %2955 = vmatpush1.bf16.msra.mxu0 %v2431
      %2956 = vmatprep.subr.bf16.mxu0 %v2437
      %2957 = vmatpush1.bf16.msra.mxu0 %v2436
      %2958 = vmatprep.subr.bf16.mxu0 %v2442
      %2959 = vmatpush1.bf16.msra.mxu0 %v2441
      %2960 = vmatprep.mubr.bf16.mxu0 %v775
      %2961 = vmatmul.mubr.bf16.gmra.mrb[0].mxu0 %v774
      %v2962 = vpop.f32.mrb[0].mxu0
      %v2963 = vadd.f32 %v2922, %v2962
      %v2964 = vpop.f32.mrb[0].mxu0
      %v2965 = vadd.f32 %v2924, %v2964
      %v2966 = vpop.f32.mrb[0].mxu0
      %v2967 = vpop.f32.mrb[0].mxu0
      %2968 = vdwg.mxu0
      %2969 = vmatprep.subr.bf16.mxu0 %v2447
      %2970 = vmatpush1.bf16.msra.mxu0 %v2446
      %2971 = vmatprep.subr.bf16.mxu0 %v2452
      %2972 = vmatpush1.bf16.msra.mxu0 %v2451
      %2973 = vmatprep.subr.bf16.mxu0 %v2457
      %2974 = vmatpush1.bf16.msra.mxu0 %v2456
      %2975 = vmatprep.subr.bf16.mxu0 %v2462
      %2976 = vmatpush1.bf16.msra.mxu0 %v2461
      %2977 = vmatprep.subr.bf16.mxu0 %v2467
      %2978 = vmatpush1.bf16.msra.mxu0 %v2466
      %2979 = vmatprep.subr.bf16.mxu0 %v2472
      %2980 = vmatpush1.bf16.msra.mxu0 %v2471
      %2981 = vmatprep.subr.bf16.mxu0 %v2477
      %2982 = vmatpush1.bf16.msra.mxu0 %v2476
      %2983 = vmatprep.subr.bf16.mxu0 %v2482
      %2984 = vmatpush1.bf16.msra.mxu0 %v2481
      %2985 = vmatprep.subr.bf16.mxu0 %v2487
      %2986 = vmatpush1.bf16.msra.mxu0 %v2486
      %2987 = vmatprep.subr.bf16.mxu0 %v2492
      %2988 = vmatpush1.bf16.msra.mxu0 %v2491
      %2989 = vmatprep.subr.bf16.mxu0 %v2497
      %2990 = vmatpush1.bf16.msra.mxu0 %v2496
      %2991 = vmatprep.subr.bf16.mxu0 %v2502
      %2992 = vmatpush1.bf16.msra.mxu0 %v2501
      %2993 = vmatprep.subr.bf16.mxu0 %v2507
      %2994 = vmatpush1.bf16.msra.mxu0 %v2506
      %2995 = vmatprep.subr.bf16.mxu0 %v2512
      %2996 = vmatpush1.bf16.msra.mxu0 %v2511
      %2997 = vmatprep.subr.bf16.mxu0 %v2517
      %2998 = vmatpush1.bf16.msra.mxu0 %v2516
      %2999 = vmatprep.subr.bf16.mxu0 %v2522
      %3000 = vmatpush1.bf16.msra.mxu0 %v2521
      %3001 = vmatprep.mubr.bf16.mxu0 %v777
      %3002 = vmatmul.mubr.bf16.gmra.mrb[0].mxu0 %v776
      %v3003 = vpop.f32.mrb[0].mxu0
      %v3004 = vadd.f32 %v2963, %v3003
      %v3005 = vpop.f32.mrb[0].mxu0
      %v3006 = vadd.f32 %v2965, %v3005
      %v3007 = vpop.f32.mrb[0].mxu0
      %v3008 = vpop.f32.mrb[0].mxu0
      %3009 = vdwg.mxu0
      %3010 = vmatprep.subr.bf16.mxu0 %v2209
      %3011 = vmatpush1.bf16.msra.mxu0 %v2208
      %3012 = vmatprep.subr.bf16.mxu0 %v2214
      %3013 = vmatpush1.bf16.msra.mxu0 %v2213
      %3014 = vmatprep.subr.bf16.mxu0 %v2219
      %3015 = vmatpush1.bf16.msra.mxu0 %v2218
      %3016 = vmatprep.subr.bf16.mxu0 %v2224
      %3017 = vmatpush1.bf16.msra.mxu0 %v2223
      %3018 = vmatprep.subr.bf16.mxu0 %v2229
      %3019 = vmatpush1.bf16.msra.mxu0 %v2228
      %3020 = vmatprep.subr.bf16.mxu0 %v2234
      %3021 = vmatpush1.bf16.msra.mxu0 %v2233
      %3022 = vmatprep.subr.bf16.mxu0 %v2239
      %3023 = vmatpush1.bf16.msra.mxu0 %v2238
      %3024 = vmatprep.subr.bf16.mxu0 %v2244
      %3025 = vmatpush1.bf16.msra.mxu0 %v2243
      %3026 = vmatprep.subr.bf16.mxu0 %v2249
      %3027 = vmatpush1.bf16.msra.mxu0 %v2248
      %3028 = vmatprep.subr.bf16.mxu0 %v2254
      %3029 = vmatpush1.bf16.msra.mxu0 %v2253
      %3030 = vmatprep.subr.bf16.mxu0 %v2259
      %3031 = vmatpush1.bf16.msra.mxu0 %v2258
      %3032 = vmatprep.subr.bf16.mxu0 %v2264
      %3033 = vmatpush1.bf16.msra.mxu0 %v2263
      %3034 = vmatprep.subr.bf16.mxu0 %v2269
      %3035 = vmatpush1.bf16.msra.mxu0 %v2268
      %3036 = vmatprep.subr.bf16.mxu0 %v2274
      %3037 = vmatpush1.bf16.msra.mxu0 %v2273
      %3038 = vmatprep.subr.bf16.mxu0 %v2279
      %3039 = vmatpush1.bf16.msra.mxu0 %v2278
      %3040 = vmatprep.subr.bf16.mxu0 %v2284
      %3041 = vmatpush1.bf16.msra.mxu0 %v2283
      %3042 = vmatprep.mubr.bf16.mxu0 %v771
      %3043 = vmatmul.mubr.bf16.gmra.mrb[0].mxu0 %v770
      %v3044 = vpop.f32.mrb[0].mxu0
      %v3045 = vadd.f32 %v1173, %v3044
      %v3046 = vpop.f32.mrb[0].mxu0
      %v3047 = vadd.f32 %v1177, %v3046
      %v3048 = vpop.f32.mrb[0].mxu0
      %v3049 = vpop.f32.mrb[0].mxu0
      %3050 = vdwg.mxu0
      %3051 = vmatprep.subr.bf16.mxu0 %v2289
      %3052 = vmatpush1.bf16.msra.mxu0 %v2288
      %3053 = vmatprep.subr.bf16.mxu0 %v2294
      %3054 = vmatpush1.bf16.msra.mxu0 %v2293
      %3055 = vmatprep.subr.bf16.mxu0 %v2299
      %3056 = vmatpush1.bf16.msra.mxu0 %v2298
      %3057 = vmatprep.subr.bf16.mxu0 %v2304
      %3058 = vmatpush1.bf16.msra.mxu0 %v2303
      %3059 = vmatprep.subr.bf16.mxu0 %v2309
      %3060 = vmatpush1.bf16.msra.mxu0 %v2308
      %3061 = vmatprep.subr.bf16.mxu0 %v2314
      %3062 = vmatpush1.bf16.msra.mxu0 %v2313
      %3063 = vmatprep.subr.bf16.mxu0 %v2319
      %3064 = vmatpush1.bf16.msra.mxu0 %v2318
      %3065 = vmatprep.subr.bf16.mxu0 %v2324
      %3066 = vmatpush1.bf16.msra.mxu0 %v2323
      %3067 = vmatprep.subr.bf16.mxu0 %v2329
      %3068 = vmatpush1.bf16.msra.mxu0 %v2328
      %3069 = vmatprep.subr.bf16.mxu0 %v2334
      %3070 = vmatpush1.bf16.msra.mxu0 %v2333
      %3071 = vmatprep.subr.bf16.mxu0 %v2339
      %3072 = vmatpush1.bf16.msra.mxu0 %v2338
      %3073 = vmatprep.subr.bf16.mxu0 %v2344
      %3074 = vmatpush1.bf16.msra.mxu0 %v2343
      %3075 = vmatprep.subr.bf16.mxu0 %v2349
      %3076 = vmatpush1.bf16.msra.mxu0 %v2348
      %3077 = vmatprep.subr.bf16.mxu0 %v2354
      %3078 = vmatpush1.bf16.msra.mxu0 %v2353
      %3079 = vmatprep.subr.bf16.mxu0 %v2359
      %3080 = vmatpush1.bf16.msra.mxu0 %v2358
      %3081 = vmatprep.subr.bf16.mxu0 %v2364
      %3082 = vmatpush1.bf16.msra.mxu0 %v2363
      %3083 = vmatprep.mubr.bf16.mxu0 %v773
      %3084 = vmatmul.mubr.bf16.gmra.mrb[0].mxu0 %v772
      %v3085 = vpop.f32.mrb[0].mxu0
      %v3086 = vadd.f32 %v3045, %v3085
      %v3087 = vpop.f32.mrb[0].mxu0
      %v3088 = vadd.f32 %v3047, %v3087
      %v3089 = vpop.f32.mrb[0].mxu0
      %v3090 = vpop.f32.mrb[0].mxu0
      %3091 = vdwg.mxu0
      %3092 = vmatprep.subr.bf16.mxu0 %v2369
      %3093 = vmatpush1.bf16.msra.mxu0 %v2368
      %3094 = vmatprep.subr.bf16.mxu0 %v2374
      %3095 = vmatpush1.bf16.msra.mxu0 %v2373
      %3096 = vmatprep.subr.bf16.mxu0 %v2379
      %3097 = vmatpush1.bf16.msra.mxu0 %v2378
      %3098 = vmatprep.subr.bf16.mxu0 %v2384
      %3099 = vmatpush1.bf16.msra.mxu0 %v2383
      %3100 = vmatprep.subr.bf16.mxu0 %v2389
      %3101 = vmatpush1.bf16.msra.mxu0 %v2388
      %3102 = vmatprep.subr.bf16.mxu0 %v2394
      %3103 = vmatpush1.bf16.msra.mxu0 %v2393
      %3104 = vmatprep.subr.bf16.mxu0 %v2399
      %3105 = vmatpush1.bf16.msra.mxu0 %v2398
      %3106 = vmatprep.subr.bf16.mxu0 %v2404
      %3107 = vmatpush1.bf16.msra.mxu0 %v2403
      %3108 = vmatprep.subr.bf16.mxu0 %v2409
      %3109 = vmatpush1.bf16.msra.mxu0 %v2408
      %3110 = vmatprep.subr.bf16.mxu0 %v2414
      %3111 = vmatpush1.bf16.msra.mxu0 %v2413
      %3112 = vmatprep.subr.bf16.mxu0 %v2419
      %3113 = vmatpush1.bf16.msra.mxu0 %v2418
      %3114 = vmatprep.subr.bf16.mxu0 %v2424
      %3115 = vmatpush1.bf16.msra.mxu0 %v2423
      %3116 = vmatprep.subr.bf16.mxu0 %v2429
      %3117 = vmatpush1.bf16.msra.mxu0 %v2428
      %3118 = vmatprep.subr.bf16.mxu0 %v2434
      %3119 = vmatpush1.bf16.msra.mxu0 %v2433
      %3120 = vmatprep.subr.bf16.mxu0 %v2439
      %3121 = vmatpush1.bf16.msra.mxu0 %v2438
      %3122 = vmatprep.subr.bf16.mxu0 %v2444
      %3123 = vmatpush1.bf16.msra.mxu0 %v2443
      %3124 = vmatprep.mubr.bf16.mxu0 %v775
      %3125 = vmatmul.mubr.bf16.gmra.mrb[0].mxu0 %v774
      %v3126 = vpop.f32.mrb[0].mxu0
      %v3127 = vadd.f32 %v3086, %v3126
      %v3128 = vpop.f32.mrb[0].mxu0
      %v3129 = vadd.f32 %v3088, %v3128
      %v3130 = vpop.f32.mrb[0].mxu0
      %v3131 = vpop.f32.mrb[0].mxu0
      %3132 = vdwg.mxu0
      %3133 = vmatprep.subr.bf16.mxu0 %v2449
      %3134 = vmatpush1.bf16.msra.mxu0 %v2448
      %3135 = vmatprep.subr.bf16.mxu0 %v2454
      %3136 = vmatpush1.bf16.msra.mxu0 %v2453
      %3137 = vmatprep.subr.bf16.mxu0 %v2459
      %3138 = vmatpush1.bf16.msra.mxu0 %v2458
      %3139 = vmatprep.subr.bf16.mxu0 %v2464
      %3140 = vmatpush1.bf16.msra.mxu0 %v2463
      %3141 = vmatprep.subr.bf16.mxu0 %v2469
      %3142 = vmatpush1.bf16.msra.mxu0 %v2468
      %3143 = vmatprep.subr.bf16.mxu0 %v2474
      %3144 = vmatpush1.bf16.msra.mxu0 %v2473
      %3145 = vmatprep.subr.bf16.mxu0 %v2479
      %3146 = vmatpush1.bf16.msra.mxu0 %v2478
      %3147 = vmatprep.subr.bf16.mxu0 %v2484
      %3148 = vmatpush1.bf16.msra.mxu0 %v2483
      %3149 = vmatprep.subr.bf16.mxu0 %v2489
      %3150 = vmatpush1.bf16.msra.mxu0 %v2488
      %3151 = vmatprep.subr.bf16.mxu0 %v2494
      %3152 = vmatpush1.bf16.msra.mxu0 %v2493
      %3153 = vmatprep.subr.bf16.mxu0 %v2499
      %3154 = vmatpush1.bf16.msra.mxu0 %v2498
      %3155 = vmatprep.subr.bf16.mxu0 %v2504
      %3156 = vmatpush1.bf16.msra.mxu0 %v2503
      %3157 = vmatprep.subr.bf16.mxu0 %v2509
      %3158 = vmatpush1.bf16.msra.mxu0 %v2508
      %3159 = vmatprep.subr.bf16.mxu0 %v2514
      %3160 = vmatpush1.bf16.msra.mxu0 %v2513
      %3161 = vmatprep.subr.bf16.mxu0 %v2519
      %3162 = vmatpush1.bf16.msra.mxu0 %v2518
      %3163 = vmatprep.subr.bf16.mxu0 %v2524
      %3164 = vmatpush1.bf16.msra.mxu0 %v2523
      %3165 = vmatprep.mubr.bf16.mxu0 %v777
      %3166 = vmatmul.mubr.bf16.gmra.mrb[0].mxu0 %v776
      %v3167 = vpop.f32.mrb[0].mxu0
      %v3168 = vadd.f32 %v3127, %v3167
      %v3169 = vpop.f32.mrb[0].mxu0
      %v3170 = vadd.f32 %v3129, %v3169
      %v3171 = vpop.f32.mrb[0].mxu0
      %v3172 = vpop.f32.mrb[0].mxu0
      %3173 = vdwg.mxu0
      %3174 = vmatprep.subr.bf16.mxu0 0
      %3175 = vmatpush1.bf16.msra.mxu0 %v2210
      %3176 = vmatprep.subr.bf16.mxu0 0
      %3177 = vmatpush1.bf16.msra.mxu0 %v2215
      %3178 = vmatprep.subr.bf16.mxu0 0
      %3179 = vmatpush1.bf16.msra.mxu0 %v2220
      %3180 = vmatprep.subr.bf16.mxu0 0
      %3181 = vmatpush1.bf16.msra.mxu0 %v2225
      %3182 = vmatprep.subr.bf16.mxu0 0
      %3183 = vmatpush1.bf16.msra.mxu0 %v2230
      %3184 = vmatprep.subr.bf16.mxu0 0
      %3185 = vmatpush1.bf16.msra.mxu0 %v2235
      %3186 = vmatprep.subr.bf16.mxu0 0
      %3187 = vmatpush1.bf16.msra.mxu0 %v2240
      %3188 = vmatprep.subr.bf16.mxu0 0
      %3189 = vmatpush1.bf16.msra.mxu0 %v2245
      %3190 = vmatprep.subr.bf16.mxu0 0
      %3191 = vmatpush1.bf16.msra.mxu0 %v2250
      %3192 = vmatprep.subr.bf16.mxu0 0
      %3193 = vmatpush1.bf16.msra.mxu0 %v2255
      %3194 = vmatprep.subr.bf16.mxu0 0
      %3195 = vmatpush1.bf16.msra.mxu0 %v2260
      %3196 = vmatprep.subr.bf16.mxu0 0
      %3197 = vmatpush1.bf16.msra.mxu0 %v2265
      %3198 = vmatprep.subr.bf16.mxu0 0
      %3199 = vmatpush1.bf16.msra.mxu0 %v2270
      %3200 = vmatprep.subr.bf16.mxu0 0
      %3201 = vmatpush1.bf16.msra.mxu0 %v2275
      %3202 = vmatprep.subr.bf16.mxu0 0
      %3203 = vmatpush1.bf16.msra.mxu0 %v2280
      %3204 = vmatprep.subr.bf16.mxu0 0
      %3205 = vmatpush1.bf16.msra.mxu0 %v2285
      %3206 = vmatprep.mubr.bf16.mxu0 %v771
      %3207 = vmatmul.mubr.bf16.gmra.mrb[0].mxu0 %v770
      %v3208 = vpop.f32.mrb[0].mxu0
      %v3209 = vadd.f32 %v1181, %v3208
      %v3210 = vpop.f32.mrb[0].mxu0
      %v3211 = vpop.f32.mrb[0].mxu0
      %v3212 = vpop.f32.mrb[0].mxu0
      %3213 = vdwg.mxu0
      %3214 = vmatprep.subr.bf16.mxu0 0
      %3215 = vmatpush1.bf16.msra.mxu0 %v2290
      %3216 = vmatprep.subr.bf16.mxu0 0
      %3217 = vmatpush1.bf16.msra.mxu0 %v2295
      %3218 = vmatprep.subr.bf16.mxu0 0
      %3219 = vmatpush1.bf16.msra.mxu0 %v2300
      %3220 = vmatprep.subr.bf16.mxu0 0
      %3221 = vmatpush1.bf16.msra.mxu0 %v2305
      %3222 = vmatprep.subr.bf16.mxu0 0
      %3223 = vmatpush1.bf16.msra.mxu0 %v2310
      %3224 = vmatprep.subr.bf16.mxu0 0
      %3225 = vmatpush1.bf16.msra.mxu0 %v2315
      %3226 = vmatprep.subr.bf16.mxu0 0
      %3227 = vmatpush1.bf16.msra.mxu0 %v2320
      %3228 = vmatprep.subr.bf16.mxu0 0
      %3229 = vmatpush1.bf16.msra.mxu0 %v2325
      %3230 = vmatprep.subr.bf16.mxu0 0
      %3231 = vmatpush1.bf16.msra.mxu0 %v2330
      %3232 = vmatprep.subr.bf16.mxu0 0
      %3233 = vmatpush1.bf16.msra.mxu0 %v2335
      %3234 = vmatprep.subr.bf16.mxu0 0
      %3235 = vmatpush1.bf16.msra.mxu0 %v2340
      %3236 = vmatprep.subr.bf16.mxu0 0
      %3237 = vmatpush1.bf16.msra.mxu0 %v2345
      %3238 = vmatprep.subr.bf16.mxu0 0
      %3239 = vmatpush1.bf16.msra.mxu0 %v2350
      %3240 = vmatprep.subr.bf16.mxu0 0
      %3241 = vmatpush1.bf16.msra.mxu0 %v2355
      %3242 = vmatprep.subr.bf16.mxu0 0
      %3243 = vmatpush1.bf16.msra.mxu0 %v2360
      %3244 = vmatprep.subr.bf16.mxu0 0
      %3245 = vmatpush1.bf16.msra.mxu0 %v2365
      %3246 = vmatprep.mubr.bf16.mxu0 %v773
      %3247 = vmatmul.mubr.bf16.gmra.mrb[0].mxu0 %v772
      %v3248 = vpop.f32.mrb[0].mxu0
      %v3249 = vadd.f32 %v3209, %v3248
      %v3250 = vpop.f32.mrb[0].mxu0
      %v3251 = vpop.f32.mrb[0].mxu0
      %v3252 = vpop.f32.mrb[0].mxu0
      %3253 = vdwg.mxu0
      %3254 = vmatprep.subr.bf16.mxu0 0
      %3255 = vmatpush1.bf16.msra.mxu0 %v2370
      %3256 = vmatprep.subr.bf16.mxu0 0
      %3257 = vmatpush1.bf16.msra.mxu0 %v2375
      %3258 = vmatprep.subr.bf16.mxu0 0
      %3259 = vmatpush1.bf16.msra.mxu0 %v2380
      %3260 = vmatprep.subr.bf16.mxu0 0
      %3261 = vmatpush1.bf16.msra.mxu0 %v2385
      %3262 = vmatprep.subr.bf16.mxu0 0
      %3263 = vmatpush1.bf16.msra.mxu0 %v2390
      %3264 = vmatprep.subr.bf16.mxu0 0
      %3265 = vmatpush1.bf16.msra.mxu0 %v2395
      %3266 = vmatprep.subr.bf16.mxu0 0
      %3267 = vmatpush1.bf16.msra.mxu0 %v2400
      %3268 = vmatprep.subr.bf16.mxu0 0
      %3269 = vmatpush1.bf16.msra.mxu0 %v2405
      %3270 = vmatprep.subr.bf16.mxu0 0
      %3271 = vmatpush1.bf16.msra.mxu0 %v2410
      %3272 = vmatprep.subr.bf16.mxu0 0
      %3273 = vmatpush1.bf16.msra.mxu0 %v2415
      %3274 = vmatprep.subr.bf16.mxu0 0
      %3275 = vmatpush1.bf16.msra.mxu0 %v2420
      %3276 = vmatprep.subr.bf16.mxu0 0
      %3277 = vmatpush1.bf16.msra.mxu0 %v2425
      %3278 = vmatprep.subr.bf16.mxu0 0
      %3279 = vmatpush1.bf16.msra.mxu0 %v2430
      %3280 = vmatprep.subr.bf16.mxu0 0
      %3281 = vmatpush1.bf16.msra.mxu0 %v2435
      %3282 = vmatprep.subr.bf16.mxu0 0
      %3283 = vmatpush1.bf16.msra.mxu0 %v2440
      %3284 = vmatprep.subr.bf16.mxu0 0
      %3285 = vmatpush1.bf16.msra.mxu0 %v2445
      %3286 = vmatprep.mubr.bf16.mxu0 %v775
      %3287 = vmatmul.mubr.bf16.gmra.mrb[0].mxu0 %v774
      %v3288 = vpop.f32.mrb[0].mxu0
      %v3289 = vadd.f32 %v3249, %v3288
      %v3290 = vpop.f32.mrb[0].mxu0
      %v3291 = vpop.f32.mrb[0].mxu0
      %v3292 = vpop.f32.mrb[0].mxu0
      %3293 = vdwg.mxu0
      %3294 = vmatprep.subr.bf16.mxu0 0
      %3295 = vmatpush1.bf16.msra.mxu0 %v2450
      %3296 = vmatprep.subr.bf16.mxu0 0
      %3297 = vmatpush1.bf16.msra.mxu0 %v2455
      %3298 = vmatprep.subr.bf16.mxu0 0
      %3299 = vmatpush1.bf16.msra.mxu0 %v2460
      %3300 = vmatprep.subr.bf16.mxu0 0
      %3301 = vmatpush1.bf16.msra.mxu0 %v2465
      %3302 = vmatprep.subr.bf16.mxu0 0
      %3303 = vmatpush1.bf16.msra.mxu0 %v2470
      %3304 = vmatprep.subr.bf16.mxu0 0
      %3305 = vmatpush1.bf16.msra.mxu0 %v2475
      %3306 = vmatprep.subr.bf16.mxu0 0
      %3307 = vmatpush1.bf16.msra.mxu0 %v2480
      %3308 = vmatprep.subr.bf16.mxu0 0
      %3309 = vmatpush1.bf16.msra.mxu0 %v2485
      %3310 = vmatprep.subr.bf16.mxu0 0
      %3311 = vmatpush1.bf16.msra.mxu0 %v2490
      %3312 = vmatprep.subr.bf16.mxu0 0
      %3313 = vmatpush1.bf16.msra.mxu0 %v2495
      %3314 = vmatprep.subr.bf16.mxu0 0
      %3315 = vmatpush1.bf16.msra.mxu0 %v2500
      %3316 = vmatprep.subr.bf16.mxu0 0
      %3317 = vmatpush1.bf16.msra.mxu0 %v2505
      %3318 = vmatprep.subr.bf16.mxu0 0
      %3319 = vmatpush1.bf16.msra.mxu0 %v2510
      %3320 = vmatprep.subr.bf16.mxu0 0
      %3321 = vmatpush1.bf16.msra.mxu0 %v2515
      %3322 = vmatprep.subr.bf16.mxu0 0
      %3323 = vmatpush1.bf16.msra.mxu0 %v2520
      %3324 = vmatprep.subr.bf16.mxu0 0
      %3325 = vmatpush1.bf16.msra.mxu0 %v2525
      %3326 = vmatprep.mubr.bf16.mxu0 %v777
      %3327 = vmatmul.mubr.bf16.gmra.mrb[0].mxu0 %v776
      %v3328 = vpop.f32.mrb[0].mxu0
      %v3329 = vadd.f32 %v3289, %v3328
      %v3330 = vpop.f32.mrb[0].mxu0
      %v3331 = vpop.f32.mrb[0].mxu0
      %v3332 = vpop.f32.mrb[0].mxu0
      %3333 = vdwg.mxu0
      %vm3334 = vcmp.gt.f32.partialorder %v3004, 0.0
      %vm3335 = vcmp.gt.f32.partialorder %v3006, 0.0
      %vm3336 = vcmp.gt.f32.partialorder %v3168, 0.0
      %vm3337 = vcmp.gt.f32.partialorder %v3170, 0.0
      %vm3338 = vcmp.gt.f32.partialorder %v3329, 0.0
      %v3339 = vmul.f32 %v3004, 0.01
      %v3340 = vmul.f32 %v3006, 0.01
      %v3341 = vmul.f32 %v3168, 0.01
      %v3342 = vmul.f32 %v3170, 0.01
      %v3343 = vmul.f32 %v3329, 0.01
      %v3344 = vsel %vm3334, %v3004, %v3339
      %v3345 = vsel %vm3335, %v3006, %v3340
      %v3346 = vsel %vm3336, %v3168, %v3341
      %v3347 = vsel %vm3337, %v3170, %v3342
      %v3348 = vsel %vm3338, %v3329, %v3343
      %v3349 = vpack.c.bf16 %v3344, %v3344
      %v3350 = vpack.c.bf16 %v3345, %v3345
      %v3351 = vpack.c.bf16 %v3346, %v3346
      %v3352 = vpack.c.bf16 %v3347, %v3347
      %v3353 = vpack.c.bf16 %v3348, %v3348
      %v3354 = vld [vmem:[#allocation8] sm:$0xff]
      %v3355 = vld [vmem:[#allocation8 + $0x8] sm:$0xff]
      %v3356 = vld [vmem:[#allocation8 + $0x10] sm:$0xff]
      %v3357 = vld [vmem:[#allocation8 + $0x18] sm:$0xff]
      %v3358 = vld [vmem:[#allocation8 + $0x20] sm:$0xff]
      %v3359 = vld [vmem:[#allocation8 + $0x28] sm:$0xff]
      %v3360 = vld [vmem:[#allocation8 + $0x30] sm:$0xff]
      %v3361 = vld [vmem:[#allocation8 + $0x38] sm:$0xff]
      %v3362 = vld [vmem:[#allocation8 + $0x40] sm:$0xff]
      %v3363 = vld [vmem:[#allocation8 + $0x48] sm:$0xff]
      %v3364 = vld [vmem:[#allocation8 + $0x50] sm:$0xff]
      %v3365 = vld [vmem:[#allocation8 + $0x58] sm:$0xff]
      %v3366 = vld [vmem:[#allocation8 + $0x60] sm:$0xff]
      %v3367 = vld [vmem:[#allocation8 + $0x68] sm:$0xff]
      %v3368 = vld [vmem:[#allocation8 + $0x70] sm:$0xff]
      %v3369 = vld [vmem:[#allocation8 + $0x78] sm:$0xff]
      %v3370 = vld [vmem:[#allocation8 + $0x80] sm:$0xff]
      %v3371 = vld [vmem:[#allocation8 + $0x88] sm:$0xff]
      %v3372 = vld [vmem:[#allocation8 + $0x90] sm:$0xff]
      %v3373 = vld [vmem:[#allocation8 + $0x98] sm:$0xff]
      %v3374 = vld [vmem:[#allocation8 + $0xa0] sm:$0xff]
      %v3375 = vld [vmem:[#allocation8 + $0xa8] sm:$0xff]
      %v3376 = vld [vmem:[#allocation8 + $0xb0] sm:$0xff]
      %v3377 = vld [vmem:[#allocation8 + $0xb8] sm:$0xff]
      %v3378 = vld [vmem:[#allocation8 + $0xc0] sm:$0xff]
      %v3379 = vld [vmem:[#allocation8 + $0xc8] sm:$0xff]
      %v3380 = vld [vmem:[#allocation8 + $0xd0] sm:$0xff]
      %v3381 = vld [vmem:[#allocation8 + $0xd8] sm:$0xff]
      %v3382 = vld [vmem:[#allocation8 + $0xe0] sm:$0xff]
      %v3383 = vld [vmem:[#allocation8 + $0xe8] sm:$0xff]
      %v3384 = vld [vmem:[#allocation8 + $0xf0] sm:$0xff]
      %v3385 = vld [vmem:[#allocation8 + $0xf8] sm:$0xff]
      %v3386 = vld [vmem:[#allocation8 + $0x100] sm:$0xff]
      %v3387 = vld [vmem:[#allocation8 + $0x108] sm:$0xff]
      %v3388 = vld [vmem:[#allocation8 + $0x110] sm:$0xff]
      %v3389 = vld [vmem:[#allocation8 + $0x118] sm:$0xff]
      %v3390 = vld [vmem:[#allocation8 + $0x120] sm:$0xff]
      %v3391 = vld [vmem:[#allocation8 + $0x128] sm:$0xff]
      %v3392 = vld [vmem:[#allocation8 + $0x130] sm:$0xff]
      %v3393 = vld [vmem:[#allocation8 + $0x138] sm:$0xff]
      %v3394 = vld [vmem:[#allocation8 + $0x140] sm:$0xff]
      %v3395 = vld [vmem:[#allocation8 + $0x148] sm:$0xff]
      %v3396 = vld [vmem:[#allocation8 + $0x150] sm:$0xff]
      %v3397 = vld [vmem:[#allocation8 + $0x158] sm:$0xff]
      %v3398 = vld [vmem:[#allocation8 + $0x160] sm:$0xff]
      %v3399 = vld [vmem:[#allocation8 + $0x168] sm:$0xff]
      %v3400 = vld [vmem:[#allocation8 + $0x170] sm:$0xff]
      %v3401 = vld [vmem:[#allocation8 + $0x178] sm:$0xff]
      %v3402 = vld [vmem:[#allocation8 + $0x180] sm:$0xff]
      %v3403 = vld [vmem:[#allocation8 + $0x188] sm:$0xff]
      %v3404 = vld [vmem:[#allocation8 + $0x190] sm:$0xff]
      %v3405 = vld [vmem:[#allocation8 + $0x198] sm:$0xff]
      %v3406 = vld [vmem:[#allocation8 + $0x1a0] sm:$0xff]
      %v3407 = vld [vmem:[#allocation8 + $0x1a8] sm:$0xff]
      %v3408 = vld [vmem:[#allocation8 + $0x1b0] sm:$0xff]
      %v3409 = vld [vmem:[#allocation8 + $0x1b8] sm:$0xff]
      %v3410 = vld [vmem:[#allocation8 + $0x1c0] sm:$0xff]
      %v3411 = vld [vmem:[#allocation8 + $0x1c8] sm:$0xff]
      %v3412 = vld [vmem:[#allocation8 + $0x1d0] sm:$0xff]
      %v3413 = vld [vmem:[#allocation8 + $0x1d8] sm:$0xff]
      %v3414 = vld [vmem:[#allocation8 + $0x1e0] sm:$0xff]
      %v3415 = vld [vmem:[#allocation8 + $0x1e8] sm:$0xff]
      %v3416 = vld [vmem:[#allocation8 + $0x1f0] sm:$0xff]
      %v3417 = vld [vmem:[#allocation8 + $0x1f8] sm:$0xff]
      %v3418 = vld [vmem:[#allocation8 + $0x200] sm:$0xff]
      %v3419 = vld [vmem:[#allocation8 + $0x208] sm:$0xff]
      %v3420 = vld [vmem:[#allocation8 + $0x210] sm:$0xff]
      %v3421 = vld [vmem:[#allocation8 + $0x218] sm:$0xff]
      %v3422 = vld [vmem:[#allocation8 + $0x220] sm:$0xff]
      %v3423 = vld [vmem:[#allocation8 + $0x228] sm:$0xff]
      %v3424 = vld [vmem:[#allocation8 + $0x230] sm:$0xff]
      %v3425 = vld [vmem:[#allocation8 + $0x238] sm:$0xff]
      %v3426 = vld [vmem:[#allocation8 + $0x240] sm:$0xff]
      %v3427 = vld [vmem:[#allocation8 + $0x248] sm:$0xff]
      %v3428 = vld [vmem:[#allocation8 + $0x250] sm:$0xff]
      %v3429 = vld [vmem:[#allocation8 + $0x258] sm:$0xff]
      %v3430 = vld [vmem:[#allocation8 + $0x260] sm:$0xff]
      %v3431 = vld [vmem:[#allocation8 + $0x268] sm:$0xff]
      %v3432 = vld [vmem:[#allocation8 + $0x270] sm:$0xff]
      %v3433 = vld [vmem:[#allocation8 + $0x278] sm:$0xff]
      %v3434 = vld [vmem:[#allocation8 + $0x280] sm:$0xff]
      %v3435 = vld [vmem:[#allocation8 + $0x288] sm:$0xff]
      %v3436 = vld [vmem:[#allocation8 + $0x290] sm:$0xff]
      %v3437 = vld [vmem:[#allocation8 + $0x298] sm:$0xff]
      %v3438 = vld [vmem:[#allocation8 + $0x2a0] sm:$0xff]
      %v3439 = vld [vmem:[#allocation8 + $0x2a8] sm:$0xff]
      %v3440 = vld [vmem:[#allocation8 + $0x2b0] sm:$0xff]
      %v3441 = vld [vmem:[#allocation8 + $0x2b8] sm:$0xff]
      %v3442 = vld [vmem:[#allocation8 + $0x2c0] sm:$0xff]
      %v3443 = vld [vmem:[#allocation8 + $0x2c8] sm:$0xff]
      %v3444 = vld [vmem:[#allocation8 + $0x2d0] sm:$0xff]
      %v3445 = vld [vmem:[#allocation8 + $0x2d8] sm:$0xff]
      %v3446 = vld [vmem:[#allocation8 + $0x2e0] sm:$0xff]
      %v3447 = vld [vmem:[#allocation8 + $0x2e8] sm:$0xff]
      %v3448 = vld [vmem:[#allocation8 + $0x2f0] sm:$0xff]
      %v3449 = vld [vmem:[#allocation8 + $0x2f8] sm:$0xff]
      %v3450 = vld [vmem:[#allocation8 + $0x300] sm:$0xff]
      %v3451 = vld [vmem:[#allocation8 + $0x308] sm:$0xff]
      %v3452 = vld [vmem:[#allocation8 + $0x310] sm:$0xff]
      %v3453 = vld [vmem:[#allocation8 + $0x318] sm:$0xff]
      %v3454 = vld [vmem:[#allocation8 + $0x320] sm:$0xff]
      %v3455 = vld [vmem:[#allocation8 + $0x328] sm:$0xff]
      %v3456 = vld [vmem:[#allocation8 + $0x330] sm:$0xff]
      %v3457 = vld [vmem:[#allocation8 + $0x338] sm:$0xff]
      %v3458 = vld [vmem:[#allocation8 + $0x340] sm:$0xff]
      %v3459 = vld [vmem:[#allocation8 + $0x348] sm:$0xff]
      %v3460 = vld [vmem:[#allocation8 + $0x350] sm:$0xff]
      %v3461 = vld [vmem:[#allocation8 + $0x358] sm:$0xff]
      %v3462 = vld [vmem:[#allocation8 + $0x360] sm:$0xff]
      %v3463 = vld [vmem:[#allocation8 + $0x368] sm:$0xff]
      %v3464 = vld [vmem:[#allocation8 + $0x370] sm:$0xff]
      %v3465 = vld [vmem:[#allocation8 + $0x378] sm:$0xff]
      %v3466 = vld [vmem:[#allocation8 + $0x380] sm:$0xff]
      %v3467 = vld [vmem:[#allocation8 + $0x388] sm:$0xff]
      %v3468 = vld [vmem:[#allocation8 + $0x390] sm:$0xff]
      %v3469 = vld [vmem:[#allocation8 + $0x398] sm:$0xff]
      %v3470 = vld [vmem:[#allocation8 + $0x3a0] sm:$0xff]
      %v3471 = vld [vmem:[#allocation8 + $0x3a8] sm:$0xff]
      %v3472 = vld [vmem:[#allocation8 + $0x3b0] sm:$0xff]
      %v3473 = vld [vmem:[#allocation8 + $0x3b8] sm:$0xff]
      %v3474 = vld [vmem:[#allocation8 + $0x3c0] sm:$0xff]
      %v3475 = vld [vmem:[#allocation8 + $0x3c8] sm:$0xff]
      %v3476 = vld [vmem:[#allocation8 + $0x3d0] sm:$0xff]
      %v3477 = vld [vmem:[#allocation8 + $0x3d8] sm:$0xff]
      %v3478 = vld [vmem:[#allocation8 + $0x3e0] sm:$0xff]
      %v3479 = vld [vmem:[#allocation8 + $0x3e8] sm:$0xff]
      %v3480 = vld [vmem:[#allocation8 + $0x3f0] sm:$0xff]
      %v3481 = vld [vmem:[#allocation8 + $0x3f8] sm:$0xff]
      %v3482 = vld [vmem:[#allocation8 + $0x400] sm:$0xff]
      %v3483 = vld [vmem:[#allocation8 + $0x408] sm:$0xff]
      %v3484 = vld [vmem:[#allocation8 + $0x410] sm:$0xff]
      %v3485 = vld [vmem:[#allocation8 + $0x418] sm:$0xff]
      %v3486 = vld [vmem:[#allocation8 + $0x420] sm:$0xff]
      %v3487 = vld [vmem:[#allocation8 + $0x428] sm:$0xff]
      %v3488 = vld [vmem:[#allocation8 + $0x430] sm:$0xff]
      %v3489 = vld [vmem:[#allocation8 + $0x438] sm:$0xff]
      %v3490 = vld [vmem:[#allocation8 + $0x440] sm:$0xff]
      %v3491 = vld [vmem:[#allocation8 + $0x448] sm:$0xff]
      %v3492 = vld [vmem:[#allocation8 + $0x450] sm:$0xff]
      %v3493 = vld [vmem:[#allocation8 + $0x458] sm:$0xff]
      %v3494 = vld [vmem:[#allocation8 + $0x460] sm:$0xff]
      %v3495 = vld [vmem:[#allocation8 + $0x468] sm:$0xff]
      %v3496 = vld [vmem:[#allocation8 + $0x470] sm:$0xff]
      %v3497 = vld [vmem:[#allocation8 + $0x478] sm:$0xff]
      %v3498 = vld [vmem:[#allocation8 + $0x480] sm:$0xff]
      %v3499 = vld [vmem:[#allocation8 + $0x488] sm:$0xff]
      %v3500 = vld [vmem:[#allocation8 + $0x490] sm:$0xff]
      %v3501 = vld [vmem:[#allocation8 + $0x498] sm:$0xff]
      %v3502 = vld [vmem:[#allocation8 + $0x4a0] sm:$0xff]
      %v3503 = vld [vmem:[#allocation8 + $0x4a8] sm:$0xff]
      %v3504 = vld [vmem:[#allocation8 + $0x4b0] sm:$0xff]
      %v3505 = vld [vmem:[#allocation8 + $0x4b8] sm:$0xff]
      %v3506 = vld [vmem:[#allocation8 + $0x4c0] sm:$0xff]
      %v3507 = vld [vmem:[#allocation8 + $0x4c8] sm:$0xff]
      %v3508 = vld [vmem:[#allocation8 + $0x4d0] sm:$0xff]
      %v3509 = vld [vmem:[#allocation8 + $0x4d8] sm:$0xff]
      %v3510 = vld [vmem:[#allocation8 + $0x4e0] sm:$0xff]
      %v3511 = vld [vmem:[#allocation8 + $0x4e8] sm:$0xff]
      %v3512 = vld [vmem:[#allocation8 + $0x4f0] sm:$0xff]
      %v3513 = vld [vmem:[#allocation8 + $0x4f8] sm:$0xff]
      %v3514 = vlaneseq
      %v3515 = vshrl.u32 %v3514, 7
      %v3516 = vsub.s32 2, %v3515
      %v3517 = vrot.slane %v690, %v3516
      %v3518 = vlaneseq
      %v3519 = vshrl.u32 %v3518, 7
      %v3520 = vsub.s32 2, %v3519
      %v3521 = vrot.slane %v691, %v3520
      %v3522 = vlaneseq
      %v3523 = vshrl.u32 %v3522, 7
      %v3524 = vsub.s32 2, %v3523
      %v3525 = vrot.slane %v692, %v3524
      %v3526 = vlaneseq
      %v3527 = vshrl.u32 %v3526, 7
      %v3528 = vsub.s32 2, %v3527
      %v3529 = vrot.slane %v693, %v3528
      %v3690 = vunpack.c.l.b16 %v3354
      %v3691 = vunpack.c.h.b16 %v3354
      %v3692 = vunpack.c.l.b16 %v3355
      %v3693 = vunpack.c.h.b16 %v3355
      %v3694 = vunpack.c.l.b16 %v3356
      %v3695 = vunpack.c.h.b16 %v3356
      %v3696 = vunpack.c.l.b16 %v3357
      %v3697 = vunpack.c.h.b16 %v3357
      %v3698 = vunpack.c.l.b16 %v3358
      %v3699 = vunpack.c.h.b16 %v3358
      %v3700 = vunpack.c.l.b16 %v3359
      %v3701 = vunpack.c.h.b16 %v3359
      %v3702 = vunpack.c.l.b16 %v3360
      %v3703 = vunpack.c.h.b16 %v3360
      %v3704 = vunpack.c.l.b16 %v3361
      %v3705 = vunpack.c.h.b16 %v3361
      %v3706 = vunpack.c.l.b16 %v3362
      %v3707 = vunpack.c.h.b16 %v3362
      %v3708 = vunpack.c.l.b16 %v3363
      %v3709 = vunpack.c.h.b16 %v3363
      %v3710 = vunpack.c.l.b16 %v3364
      %v3711 = vunpack.c.h.b16 %v3364
      %v3712 = vunpack.c.l.b16 %v3365
      %v3713 = vunpack.c.h.b16 %v3365
      %v3714 = vunpack.c.l.b16 %v3366
      %v3715 = vunpack.c.h.b16 %v3366
      %v3716 = vunpack.c.l.b16 %v3367
      %v3717 = vunpack.c.h.b16 %v3367
      %v3718 = vunpack.c.l.b16 %v3368
      %v3719 = vunpack.c.h.b16 %v3368
      %v3720 = vunpack.c.l.b16 %v3369
      %v3721 = vunpack.c.h.b16 %v3369
      %v3722 = vunpack.c.l.b16 %v3370
      %v3723 = vunpack.c.h.b16 %v3370
      %v3724 = vunpack.c.l.b16 %v3371
      %v3725 = vunpack.c.h.b16 %v3371
      %v3726 = vunpack.c.l.b16 %v3372
      %v3727 = vunpack.c.h.b16 %v3372
      %v3728 = vunpack.c.l.b16 %v3373
      %v3729 = vunpack.c.h.b16 %v3373
      %v3730 = vunpack.c.l.b16 %v3374
      %v3731 = vunpack.c.h.b16 %v3374
      %v3732 = vunpack.c.l.b16 %v3375
      %v3733 = vunpack.c.h.b16 %v3375
      %v3734 = vunpack.c.l.b16 %v3376
      %v3735 = vunpack.c.h.b16 %v3376
      %v3736 = vunpack.c.l.b16 %v3377
      %v3737 = vunpack.c.h.b16 %v3377
      %v3738 = vunpack.c.l.b16 %v3378
      %v3739 = vunpack.c.h.b16 %v3378
      %v3740 = vunpack.c.l.b16 %v3379
      %v3741 = vunpack.c.h.b16 %v3379
      %v3742 = vunpack.c.l.b16 %v3380
      %v3743 = vunpack.c.h.b16 %v3380
      %v3744 = vunpack.c.l.b16 %v3381
      %v3745 = vunpack.c.h.b16 %v3381
      %v3746 = vunpack.c.l.b16 %v3382
      %v3747 = vunpack.c.h.b16 %v3382
      %v3748 = vunpack.c.l.b16 %v3383
      %v3749 = vunpack.c.h.b16 %v3383
      %v3750 = vunpack.c.l.b16 %v3384
      %v3751 = vunpack.c.h.b16 %v3384
      %v3752 = vunpack.c.l.b16 %v3385
      %v3753 = vunpack.c.h.b16 %v3385
      %v3754 = vunpack.c.l.b16 %v3386
      %v3755 = vunpack.c.h.b16 %v3386
      %v3756 = vunpack.c.l.b16 %v3387
      %v3757 = vunpack.c.h.b16 %v3387
      %v3758 = vunpack.c.l.b16 %v3388
      %v3759 = vunpack.c.h.b16 %v3388
      %v3760 = vunpack.c.l.b16 %v3389
      %v3761 = vunpack.c.h.b16 %v3389
      %v3762 = vunpack.c.l.b16 %v3390
      %v3763 = vunpack.c.h.b16 %v3390
      %v3764 = vunpack.c.l.b16 %v3391
      %v3765 = vunpack.c.h.b16 %v3391
      %v3766 = vunpack.c.l.b16 %v3392
      %v3767 = vunpack.c.h.b16 %v3392
      %v3768 = vunpack.c.l.b16 %v3393
      %v3769 = vunpack.c.h.b16 %v3393
      %v3770 = vunpack.c.l.b16 %v3394
      %v3771 = vunpack.c.h.b16 %v3394
      %v3772 = vunpack.c.l.b16 %v3395
      %v3773 = vunpack.c.h.b16 %v3395
      %v3774 = vunpack.c.l.b16 %v3396
      %v3775 = vunpack.c.h.b16 %v3396
      %v3776 = vunpack.c.l.b16 %v3397
      %v3777 = vunpack.c.h.b16 %v3397
      %v3778 = vunpack.c.l.b16 %v3398
      %v3779 = vunpack.c.h.b16 %v3398
      %v3780 = vunpack.c.l.b16 %v3399
      %v3781 = vunpack.c.h.b16 %v3399
      %v3782 = vunpack.c.l.b16 %v3400
      %v3783 = vunpack.c.h.b16 %v3400
      %v3784 = vunpack.c.l.b16 %v3401
      %v3785 = vunpack.c.h.b16 %v3401
      %v3786 = vunpack.c.l.b16 %v3402
      %v3787 = vunpack.c.h.b16 %v3402
      %v3788 = vunpack.c.l.b16 %v3403
      %v3789 = vunpack.c.h.b16 %v3403
      %v3790 = vunpack.c.l.b16 %v3404
      %v3791 = vunpack.c.h.b16 %v3404
      %v3792 = vunpack.c.l.b16 %v3405
      %v3793 = vunpack.c.h.b16 %v3405
      %v3794 = vunpack.c.l.b16 %v3406
      %v3795 = vunpack.c.h.b16 %v3406
      %v3796 = vunpack.c.l.b16 %v3407
      %v3797 = vunpack.c.h.b16 %v3407
      %v3798 = vunpack.c.l.b16 %v3408
      %v3799 = vunpack.c.h.b16 %v3408
      %v3800 = vunpack.c.l.b16 %v3409
      %v3801 = vunpack.c.h.b16 %v3409
      %v3802 = vunpack.c.l.b16 %v3410
      %v3803 = vunpack.c.h.b16 %v3410
      %v3804 = vunpack.c.l.b16 %v3411
      %v3805 = vunpack.c.h.b16 %v3411
      %v3806 = vunpack.c.l.b16 %v3412
      %v3807 = vunpack.c.h.b16 %v3412
      %v3808 = vunpack.c.l.b16 %v3413
      %v3809 = vunpack.c.h.b16 %v3413
      %v3810 = vunpack.c.l.b16 %v3414
      %v3811 = vunpack.c.h.b16 %v3414
      %v3812 = vunpack.c.l.b16 %v3415
      %v3813 = vunpack.c.h.b16 %v3415
      %v3814 = vunpack.c.l.b16 %v3416
      %v3815 = vunpack.c.h.b16 %v3416
      %v3816 = vunpack.c.l.b16 %v3417
      %v3817 = vunpack.c.h.b16 %v3417
      %v3818 = vunpack.c.l.b16 %v3418
      %v3819 = vunpack.c.h.b16 %v3418
      %v3820 = vunpack.c.l.b16 %v3419
      %v3821 = vunpack.c.h.b16 %v3419
      %v3822 = vunpack.c.l.b16 %v3420
      %v3823 = vunpack.c.h.b16 %v3420
      %v3824 = vunpack.c.l.b16 %v3421
      %v3825 = vunpack.c.h.b16 %v3421
      %v3826 = vunpack.c.l.b16 %v3422
      %v3827 = vunpack.c.h.b16 %v3422
      %v3828 = vunpack.c.l.b16 %v3423
      %v3829 = vunpack.c.h.b16 %v3423
      %v3830 = vunpack.c.l.b16 %v3424
      %v3831 = vunpack.c.h.b16 %v3424
      %v3832 = vunpack.c.l.b16 %v3425
      %v3833 = vunpack.c.h.b16 %v3425
      %v3834 = vunpack.c.l.b16 %v3426
      %v3835 = vunpack.c.h.b16 %v3426
      %v3836 = vunpack.c.l.b16 %v3427
      %v3837 = vunpack.c.h.b16 %v3427
      %v3838 = vunpack.c.l.b16 %v3428
      %v3839 = vunpack.c.h.b16 %v3428
      %v3840 = vunpack.c.l.b16 %v3429
      %v3841 = vunpack.c.h.b16 %v3429
      %v3842 = vunpack.c.l.b16 %v3430
      %v3843 = vunpack.c.h.b16 %v3430
      %v3844 = vunpack.c.l.b16 %v3431
      %v3845 = vunpack.c.h.b16 %v3431
      %v3846 = vunpack.c.l.b16 %v3432
      %v3847 = vunpack.c.h.b16 %v3432
      %v3848 = vunpack.c.l.b16 %v3433
      %v3849 = vunpack.c.h.b16 %v3433
      %v3850 = vunpack.c.l.b16 %v3434
      %v3851 = vunpack.c.h.b16 %v3434
      %v3852 = vunpack.c.l.b16 %v3435
      %v3853 = vunpack.c.h.b16 %v3435
      %v3854 = vunpack.c.l.b16 %v3436
      %v3855 = vunpack.c.h.b16 %v3436
      %v3856 = vunpack.c.l.b16 %v3437
      %v3857 = vunpack.c.h.b16 %v3437
      %v3858 = vunpack.c.l.b16 %v3438
      %v3859 = vunpack.c.h.b16 %v3438
      %v3860 = vunpack.c.l.b16 %v3439
      %v3861 = vunpack.c.h.b16 %v3439
      %v3862 = vunpack.c.l.b16 %v3440
      %v3863 = vunpack.c.h.b16 %v3440
      %v3864 = vunpack.c.l.b16 %v3441
      %v3865 = vunpack.c.h.b16 %v3441
      %v3866 = vunpack.c.l.b16 %v3442
      %v3867 = vunpack.c.h.b16 %v3442
      %v3868 = vunpack.c.l.b16 %v3443
      %v3869 = vunpack.c.h.b16 %v3443
      %v3870 = vunpack.c.l.b16 %v3444
      %v3871 = vunpack.c.h.b16 %v3444
      %v3872 = vunpack.c.l.b16 %v3445
      %v3873 = vunpack.c.h.b16 %v3445
      %v3874 = vunpack.c.l.b16 %v3446
      %v3875 = vunpack.c.h.b16 %v3446
      %v3876 = vunpack.c.l.b16 %v3447
      %v3877 = vunpack.c.h.b16 %v3447
      %v3878 = vunpack.c.l.b16 %v3448
      %v3879 = vunpack.c.h.b16 %v3448
      %v3880 = vunpack.c.l.b16 %v3449
      %v3881 = vunpack.c.h.b16 %v3449
      %v3882 = vunpack.c.l.b16 %v3450
      %v3883 = vunpack.c.h.b16 %v3450
      %v3884 = vunpack.c.l.b16 %v3451
      %v3885 = vunpack.c.h.b16 %v3451
      %v3886 = vunpack.c.l.b16 %v3452
      %v3887 = vunpack.c.h.b16 %v3452
      %v3888 = vunpack.c.l.b16 %v3453
      %v3889 = vunpack.c.h.b16 %v3453
      %v3890 = vunpack.c.l.b16 %v3454
      %v3891 = vunpack.c.h.b16 %v3454
      %v3892 = vunpack.c.l.b16 %v3455
      %v3893 = vunpack.c.h.b16 %v3455
      %v3894 = vunpack.c.l.b16 %v3456
      %v3895 = vunpack.c.h.b16 %v3456
      %v3896 = vunpack.c.l.b16 %v3457
      %v3897 = vunpack.c.h.b16 %v3457
      %v3898 = vunpack.c.l.b16 %v3458
      %v3899 = vunpack.c.h.b16 %v3458
      %v3900 = vunpack.c.l.b16 %v3459
      %v3901 = vunpack.c.h.b16 %v3459
      %v3902 = vunpack.c.l.b16 %v3460
      %v3903 = vunpack.c.h.b16 %v3460
      %v3904 = vunpack.c.l.b16 %v3461
      %v3905 = vunpack.c.h.b16 %v3461
      %v3906 = vunpack.c.l.b16 %v3462
      %v3907 = vunpack.c.h.b16 %v3462
      %v3908 = vunpack.c.l.b16 %v3463
      %v3909 = vunpack.c.h.b16 %v3463
      %v3910 = vunpack.c.l.b16 %v3464
      %v3911 = vunpack.c.h.b16 %v3464
      %v3912 = vunpack.c.l.b16 %v3465
      %v3913 = vunpack.c.h.b16 %v3465
      %v3914 = vunpack.c.l.b16 %v3466
      %v3915 = vunpack.c.h.b16 %v3466
      %v3916 = vunpack.c.l.b16 %v3467
      %v3917 = vunpack.c.h.b16 %v3467
      %v3918 = vunpack.c.l.b16 %v3468
      %v3919 = vunpack.c.h.b16 %v3468
      %v3920 = vunpack.c.l.b16 %v3469
      %v3921 = vunpack.c.h.b16 %v3469
      %v3922 = vunpack.c.l.b16 %v3470
      %v3923 = vunpack.c.h.b16 %v3470
      %v3924 = vunpack.c.l.b16 %v3471
      %v3925 = vunpack.c.h.b16 %v3471
      %v3926 = vunpack.c.l.b16 %v3472
      %v3927 = vunpack.c.h.b16 %v3472
      %v3928 = vunpack.c.l.b16 %v3473
      %v3929 = vunpack.c.h.b16 %v3473
      %v3930 = vunpack.c.l.b16 %v3474
      %v3931 = vunpack.c.h.b16 %v3474
      %v3932 = vunpack.c.l.b16 %v3475
      %v3933 = vunpack.c.h.b16 %v3475
      %v3934 = vunpack.c.l.b16 %v3476
      %v3935 = vunpack.c.h.b16 %v3476
      %v3936 = vunpack.c.l.b16 %v3477
      %v3937 = vunpack.c.h.b16 %v3477
      %v3938 = vunpack.c.l.b16 %v3478
      %v3939 = vunpack.c.h.b16 %v3478
      %v3940 = vunpack.c.l.b16 %v3479
      %v3941 = vunpack.c.h.b16 %v3479
      %v3942 = vunpack.c.l.b16 %v3480
      %v3943 = vunpack.c.h.b16 %v3480
      %v3944 = vunpack.c.l.b16 %v3481
      %v3945 = vunpack.c.h.b16 %v3481
      %v3946 = vunpack.c.l.b16 %v3482
      %v3947 = vunpack.c.h.b16 %v3482
      %v3948 = vunpack.c.l.b16 %v3483
      %v3949 = vunpack.c.h.b16 %v3483
      %v3950 = vunpack.c.l.b16 %v3484
      %v3951 = vunpack.c.h.b16 %v3484
      %v3952 = vunpack.c.l.b16 %v3485
      %v3953 = vunpack.c.h.b16 %v3485
      %v3954 = vunpack.c.l.b16 %v3486
      %v3955 = vunpack.c.h.b16 %v3486
      %v3956 = vunpack.c.l.b16 %v3487
      %v3957 = vunpack.c.h.b16 %v3487
      %v3958 = vunpack.c.l.b16 %v3488
      %v3959 = vunpack.c.h.b16 %v3488
      %v3960 = vunpack.c.l.b16 %v3489
      %v3961 = vunpack.c.h.b16 %v3489
      %v3962 = vunpack.c.l.b16 %v3490
      %v3963 = vunpack.c.h.b16 %v3490
      %v3964 = vunpack.c.l.b16 %v3491
      %v3965 = vunpack.c.h.b16 %v3491
      %v3966 = vunpack.c.l.b16 %v3492
      %v3967 = vunpack.c.h.b16 %v3492
      %v3968 = vunpack.c.l.b16 %v3493
      %v3969 = vunpack.c.h.b16 %v3493
      %v3970 = vunpack.c.l.b16 %v3494
      %v3971 = vunpack.c.h.b16 %v3494
      %v3972 = vunpack.c.l.b16 %v3495
      %v3973 = vunpack.c.h.b16 %v3495
      %v3974 = vunpack.c.l.b16 %v3496
      %v3975 = vunpack.c.h.b16 %v3496
      %v3976 = vunpack.c.l.b16 %v3497
      %v3977 = vunpack.c.h.b16 %v3497
      %v3978 = vunpack.c.l.b16 %v3498
      %v3979 = vunpack.c.h.b16 %v3498
      %v3980 = vunpack.c.l.b16 %v3499
      %v3981 = vunpack.c.h.b16 %v3499
      %v3982 = vunpack.c.l.b16 %v3500
      %v3983 = vunpack.c.h.b16 %v3500
      %v3984 = vunpack.c.l.b16 %v3501
      %v3985 = vunpack.c.h.b16 %v3501
      %v3986 = vunpack.c.l.b16 %v3502
      %v3987 = vunpack.c.h.b16 %v3502
      %v3988 = vunpack.c.l.b16 %v3503
      %v3989 = vunpack.c.h.b16 %v3503
      %v3990 = vunpack.c.l.b16 %v3504
      %v3991 = vunpack.c.h.b16 %v3504
      %v3992 = vunpack.c.l.b16 %v3505
      %v3993 = vunpack.c.h.b16 %v3505
      %v3994 = vunpack.c.l.b16 %v3506
      %v3995 = vunpack.c.h.b16 %v3506
      %v3996 = vunpack.c.l.b16 %v3507
      %v3997 = vunpack.c.h.b16 %v3507
      %v3998 = vunpack.c.l.b16 %v3508
      %v3999 = vunpack.c.h.b16 %v3508
      %v4000 = vunpack.c.l.b16 %v3509
      %v4001 = vunpack.c.h.b16 %v3509
      %v4002 = vunpack.c.l.b16 %v3510
      %v4003 = vunpack.c.h.b16 %v3510
      %v4004 = vunpack.c.l.b16 %v3511
      %v4005 = vunpack.c.h.b16 %v3511
      %v4006 = vunpack.c.l.b16 %v3512
      %v4007 = vunpack.c.h.b16 %v3512
      %v4008 = vunpack.c.l.b16 %v3513
      %v4009 = vunpack.c.h.b16 %v3513
      %v4010 = vpack.c.b16 %v3694, %v3690
      %v4011 = vpack.c.b16 %v3695, %v3691
      %v4012 = vpack.c.b16 %v3696, %v3692
      %v4013 = vpack.c.b16 %v3697, %v3693
      %v4014 = vpack.c.b16 %v3702, %v3698
      %v4015 = vpack.c.b16 %v3703, %v3699
      %v4016 = vpack.c.b16 %v3704, %v3700
      %v4017 = vpack.c.b16 %v3705, %v3701
      %v4018 = vpack.c.b16 %v3710, %v3706
      %v4019 = vpack.c.b16 %v3711, %v3707
      %v4020 = vpack.c.b16 %v3712, %v3708
      %v4021 = vpack.c.b16 %v3713, %v3709
      %v4022 = vpack.c.b16 %v3718, %v3714
      %v4023 = vpack.c.b16 %v3719, %v3715
      %v4024 = vpack.c.b16 %v3720, %v3716
      %v4025 = vpack.c.b16 %v3721, %v3717
      %v4026 = vpack.c.b16 %v3726, %v3722
      %v4027 = vpack.c.b16 %v3727, %v3723
      %v4028 = vpack.c.b16 %v3728, %v3724
      %v4029 = vpack.c.b16 %v3729, %v3725
      %v4030 = vpack.c.b16 %v3734, %v3730
      %v4031 = vpack.c.b16 %v3735, %v3731
      %v4032 = vpack.c.b16 %v3736, %v3732
      %v4033 = vpack.c.b16 %v3737, %v3733
      %v4034 = vpack.c.b16 %v3742, %v3738
      %v4035 = vpack.c.b16 %v3743, %v3739
      %v4036 = vpack.c.b16 %v3744, %v3740
      %v4037 = vpack.c.b16 %v3745, %v3741
      %v4038 = vpack.c.b16 %v3750, %v3746
      %v4039 = vpack.c.b16 %v3751, %v3747
      %v4040 = vpack.c.b16 %v3752, %v3748
      %v4041 = vpack.c.b16 %v3753, %v3749
      %v4042 = vpack.c.b16 %v3758, %v3754
      %v4043 = vpack.c.b16 %v3759, %v3755
      %v4044 = vpack.c.b16 %v3760, %v3756
      %v4045 = vpack.c.b16 %v3761, %v3757
      %v4046 = vpack.c.b16 %v3766, %v3762
      %v4047 = vpack.c.b16 %v3767, %v3763
      %v4048 = vpack.c.b16 %v3768, %v3764
      %v4049 = vpack.c.b16 %v3769, %v3765
      %v4050 = vpack.c.b16 %v3774, %v3770
      %v4051 = vpack.c.b16 %v3775, %v3771
      %v4052 = vpack.c.b16 %v3776, %v3772
      %v4053 = vpack.c.b16 %v3777, %v3773
      %v4054 = vpack.c.b16 %v3782, %v3778
      %v4055 = vpack.c.b16 %v3783, %v3779
      %v4056 = vpack.c.b16 %v3784, %v3780
      %v4057 = vpack.c.b16 %v3785, %v3781
      %v4058 = vpack.c.b16 %v3790, %v3786
      %v4059 = vpack.c.b16 %v3791, %v3787
      %v4060 = vpack.c.b16 %v3792, %v3788
      %v4061 = vpack.c.b16 %v3793, %v3789
      %v4062 = vpack.c.b16 %v3798, %v3794
      %v4063 = vpack.c.b16 %v3799, %v3795
      %v4064 = vpack.c.b16 %v3800, %v3796
      %v4065 = vpack.c.b16 %v3801, %v3797
      %v4066 = vpack.c.b16 %v3806, %v3802
      %v4067 = vpack.c.b16 %v3807, %v3803
      %v4068 = vpack.c.b16 %v3808, %v3804
      %v4069 = vpack.c.b16 %v3809, %v3805
      %v4070 = vpack.c.b16 %v3814, %v3810
      %v4071 = vpack.c.b16 %v3815, %v3811
      %v4072 = vpack.c.b16 %v3816, %v3812
      %v4073 = vpack.c.b16 %v3817, %v3813
      %v4074 = vpack.c.b16 %v3822, %v3818
      %v4075 = vpack.c.b16 %v3823, %v3819
      %v4076 = vpack.c.b16 %v3824, %v3820
      %v4077 = vpack.c.b16 %v3825, %v3821
      %v4078 = vpack.c.b16 %v3830, %v3826
      %v4079 = vpack.c.b16 %v3831, %v3827
      %v4080 = vpack.c.b16 %v3832, %v3828
      %v4081 = vpack.c.b16 %v3833, %v3829
      %v4082 = vpack.c.b16 %v3838, %v3834
      %v4083 = vpack.c.b16 %v3839, %v3835
      %v4084 = vpack.c.b16 %v3840, %v3836
      %v4085 = vpack.c.b16 %v3841, %v3837
      %v4086 = vpack.c.b16 %v3846, %v3842
      %v4087 = vpack.c.b16 %v3847, %v3843
      %v4088 = vpack.c.b16 %v3848, %v3844
      %v4089 = vpack.c.b16 %v3849, %v3845
      %v4090 = vpack.c.b16 %v3854, %v3850
      %v4091 = vpack.c.b16 %v3855, %v3851
      %v4092 = vpack.c.b16 %v3856, %v3852
      %v4093 = vpack.c.b16 %v3857, %v3853
      %v4094 = vpack.c.b16 %v3862, %v3858
      %v4095 = vpack.c.b16 %v3863, %v3859
      %v4096 = vpack.c.b16 %v3864, %v3860
      %v4097 = vpack.c.b16 %v3865, %v3861
      %v4098 = vpack.c.b16 %v3870, %v3866
      %v4099 = vpack.c.b16 %v3871, %v3867
      %v4100 = vpack.c.b16 %v3872, %v3868
      %v4101 = vpack.c.b16 %v3873, %v3869
      %v4102 = vpack.c.b16 %v3878, %v3874
      %v4103 = vpack.c.b16 %v3879, %v3875
      %v4104 = vpack.c.b16 %v3880, %v3876
      %v4105 = vpack.c.b16 %v3881, %v3877
      %v4106 = vpack.c.b16 %v3886, %v3882
      %v4107 = vpack.c.b16 %v3887, %v3883
      %v4108 = vpack.c.b16 %v3888, %v3884
      %v4109 = vpack.c.b16 %v3889, %v3885
      %v4110 = vpack.c.b16 %v3894, %v3890
      %v4111 = vpack.c.b16 %v3895, %v3891
      %v4112 = vpack.c.b16 %v3896, %v3892
      %v4113 = vpack.c.b16 %v3897, %v3893
      %v4114 = vpack.c.b16 %v3902, %v3898
      %v4115 = vpack.c.b16 %v3903, %v3899
      %v4116 = vpack.c.b16 %v3904, %v3900
      %v4117 = vpack.c.b16 %v3905, %v3901
      %v4118 = vpack.c.b16 %v3910, %v3906
      %v4119 = vpack.c.b16 %v3911, %v3907
      %v4120 = vpack.c.b16 %v3912, %v3908
      %v4121 = vpack.c.b16 %v3913, %v3909
      %v4122 = vpack.c.b16 %v3918, %v3914
      %v4123 = vpack.c.b16 %v3919, %v3915
      %v4124 = vpack.c.b16 %v3920, %v3916
      %v4125 = vpack.c.b16 %v3921, %v3917
      %v4126 = vpack.c.b16 %v3926, %v3922
      %v4127 = vpack.c.b16 %v3927, %v3923
      %v4128 = vpack.c.b16 %v3928, %v3924
      %v4129 = vpack.c.b16 %v3929, %v3925
      %v4130 = vpack.c.b16 %v3934, %v3930
      %v4131 = vpack.c.b16 %v3935, %v3931
      %v4132 = vpack.c.b16 %v3936, %v3932
      %v4133 = vpack.c.b16 %v3937, %v3933
      %v4134 = vpack.c.b16 %v3942, %v3938
      %v4135 = vpack.c.b16 %v3943, %v3939
      %v4136 = vpack.c.b16 %v3944, %v3940
      %v4137 = vpack.c.b16 %v3945, %v3941
      %v4138 = vpack.c.b16 %v3950, %v3946
      %v4139 = vpack.c.b16 %v3951, %v3947
      %v4140 = vpack.c.b16 %v3952, %v3948
      %v4141 = vpack.c.b16 %v3953, %v3949
      %v4142 = vpack.c.b16 %v3958, %v3954
      %v4143 = vpack.c.b16 %v3959, %v3955
      %v4144 = vpack.c.b16 %v3960, %v3956
      %v4145 = vpack.c.b16 %v3961, %v3957
      %v4146 = vpack.c.b16 %v3966, %v3962
      %v4147 = vpack.c.b16 %v3967, %v3963
      %v4148 = vpack.c.b16 %v3968, %v3964
      %v4149 = vpack.c.b16 %v3969, %v3965
      %v4150 = vpack.c.b16 %v3974, %v3970
      %v4151 = vpack.c.b16 %v3975, %v3971
      %v4152 = vpack.c.b16 %v3976, %v3972
      %v4153 = vpack.c.b16 %v3977, %v3973
      %v4154 = vpack.c.b16 %v3982, %v3978
      %v4155 = vpack.c.b16 %v3983, %v3979
      %v4156 = vpack.c.b16 %v3984, %v3980
      %v4157 = vpack.c.b16 %v3985, %v3981
      %v4158 = vpack.c.b16 %v3990, %v3986
      %v4159 = vpack.c.b16 %v3991, %v3987
      %v4160 = vpack.c.b16 %v3992, %v3988
      %v4161 = vpack.c.b16 %v3993, %v3989
      %v4162 = vpack.c.b16 %v3998, %v3994
      %v4163 = vpack.c.b16 %v3999, %v3995
      %v4164 = vpack.c.b16 %v4000, %v3996
      %v4165 = vpack.c.b16 %v4001, %v3997
      %v4166 = vpack.c.b16 %v4006, %v4002
      %v4167 = vpack.c.b16 %v4007, %v4003
      %v4168 = vpack.c.b16 %v4008, %v4004
      %v4169 = vpack.c.b16 %v4009, %v4005
      %4330 = vmatprep.subr.bf16.mxu0 %v4011
      %4331 = vmatpush1.bf16.msra.mxu0 %v4010
      %4332 = vmatprep.subr.bf16.mxu0 %v4015
      %4333 = vmatpush1.bf16.msra.mxu0 %v4014
      %4334 = vmatprep.subr.bf16.mxu0 %v4019
      %4335 = vmatpush1.bf16.msra.mxu0 %v4018
      %4336 = vmatprep.subr.bf16.mxu0 %v4023
      %4337 = vmatpush1.bf16.msra.mxu0 %v4022
      %4338 = vmatprep.subr.bf16.mxu0 %v4027
      %4339 = vmatpush1.bf16.msra.mxu0 %v4026
      %4340 = vmatprep.subr.bf16.mxu0 %v4031
      %4341 = vmatpush1.bf16.msra.mxu0 %v4030
      %4342 = vmatprep.subr.bf16.mxu0 %v4035
      %4343 = vmatpush1.bf16.msra.mxu0 %v4034
      %4344 = vmatprep.subr.bf16.mxu0 %v4039
      %4345 = vmatpush1.bf16.msra.mxu0 %v4038
      %4346 = vmatprep.subr.bf16.mxu0 %v4043
      %4347 = vmatpush1.bf16.msra.mxu0 %v4042
      %4348 = vmatprep.subr.bf16.mxu0 %v4047
      %4349 = vmatpush1.bf16.msra.mxu0 %v4046
      %4350 = vmatprep.subr.bf16.mxu0 %v4051
      %4351 = vmatpush1.bf16.msra.mxu0 %v4050
      %4352 = vmatprep.subr.bf16.mxu0 %v4055
      %4353 = vmatpush1.bf16.msra.mxu0 %v4054
      %4354 = vmatprep.subr.bf16.mxu0 %v4059
      %4355 = vmatpush1.bf16.msra.mxu0 %v4058
      %4356 = vmatprep.subr.bf16.mxu0 %v4063
      %4357 = vmatpush1.bf16.msra.mxu0 %v4062
      %4358 = vmatprep.subr.bf16.mxu0 %v4067
      %4359 = vmatpush1.bf16.msra.mxu0 %v4066
      %4360 = vmatprep.subr.bf16.mxu0 %v4071
      %4361 = vmatpush1.bf16.msra.mxu0 %v4070
      %4362 = vmatprep.mubr.bf16.mxu0 %v3350
      %4363 = vmatmul.mubr.bf16.gmra.mrb[0].mxu0 %v3349
      %v4364 = vpop.f32.mrb[0].mxu0
      %v4365 = vadd.f32 %v3517, %v4364
      %v4366 = vpop.f32.mrb[0].mxu0
      %v4367 = vadd.f32 %v3521, %v4366
      %v4368 = vpop.f32.mrb[0].mxu0
      %v4369 = vpop.f32.mrb[0].mxu0
      %4370 = vdwg.mxu0
      %4371 = vmatprep.subr.bf16.mxu0 %v4075
      %4372 = vmatpush1.bf16.msra.mxu0 %v4074
      %4373 = vmatprep.subr.bf16.mxu0 %v4079
      %4374 = vmatpush1.bf16.msra.mxu0 %v4078
      %4375 = vmatprep.subr.bf16.mxu0 %v4083
      %4376 = vmatpush1.bf16.msra.mxu0 %v4082
      %4377 = vmatprep.subr.bf16.mxu0 %v4087
      %4378 = vmatpush1.bf16.msra.mxu0 %v4086
      %4379 = vmatprep.subr.bf16.mxu0 %v4091
      %4380 = vmatpush1.bf16.msra.mxu0 %v4090
      %4381 = vmatprep.subr.bf16.mxu0 %v4095
      %4382 = vmatpush1.bf16.msra.mxu0 %v4094
      %4383 = vmatprep.subr.bf16.mxu0 %v4099
      %4384 = vmatpush1.bf16.msra.mxu0 %v4098
      %4385 = vmatprep.subr.bf16.mxu0 %v4103
      %4386 = vmatpush1.bf16.msra.mxu0 %v4102
      %4387 = vmatprep.subr.bf16.mxu0 %v4107
      %4388 = vmatpush1.bf16.msra.mxu0 %v4106
      %4389 = vmatprep.subr.bf16.mxu0 %v4111
      %4390 = vmatpush1.bf16.msra.mxu0 %v4110
      %4391 = vmatprep.subr.bf16.mxu0 %v4115
      %4392 = vmatpush1.bf16.msra.mxu0 %v4114
      %4393 = vmatprep.subr.bf16.mxu0 %v4119
      %4394 = vmatpush1.bf16.msra.mxu0 %v4118
      %4395 = vmatprep.subr.bf16.mxu0 %v4123
      %4396 = vmatpush1.bf16.msra.mxu0 %v4122
      %4397 = vmatprep.subr.bf16.mxu0 %v4127
      %4398 = vmatpush1.bf16.msra.mxu0 %v4126
      %4399 = vmatprep.subr.bf16.mxu0 %v4131
      %4400 = vmatpush1.bf16.msra.mxu0 %v4130
      %4401 = vmatprep.subr.bf16.mxu0 %v4135
      %4402 = vmatpush1.bf16.msra.mxu0 %v4134
      %4403 = vmatprep.mubr.bf16.mxu0 %v3352
      %4404 = vmatmul.mubr.bf16.gmra.mrb[0].mxu0 %v3351
      %v4405 = vpop.f32.mrb[0].mxu0
      %v4406 = vadd.f32 %v4365, %v4405
      %v4407 = vpop.f32.mrb[0].mxu0
      %v4408 = vadd.f32 %v4367, %v4407
      %v4409 = vpop.f32.mrb[0].mxu0
      %v4410 = vpop.f32.mrb[0].mxu0
      %4411 = vdwg.mxu0
      %4412 = vmatprep.subr.bf16.mxu0 %v4139
      %4413 = vmatpush1.bf16.msra.mxu0 %v4138
      %4414 = vmatprep.subr.bf16.mxu0 %v4143
      %4415 = vmatpush1.bf16.msra.mxu0 %v4142
      %4416 = vmatprep.subr.bf16.mxu0 %v4147
      %4417 = vmatpush1.bf16.msra.mxu0 %v4146
      %4418 = vmatprep.subr.bf16.mxu0 %v4151
      %4419 = vmatpush1.bf16.msra.mxu0 %v4150
      %4420 = vmatprep.subr.bf16.mxu0 %v4155
      %4421 = vmatpush1.bf16.msra.mxu0 %v4154
      %4422 = vmatprep.subr.bf16.mxu0 %v4159
      %4423 = vmatpush1.bf16.msra.mxu0 %v4158
      %4424 = vmatprep.subr.bf16.mxu0 %v4163
      %4425 = vmatpush1.bf16.msra.mxu0 %v4162
      %4426 = vmatprep.subr.bf16.mxu0 %v4167
      %4427 = vmatpush1.bf16.msra.mxu0 %v4166
      %4428 = vmatprep.subr.bf16.mxu0 0
      %4429 = vmatpush1.bf16.msra.mxu0 0
      %4430 = vmatprep.subr.bf16.mxu0 0
      %4431 = vmatpush1.bf16.msra.mxu0 0
      %4432 = vmatprep.subr.bf16.mxu0 0
      %4433 = vmatpush1.bf16.msra.mxu0 0
      %4434 = vmatprep.subr.bf16.mxu0 0
      %4435 = vmatpush1.bf16.msra.mxu0 0
      %4436 = vmatprep.subr.bf16.mxu0 0
      %4437 = vmatpush1.bf16.msra.mxu0 0
      %4438 = vmatprep.subr.bf16.mxu0 0
      %4439 = vmatpush1.bf16.msra.mxu0 0
      %4440 = vmatprep.subr.bf16.mxu0 0
      %4441 = vmatpush1.bf16.msra.mxu0 0
      %4442 = vmatprep.subr.bf16.mxu0 0
      %4443 = vmatpush1.bf16.msra.mxu0 0
      %4444 = vmatprep.mubr.bf16.mxu0 0
      %4445 = vmatmul.mubr.bf16.gmra.mrb[0].mxu0 %v3353
      %v4446 = vpop.f32.mrb[0].mxu0
      %v4447 = vadd.f32 %v4406, %v4446
      %v4448 = vpop.f32.mrb[0].mxu0
      %v4449 = vadd.f32 %v4408, %v4448
      %v4450 = vpop.f32.mrb[0].mxu0
      %v4451 = vpop.f32.mrb[0].mxu0
      %4452 = vdwg.mxu0
      %4453 = vmatprep.subr.bf16.mxu0 %v4013
      %4454 = vmatpush1.bf16.msra.mxu0 %v4012
      %4455 = vmatprep.subr.bf16.mxu0 %v4017
      %4456 = vmatpush1.bf16.msra.mxu0 %v4016
      %4457 = vmatprep.subr.bf16.mxu0 %v4021
      %4458 = vmatpush1.bf16.msra.mxu0 %v4020
      %4459 = vmatprep.subr.bf16.mxu0 %v4025
      %4460 = vmatpush1.bf16.msra.mxu0 %v4024
      %4461 = vmatprep.subr.bf16.mxu0 %v4029
      %4462 = vmatpush1.bf16.msra.mxu0 %v4028
      %4463 = vmatprep.subr.bf16.mxu0 %v4033
      %4464 = vmatpush1.bf16.msra.mxu0 %v4032
      %4465 = vmatprep.subr.bf16.mxu0 %v4037
      %4466 = vmatpush1.bf16.msra.mxu0 %v4036
      %4467 = vmatprep.subr.bf16.mxu0 %v4041
      %4468 = vmatpush1.bf16.msra.mxu0 %v4040
      %4469 = vmatprep.subr.bf16.mxu0 %v4045
      %4470 = vmatpush1.bf16.msra.mxu0 %v4044
      %4471 = vmatprep.subr.bf16.mxu0 %v4049
      %4472 = vmatpush1.bf16.msra.mxu0 %v4048
      %4473 = vmatprep.subr.bf16.mxu0 %v4053
      %4474 = vmatpush1.bf16.msra.mxu0 %v4052
      %4475 = vmatprep.subr.bf16.mxu0 %v4057
      %4476 = vmatpush1.bf16.msra.mxu0 %v4056
      %4477 = vmatprep.subr.bf16.mxu0 %v4061
      %4478 = vmatpush1.bf16.msra.mxu0 %v4060
      %4479 = vmatprep.subr.bf16.mxu0 %v4065
      %4480 = vmatpush1.bf16.msra.mxu0 %v4064
      %4481 = vmatprep.subr.bf16.mxu0 %v4069
      %4482 = vmatpush1.bf16.msra.mxu0 %v4068
      %4483 = vmatprep.subr.bf16.mxu0 %v4073
      %4484 = vmatpush1.bf16.msra.mxu0 %v4072
      %4485 = vmatprep.mubr.bf16.mxu0 %v3350
      %4486 = vmatmul.mubr.bf16.gmra.mrb[0].mxu0 %v3349
      %v4487 = vpop.f32.mrb[0].mxu0
      %v4488 = vadd.f32 %v3525, %v4487
      %v4489 = vpop.f32.mrb[0].mxu0
      %v4490 = vadd.f32 %v3529, %v4489
      %v4491 = vpop.f32.mrb[0].mxu0
      %v4492 = vpop.f32.mrb[0].mxu0
      %4493 = vdwg.mxu0
      %4494 = vmatprep.subr.bf16.mxu0 %v4077
      %4495 = vmatpush1.bf16.msra.mxu0 %v4076
      %4496 = vmatprep.subr.bf16.mxu0 %v4081
      %4497 = vmatpush1.bf16.msra.mxu0 %v4080
      %4498 = vmatprep.subr.bf16.mxu0 %v4085
      %4499 = vmatpush1.bf16.msra.mxu0 %v4084
      %4500 = vmatprep.subr.bf16.mxu0 %v4089
      %4501 = vmatpush1.bf16.msra.mxu0 %v4088
      %4502 = vmatprep.subr.bf16.mxu0 %v4093
      %4503 = vmatpush1.bf16.msra.mxu0 %v4092
      %4504 = vmatprep.subr.bf16.mxu0 %v4097
      %4505 = vmatpush1.bf16.msra.mxu0 %v4096
      %4506 = vmatprep.subr.bf16.mxu0 %v4101
      %4507 = vmatpush1.bf16.msra.mxu0 %v4100
      %4508 = vmatprep.subr.bf16.mxu0 %v4105
      %4509 = vmatpush1.bf16.msra.mxu0 %v4104
      %4510 = vmatprep.subr.bf16.mxu0 %v4109
      %4511 = vmatpush1.bf16.msra.mxu0 %v4108
      %4512 = vmatprep.subr.bf16.mxu0 %v4113
      %4513 = vmatpush1.bf16.msra.mxu0 %v4112
      %4514 = vmatprep.subr.bf16.mxu0 %v4117
      %4515 = vmatpush1.bf16.msra.mxu0 %v4116
      %4516 = vmatprep.subr.bf16.mxu0 %v4121
      %4517 = vmatpush1.bf16.msra.mxu0 %v4120
      %4518 = vmatprep.subr.bf16.mxu0 %v4125
      %4519 = vmatpush1.bf16.msra.mxu0 %v4124
      %4520 = vmatprep.subr.bf16.mxu0 %v4129
      %4521 = vmatpush1.bf16.msra.mxu0 %v4128
      %4522 = vmatprep.subr.bf16.mxu0 %v4133
      %4523 = vmatpush1.bf16.msra.mxu0 %v4132
      %4524 = vmatprep.subr.bf16.mxu0 %v4137
      %4525 = vmatpush1.bf16.msra.mxu0 %v4136
      %4526 = vmatprep.mubr.bf16.mxu0 %v3352
      %4527 = vmatmul.mubr.bf16.gmra.mrb[0].mxu0 %v3351
      %v4528 = vpop.f32.mrb[0].mxu0
      %v4529 = vadd.f32 %v4488, %v4528
      %v4530 = vpop.f32.mrb[0].mxu0
      %v4531 = vadd.f32 %v4490, %v4530
      %v4532 = vpop.f32.mrb[0].mxu0
      %v4533 = vpop.f32.mrb[0].mxu0
      %4534 = vdwg.mxu0
      %4535 = vmatprep.subr.bf16.mxu0 %v4141
      %4536 = vmatpush1.bf16.msra.mxu0 %v4140
      %4537 = vmatprep.subr.bf16.mxu0 %v4145
      %4538 = vmatpush1.bf16.msra.mxu0 %v4144
      %4539 = vmatprep.subr.bf16.mxu0 %v4149
      %4540 = vmatpush1.bf16.msra.mxu0 %v4148
      %4541 = vmatprep.subr.bf16.mxu0 %v4153
      %4542 = vmatpush1.bf16.msra.mxu0 %v4152
      %4543 = vmatprep.subr.bf16.mxu0 %v4157
      %4544 = vmatpush1.bf16.msra.mxu0 %v4156
      %4545 = vmatprep.subr.bf16.mxu0 %v4161
      %4546 = vmatpush1.bf16.msra.mxu0 %v4160
      %4547 = vmatprep.subr.bf16.mxu0 %v4165
      %4548 = vmatpush1.bf16.msra.mxu0 %v4164
      %4549 = vmatprep.subr.bf16.mxu0 %v4169
      %4550 = vmatpush1.bf16.msra.mxu0 %v4168
      %4551 = vmatprep.subr.bf16.mxu0 0
      %4552 = vmatpush1.bf16.msra.mxu0 0
      %4553 = vmatprep.subr.bf16.mxu0 0
      %4554 = vmatpush1.bf16.msra.mxu0 0
      %4555 = vmatprep.subr.bf16.mxu0 0
      %4556 = vmatpush1.bf16.msra.mxu0 0
      %4557 = vmatprep.subr.bf16.mxu0 0
      %4558 = vmatpush1.bf16.msra.mxu0 0
      %4559 = vmatprep.subr.bf16.mxu0 0
      %4560 = vmatpush1.bf16.msra.mxu0 0
      %4561 = vmatprep.subr.bf16.mxu0 0
      %4562 = vmatpush1.bf16.msra.mxu0 0
      %4563 = vmatprep.subr.bf16.mxu0 0
      %4564 = vmatpush1.bf16.msra.mxu0 0
      %4565 = vmatprep.subr.bf16.mxu0 0
      %4566 = vmatpush1.bf16.msra.mxu0 0
      %4567 = vmatprep.mubr.bf16.mxu0 0
      %4568 = vmatmul.mubr.bf16.gmra.mrb[0].mxu0 %v3353
      %v4569 = vpop.f32.mrb[0].mxu0
      %v4570 = vadd.f32 %v4529, %v4569
      %v4571 = vpop.f32.mrb[0].mxu0
      %v4572 = vadd.f32 %v4531, %v4571
      %v4573 = vpop.f32.mrb[0].mxu0
      %v4574 = vpop.f32.mrb[0].mxu0
      %4575 = vdwg.mxu0
      %vm4576 = vcmp.gt.f32.partialorder %v4447, 0.0
      %vm4577 = vcmp.gt.f32.partialorder %v4449, 0.0
      %vm4578 = vcmp.gt.f32.partialorder %v4570, 0.0
      %vm4579 = vcmp.gt.f32.partialorder %v4572, 0.0
      %v4580 = vmul.f32 %v4447, 0.01
      %v4581 = vmul.f32 %v4449, 0.01
      %v4582 = vmul.f32 %v4570, 0.01
      %v4583 = vmul.f32 %v4572, 0.01
      %v4584 = vsel %vm4576, %v4447, %v4580
      %v4585 = vsel %vm4577, %v4449, %v4581
      %v4586 = vsel %vm4578, %v4570, %v4582
      %v4587 = vsel %vm4579, %v4572, %v4583
      %v4588 = vpack.c.bf16 %v4584, %v4584
      %v4589 = vpack.c.bf16 %v4585, %v4585
      %v4590 = vpack.c.bf16 %v4586, %v4586
      %v4591 = vpack.c.bf16 %v4587, %v4587
      %v4592 = vld [vmem:[#allocation10] sm:$0xf]
      %v4593 = vld [vmem:[#allocation10 + $0x4] sm:$0xf]
      %v4594 = vld [vmem:[#allocation10 + $0x8] sm:$0xf]
      %v4595 = vld [vmem:[#allocation10 + $0xc] sm:$0xf]
      %v4596 = vld [vmem:[#allocation10 + $0x10] sm:$0xf]
      %v4597 = vld [vmem:[#allocation10 + $0x14] sm:$0xf]
      %v4598 = vld [vmem:[#allocation10 + $0x18] sm:$0xf]
      %v4599 = vld [vmem:[#allocation10 + $0x1c] sm:$0xf]
      %v4600 = vld [vmem:[#allocation10 + $0x20] sm:$0xf]
      %v4601 = vld [vmem:[#allocation10 + $0x24] sm:$0xf]
      %v4602 = vld [vmem:[#allocation10 + $0x28] sm:$0xf]
      %v4603 = vld [vmem:[#allocation10 + $0x2c] sm:$0xf]
      %v4604 = vld [vmem:[#allocation10 + $0x30] sm:$0xf]
      %v4605 = vld [vmem:[#allocation10 + $0x34] sm:$0xf]
      %v4606 = vld [vmem:[#allocation10 + $0x38] sm:$0xf]
      %v4607 = vld [vmem:[#allocation10 + $0x3c] sm:$0xf]
      %v4608 = vld [vmem:[#allocation10 + $0x40] sm:$0xf]
      %v4609 = vld [vmem:[#allocation10 + $0x44] sm:$0xf]
      %v4610 = vld [vmem:[#allocation10 + $0x48] sm:$0xf]
      %v4611 = vld [vmem:[#allocation10 + $0x4c] sm:$0xf]
      %v4612 = vld [vmem:[#allocation10 + $0x50] sm:$0xf]
      %v4613 = vld [vmem:[#allocation10 + $0x54] sm:$0xf]
      %v4614 = vld [vmem:[#allocation10 + $0x58] sm:$0xf]
      %v4615 = vld [vmem:[#allocation10 + $0x5c] sm:$0xf]
      %v4616 = vld [vmem:[#allocation10 + $0x60] sm:$0xf]
      %v4617 = vld [vmem:[#allocation10 + $0x64] sm:$0xf]
      %v4618 = vld [vmem:[#allocation10 + $0x68] sm:$0xf]
      %v4619 = vld [vmem:[#allocation10 + $0x6c] sm:$0xf]
      %v4620 = vld [vmem:[#allocation10 + $0x70] sm:$0xf]
      %v4621 = vld [vmem:[#allocation10 + $0x74] sm:$0xf]
      %v4622 = vld [vmem:[#allocation10 + $0x78] sm:$0xf]
      %v4623 = vld [vmem:[#allocation10 + $0x7c] sm:$0xf]
      %v4624 = vld [vmem:[#allocation10 + $0x80] sm:$0xf]
      %v4625 = vld [vmem:[#allocation10 + $0x84] sm:$0xf]
      %v4626 = vld [vmem:[#allocation10 + $0x88] sm:$0xf]
      %v4627 = vld [vmem:[#allocation10 + $0x8c] sm:$0xf]
      %v4628 = vld [vmem:[#allocation10 + $0x90] sm:$0xf]
      %v4629 = vld [vmem:[#allocation10 + $0x94] sm:$0xf]
      %v4630 = vld [vmem:[#allocation10 + $0x98] sm:$0xf]
      %v4631 = vld [vmem:[#allocation10 + $0x9c] sm:$0xf]
      %v4632 = vld [vmem:[#allocation10 + $0xa0] sm:$0xf]
      %v4633 = vld [vmem:[#allocation10 + $0xa4] sm:$0xf]
      %v4634 = vld [vmem:[#allocation10 + $0xa8] sm:$0xf]
      %v4635 = vld [vmem:[#allocation10 + $0xac] sm:$0xf]
      %v4636 = vld [vmem:[#allocation10 + $0xb0] sm:$0xf]
      %v4637 = vld [vmem:[#allocation10 + $0xb4] sm:$0xf]
      %v4638 = vld [vmem:[#allocation10 + $0xb8] sm:$0xf]
      %v4639 = vld [vmem:[#allocation10 + $0xbc] sm:$0xf]
      %v4640 = vld [vmem:[#allocation10 + $0xc0] sm:$0xf]
      %v4641 = vld [vmem:[#allocation10 + $0xc4] sm:$0xf]
      %v4642 = vld [vmem:[#allocation10 + $0xc8] sm:$0xf]
      %v4643 = vld [vmem:[#allocation10 + $0xcc] sm:$0xf]
      %v4644 = vld [vmem:[#allocation10 + $0xd0] sm:$0xf]
      %v4645 = vld [vmem:[#allocation10 + $0xd4] sm:$0xf]
      %v4646 = vld [vmem:[#allocation10 + $0xd8] sm:$0xf]
      %v4647 = vld [vmem:[#allocation10 + $0xdc] sm:$0xf]
      %v4648 = vld [vmem:[#allocation10 + $0xe0] sm:$0xf]
      %v4649 = vld [vmem:[#allocation10 + $0xe4] sm:$0xf]
      %v4650 = vld [vmem:[#allocation10 + $0xe8] sm:$0xf]
      %v4651 = vld [vmem:[#allocation10 + $0xec] sm:$0xf]
      %v4652 = vld [vmem:[#allocation10 + $0xf0] sm:$0xf]
      %v4653 = vld [vmem:[#allocation10 + $0xf4] sm:$0xf]
      %v4654 = vld [vmem:[#allocation10 + $0xf8] sm:$0xf]
      %v4655 = vld [vmem:[#allocation10 + $0xfc] sm:$0xf]
      %v4656 = vlaneseq
      %v4657 = vshrl.u32 %v4656, 7
      %v4658 = vsub.s32 3, %v4657
      %v4659 = vrot.slane %v690, %v4658
      %v4724 = vunpack.c.l.b16 %v4592
      %v4725 = vunpack.c.l.b16 %v4593
      %v4726 = vunpack.c.l.b16 %v4594
      %v4727 = vunpack.c.l.b16 %v4595
      %v4728 = vunpack.c.l.b16 %v4596
      %v4729 = vunpack.c.l.b16 %v4597
      %v4730 = vunpack.c.l.b16 %v4598
      %v4731 = vunpack.c.l.b16 %v4599
      %v4732 = vunpack.c.l.b16 %v4600
      %v4733 = vunpack.c.l.b16 %v4601
      %v4734 = vunpack.c.l.b16 %v4602
      %v4735 = vunpack.c.l.b16 %v4603
      %v4736 = vunpack.c.l.b16 %v4604
      %v4737 = vunpack.c.l.b16 %v4605
      %v4738 = vunpack.c.l.b16 %v4606
      %v4739 = vunpack.c.l.b16 %v4607
      %v4740 = vunpack.c.l.b16 %v4608
      %v4741 = vunpack.c.l.b16 %v4609
      %v4742 = vunpack.c.l.b16 %v4610
      %v4743 = vunpack.c.l.b16 %v4611
      %v4744 = vunpack.c.l.b16 %v4612
      %v4745 = vunpack.c.l.b16 %v4613
      %v4746 = vunpack.c.l.b16 %v4614
      %v4747 = vunpack.c.l.b16 %v4615
      %v4748 = vunpack.c.l.b16 %v4616
      %v4749 = vunpack.c.l.b16 %v4617
      %v4750 = vunpack.c.l.b16 %v4618
      %v4751 = vunpack.c.l.b16 %v4619
      %v4752 = vunpack.c.l.b16 %v4620
      %v4753 = vunpack.c.l.b16 %v4621
      %v4754 = vunpack.c.l.b16 %v4622
      %v4755 = vunpack.c.l.b16 %v4623
      %v4756 = vunpack.c.l.b16 %v4624
      %v4757 = vunpack.c.l.b16 %v4625
      %v4758 = vunpack.c.l.b16 %v4626
      %v4759 = vunpack.c.l.b16 %v4627
      %v4760 = vunpack.c.l.b16 %v4628
      %v4761 = vunpack.c.l.b16 %v4629
      %v4762 = vunpack.c.l.b16 %v4630
      %v4763 = vunpack.c.l.b16 %v4631
      %v4764 = vunpack.c.l.b16 %v4632
      %v4765 = vunpack.c.l.b16 %v4633
      %v4766 = vunpack.c.l.b16 %v4634
      %v4767 = vunpack.c.l.b16 %v4635
      %v4768 = vunpack.c.l.b16 %v4636
      %v4769 = vunpack.c.l.b16 %v4637
      %v4770 = vunpack.c.l.b16 %v4638
      %v4771 = vunpack.c.l.b16 %v4639
      %v4772 = vunpack.c.l.b16 %v4640
      %v4773 = vunpack.c.l.b16 %v4641
      %v4774 = vunpack.c.l.b16 %v4642
      %v4775 = vunpack.c.l.b16 %v4643
      %v4776 = vunpack.c.l.b16 %v4644
      %v4777 = vunpack.c.l.b16 %v4645
      %v4778 = vunpack.c.l.b16 %v4646
      %v4779 = vunpack.c.l.b16 %v4647
      %v4780 = vunpack.c.l.b16 %v4648
      %v4781 = vunpack.c.l.b16 %v4649
      %v4782 = vunpack.c.l.b16 %v4650
      %v4783 = vunpack.c.l.b16 %v4651
      %v4784 = vunpack.c.l.b16 %v4652
      %v4785 = vunpack.c.l.b16 %v4653
      %v4786 = vunpack.c.l.b16 %v4654
      %v4787 = vunpack.c.l.b16 %v4655
      %v4788 = vpack.c.b16 %v4725, %v4724
      %v4789 = vpack.c.b16 %v4727, %v4726
      %v4790 = vpack.c.b16 %v4729, %v4728
      %v4791 = vpack.c.b16 %v4731, %v4730
      %v4792 = vpack.c.b16 %v4733, %v4732
      %v4793 = vpack.c.b16 %v4735, %v4734
      %v4794 = vpack.c.b16 %v4737, %v4736
      %v4795 = vpack.c.b16 %v4739, %v4738
      %v4796 = vpack.c.b16 %v4741, %v4740
      %v4797 = vpack.c.b16 %v4743, %v4742
      %v4798 = vpack.c.b16 %v4745, %v4744
      %v4799 = vpack.c.b16 %v4747, %v4746
      %v4800 = vpack.c.b16 %v4749, %v4748
      %v4801 = vpack.c.b16 %v4751, %v4750
      %v4802 = vpack.c.b16 %v4753, %v4752
      %v4803 = vpack.c.b16 %v4755, %v4754
      %v4804 = vpack.c.b16 %v4757, %v4756
      %v4805 = vpack.c.b16 %v4759, %v4758
      %v4806 = vpack.c.b16 %v4761, %v4760
      %v4807 = vpack.c.b16 %v4763, %v4762
      %v4808 = vpack.c.b16 %v4765, %v4764
      %v4809 = vpack.c.b16 %v4767, %v4766
      %v4810 = vpack.c.b16 %v4769, %v4768
      %v4811 = vpack.c.b16 %v4771, %v4770
      %v4812 = vpack.c.b16 %v4773, %v4772
      %v4813 = vpack.c.b16 %v4775, %v4774
      %v4814 = vpack.c.b16 %v4777, %v4776
      %v4815 = vpack.c.b16 %v4779, %v4778
      %v4816 = vpack.c.b16 %v4781, %v4780
      %v4817 = vpack.c.b16 %v4783, %v4782
      %v4818 = vpack.c.b16 %v4785, %v4784
      %v4819 = vpack.c.b16 %v4787, %v4786
      %4852 = vmatprep.subr.bf16.mxu0 0
      %4853 = vmatpush1.bf16.msra.mxu0 %v4788
      %4854 = vmatprep.subr.bf16.mxu0 0
      %4855 = vmatpush1.bf16.msra.mxu0 %v4789
      %4856 = vmatprep.subr.bf16.mxu0 0
      %4857 = vmatpush1.bf16.msra.mxu0 %v4790
      %4858 = vmatprep.subr.bf16.mxu0 0
      %4859 = vmatpush1.bf16.msra.mxu0 %v4791
      %4860 = vmatprep.subr.bf16.mxu0 0
      %4861 = vmatpush1.bf16.msra.mxu0 %v4792
      %4862 = vmatprep.subr.bf16.mxu0 0
      %4863 = vmatpush1.bf16.msra.mxu0 %v4793
      %4864 = vmatprep.subr.bf16.mxu0 0
      %4865 = vmatpush1.bf16.msra.mxu0 %v4794
      %4866 = vmatprep.subr.bf16.mxu0 0
      %4867 = vmatpush1.bf16.msra.mxu0 %v4795
      %4868 = vmatprep.subr.bf16.mxu0 0
      %4869 = vmatpush1.bf16.msra.mxu0 %v4796
      %4870 = vmatprep.subr.bf16.mxu0 0
      %4871 = vmatpush1.bf16.msra.mxu0 %v4797
      %4872 = vmatprep.subr.bf16.mxu0 0
      %4873 = vmatpush1.bf16.msra.mxu0 %v4798
      %4874 = vmatprep.subr.bf16.mxu0 0
      %4875 = vmatpush1.bf16.msra.mxu0 %v4799
      %4876 = vmatprep.subr.bf16.mxu0 0
      %4877 = vmatpush1.bf16.msra.mxu0 %v4800
      %4878 = vmatprep.subr.bf16.mxu0 0
      %4879 = vmatpush1.bf16.msra.mxu0 %v4801
      %4880 = vmatprep.subr.bf16.mxu0 0
      %4881 = vmatpush1.bf16.msra.mxu0 %v4802
      %4882 = vmatprep.subr.bf16.mxu0 0
      %4883 = vmatpush1.bf16.msra.mxu0 %v4803
      %4884 = vmatprep.mubr.bf16.mxu0 %v4589
      %4885 = vmatmul.mubr.bf16.gmra.mrb[0].mxu0 %v4588
      %v4886 = vpop.f32.mrb[0].mxu0
      %v4887 = vadd.f32 %v4659, %v4886
      %v4888 = vpop.f32.mrb[0].mxu0
      %v4889 = vpop.f32.mrb[0].mxu0
      %v4890 = vpop.f32.mrb[0].mxu0
      %4891 = vdwg.mxu0
      %4892 = vmatprep.subr.bf16.mxu0 0
      %4893 = vmatpush1.bf16.msra.mxu0 %v4804
      %4894 = vmatprep.subr.bf16.mxu0 0
      %4895 = vmatpush1.bf16.msra.mxu0 %v4805
      %4896 = vmatprep.subr.bf16.mxu0 0
      %4897 = vmatpush1.bf16.msra.mxu0 %v4806
      %4898 = vmatprep.subr.bf16.mxu0 0
      %4899 = vmatpush1.bf16.msra.mxu0 %v4807
      %4900 = vmatprep.subr.bf16.mxu0 0
      %4901 = vmatpush1.bf16.msra.mxu0 %v4808
      %4902 = vmatprep.subr.bf16.mxu0 0
      %4903 = vmatpush1.bf16.msra.mxu0 %v4809
      %4904 = vmatprep.subr.bf16.mxu0 0
      %4905 = vmatpush1.bf16.msra.mxu0 %v4810
      %4906 = vmatprep.subr.bf16.mxu0 0
      %4907 = vmatpush1.bf16.msra.mxu0 %v4811
      %4908 = vmatprep.subr.bf16.mxu0 0
      %4909 = vmatpush1.bf16.msra.mxu0 %v4812
      %4910 = vmatprep.subr.bf16.mxu0 0
      %4911 = vmatpush1.bf16.msra.mxu0 %v4813
      %4912 = vmatprep.subr.bf16.mxu0 0
      %4913 = vmatpush1.bf16.msra.mxu0 %v4814
      %4914 = vmatprep.subr.bf16.mxu0 0
      %4915 = vmatpush1.bf16.msra.mxu0 %v4815
      %4916 = vmatprep.subr.bf16.mxu0 0
      %4917 = vmatpush1.bf16.msra.mxu0 %v4816
      %4918 = vmatprep.subr.bf16.mxu0 0
      %4919 = vmatpush1.bf16.msra.mxu0 %v4817
      %4920 = vmatprep.subr.bf16.mxu0 0
      %4921 = vmatpush1.bf16.msra.mxu0 %v4818
      %4922 = vmatprep.subr.bf16.mxu0 0
      %4923 = vmatpush1.bf16.msra.mxu0 %v4819
      %4924 = vmatprep.mubr.bf16.mxu0 %v4591
      %4925 = vmatmul.mubr.bf16.gmra.mrb[0].mxu0 %v4590
      %v4926 = vpop.f32.mrb[0].mxu0
      %v4927 = vadd.f32 %v4887, %v4926
      %v4928 = vpop.f32.mrb[0].mxu0
      %v4929 = vpop.f32.mrb[0].mxu0
      %v4930 = vpop.f32.mrb[0].mxu0
      %4931 = vdwg.mxu0
      %vm4932 = vcmp.gt.f32.partialorder %v4927, 0.0
      %v4933 = vmul.f32 %v4927, 0.01
      %v4934 = vsel %vm4932, %v4927, %v4933
      %v4935 = vlaneseq
      %v4936 = vshrl.u32 %v4935, 7
      %v4937 = vsub.s32 4, %v4936
      %v4938 = vrot.slane %v690, %v4937
      %v4939 = vmul.f32 %v4934, %v4938
      %4940 = vadd.xlane.f32.xlu0 %v4939
      %v4941 = vpop.xlane.xlu0 %4940
      %v4942 = vlaneseq
      %v4943 = vshrl.u32 %v4942, 7
      %v4944 = vsub.s32 5, %v4943
      %v4945 = vrot.slane %v690, %v4944
      %v4946 = vadd.f32 %v4941, %v4945
      %vm4947 = vcmask 7168
      %4948 = vst.msk [vmem:[%s6] sm:$0xff] %vm4947, %v4946
    $region57: #{tpu_custom_call.1} parent=1 // pred_fallthru
      _
    // Predicated region
    $region58: #{tpu_custom_call.1} parent=1 // pred_check
      _
    $region59: #{tpu_custom_call.1} parent=1 // pred_check_branch
      %4950 = sbr.rel (0) target = $region61
    $region60: #{tpu_custom_call.1} parent=1 // pred_region
      _
    $region61: #{tpu_custom_call.1} parent=1 // pred_fallthru
      _
    // Predicated region
    $region62: #{tpu_custom_call.1} parent=1 // pred_check
      _
    $region63: #{tpu_custom_call.1} parent=1 // pred_check_branch
      %4952 = sbr.rel (0) target = $region65
    $region64: #{tpu_custom_call.1} parent=1 // pred_region
      _
    $region65: #{tpu_custom_call.1} parent=1 // pred_fallthru
      _
    %4953 = vsyncpa [#allocation4], 1
    %4954 = vsyncpa [#allocation6], 1
    %4955 = vsyncpa [#allocation9], 1
    %4956 = vsyncpa [#allocation12], 1

</llo_original>
